<compile_context>
chip_gen: v5e
topology: v5e:2x2
jax: 0.10.0
libtpu: 0.0.40
codegen_flags: <defaults>
</compile_context>

<pallas_src>
import functools
import math

import numpy as np
import jax
import jax.numpy as jnp
from jax import lax
from jax.experimental import pallas as pl
from jax.experimental.pallas import tpu as pltpu

# ----------------------------- config -------------------------------------
IMAGE_SIZE = 32
INPUT_CHANNELS = 3
PATCH_SIZE = 4
BASE_DIM = 32
DIM_MULTS = (1, 2)
DEPTHS = (1, 1)
HEAD_DIM = 16
KERNEL_SIZE = 3
MLP_RATIO = 4
LN_EPS = 1e-5


# --------------------------- in-kernel helpers ------------------------------
def _ln(x, g, b, eps):
    mean = jnp.mean(x, axis=-1, keepdims=True)
    xc = x - mean
    var = jnp.mean(xc * xc, axis=-1, keepdims=True)
    return xc * lax.rsqrt(var + eps) * g + b


def _gelu(x):
    # tanh-approx GELU (EUP-friendly); see TODO above.
    return 0.5 * x * (1.0 + jnp.tanh(0.7978845608028654 * (x + 0.044715 * x * x * x)))


def _bf(x):
    return x.astype(jnp.bfloat16)


# --------------------------- fused Pallas kernels ---------------------------
def _stem_kernel(x_ref, c_ref, pw_ref, pb_ref, ng_ref, nb_ref, cw_ref, cb_ref,
                 o_ref):
    """patch-embed Linear -> LayerNorm -> + cond Linear, one batch element."""
    x = x_ref[0]                                            # (N, Cp) f32
    y = jnp.dot(_bf(x), pw_ref[...],
                preferred_element_type=jnp.float32) + pb_ref[...]
    y = _ln(y, ng_ref[...], nb_ref[...], LN_EPS)
    c = c_ref[0]                                            # (N, Cc) f32
    y = y + jnp.dot(_bf(c), cw_ref[...],
                    preferred_element_type=jnp.float32) + cb_ref[...]
    o_ref[0] = y.astype(o_ref.dtype)


def _block_kernel(*refs, num_heads, head_dim, has_in, has_mask, has_out):
    """One full attention block (optionally prefixed by a downsample Linear and
    suffixed by the logit Linear), one batch element per grid step."""
    it = iter(refs)
    x_ref = next(it)
    if has_in:
        inw_ref, inb_ref = next(it), next(it)
    ln1g_ref, ln1b_ref = next(it), next(it)
    qkvw_ref, qkvb_ref = next(it), next(it)        # (3*nh, D, Dh) bf16 / (3*nh,1,Dh) f32
    projw_ref, projb_ref = next(it), next(it)      # (nh, Dh, D) bf16 / (1, D) f32
    ln2g_ref, ln2b_ref = next(it), next(it)
    fc1w_ref, fc1b_ref = next(it), next(it)
    fc2w_ref, fc2b_ref = next(it), next(it)
    if has_mask:
        mask_ref = next(it)
    if has_out:
        outw_ref, outb_ref = next(it), next(it)
    o_ref = next(it)

    D = num_heads * head_dim
    scale = 1.0 / math.sqrt(head_dim)

    x = x_ref[0].astype(jnp.float32)                        # (N, Din)
    if has_in:
        # Fused DownsampleBlock Linear (space-to-depth done in glue).
        x = jnp.dot(_bf(x), inw_ref[...],
                    preferred_element_type=jnp.float32) + inb_ref[...]
    t = x                                                   # residual stream, f32
    N = t.shape[0]

    # ---- attention half (pre-LN) ----
    h = _ln(t, ln1g_ref[...], ln1b_ref[...], LN_EPS)
    hb = _bf(h)
    o_acc = jnp.zeros((N, D), jnp.float32)
    for hh in range(num_heads):                             # unrolled, nh <= 4
        qh = jnp.dot(hb, qkvw_ref[hh],
                     preferred_element_type=jnp.float32) + qkvb_ref[hh]
        kh = jnp.dot(hb, qkvw_ref[num_heads + hh],
                     preferred_element_type=jnp.float32) + qkvb_ref[num_heads + hh]
        vh = jnp.dot(hb, qkvw_ref[2 * num_heads + hh],
                     preferred_element_type=jnp.float32) + qkvb_ref[2 * num_heads + hh]
        # q @ k^T without materializing a transpose (contract last dims).
        s = lax.dot_general(_bf(qh), _bf(kh), (((1,), (1,)), ((), ())),
                            preferred_element_type=jnp.float32) * scale
        if has_mask:
            s = s + mask_ref[...]
        s = s - jnp.max(s, axis=-1, keepdims=True)
        p = jnp.exp(s)
        p = p * pl.reciprocal(jnp.sum(p, axis=-1, keepdims=True), approx=True)
        oh = jnp.dot(_bf(p), _bf(vh), preferred_element_type=jnp.float32)
        # Head-merge + output projection folded together via per-head weight rows.
        o_acc = o_acc + jnp.dot(_bf(oh), projw_ref[hh],
                                preferred_element_type=jnp.float32)
    t = t + o_acc + projb_ref[...]

    # ---- MLP half (pre-LN) ----
    h2 = _ln(t, ln2g_ref[...], ln2b_ref[...], LN_EPS)
    h2 = jnp.dot(_bf(h2), fc1w_ref[...],
                 preferred_element_type=jnp.float32) + fc1b_ref[...]
    h2 = _gelu(h2)
    h2 = jnp.dot(_bf(h2), fc2w_ref[...],
                 preferred_element_type=jnp.float32) + fc2b_ref[...]
    t = t + h2

    if has_out:
        # Fused logit_proj.
        t = jnp.dot(_bf(t), outw_ref[...],
                    preferred_element_type=jnp.float32) + outb_ref[...]
    o_ref[0] = t.astype(o_ref.dtype)


# --------------------------- pallas_call wrappers ---------------------------
def _bcast_map(ndim):
    return lambda b: (0,) * ndim


_PAR = pltpu.CompilerParams(dimension_semantics=("parallel",))


def fused_stem(x, cond, sp):
    B, N, Cp = x.shape
    Cc = cond.shape[-1]
    D = sp["pw"].shape[1]
    args = [x, cond, sp["pw"], sp["pb"], sp["ng"], sp["nb"], sp["cw"], sp["cb"]]
    in_specs = [pl.BlockSpec((1, N, Cp), lambda b: (b, 0, 0)),
                pl.BlockSpec((1, N, Cc), lambda b: (b, 0, 0))]
    for a in args[2:]:
        in_specs.append(pl.BlockSpec(a.shape, _bcast_map(a.ndim)))
    return pl.pallas_call(
        _stem_kernel,
        out_shape=jax.ShapeDtypeStruct((B, N, D), jnp.float32),
        grid=(B,),
        in_specs=in_specs,
        out_specs=pl.BlockSpec((1, N, D), lambda b: (b, 0, 0)),
        compiler_params=_PAR,
    )(*args)


def fused_block(x, blk, *, num_heads, head_dim, mask=None, in_proj=None,
                out_proj=None):
    B, N, Din = x.shape
    D = num_heads * head_dim
    Dout = out_proj[0].shape[1] if out_proj is not None else D

    args = [x]
    in_specs = [pl.BlockSpec((1, N, Din), lambda b: (b, 0, 0))]

    def add(a):
        args.append(a)
        in_specs.append(pl.BlockSpec(a.shape, _bcast_map(a.ndim)))

    if in_proj is not None:
        add(in_proj[0]); add(in_proj[1])
    for name in ("ln1_g", "ln1_b", "qkv_w", "qkv_b", "proj_w", "proj_b",
                 "ln2_g", "ln2_b", "fc1_w", "fc1_b", "fc2_w", "fc2_b"):
        add(blk[name])
    if mask is not None:
        add(mask)
    if out_proj is not None:
        add(out_proj[0]); add(out_proj[1])

    kernel = functools.partial(_block_kernel, num_heads=num_heads,
                               head_dim=head_dim,
                               has_in=in_proj is not None,
                               has_mask=mask is not None,
                               has_out=out_proj is not None)
    return pl.pallas_call(
        kernel,
        out_shape=jax.ShapeDtypeStruct((B, N, Dout), jnp.float32),
        grid=(B,),
        in_specs=in_specs,
        out_specs=pl.BlockSpec((1, N, Dout), lambda b: (b, 0, 0)),
        compiler_params=_PAR,
    )(*args)


# ------------------------------ JAX glue -----------------------------------
def space_to_depth(x, f):
    B, H, W, C = x.shape
    x = x.reshape(B, H // f, f, W // f, f, C)
    x = jnp.transpose(x, (0, 1, 3, 2, 4, 5))
    return x.reshape(B, H // f, W // f, f * f * C)


def nat_mask(H, W, k):
    """Additive mask: NAT-style clamped k x k window, flattened to (H*W, H*W)."""
    kh, kw = min(k, H), min(k, W)
    si = np.clip(np.arange(H) - kh // 2, 0, H - kh)
    sj = np.clip(np.arange(W) - kw // 2, 0, W - kw)
    allowed = np.zeros((H, W, H, W), dtype=bool)
    for i in range(H):
        for j in range(W):
            allowed[i, j, si[i]:si[i] + kh, sj[j]:sj[j] + kw] = True
    return jnp.asarray(np.where(allowed.reshape(H * W, H * W), 0.0, -1e30),
                       dtype=jnp.float32)


def init_params(key):
    """Raw parameters in PyTorch-like (din, dout) layout."""
    enc_dims = [BASE_DIM * m for m in DIM_MULTS]
    keys = iter(jax.random.split(key, 256))

    def lin(din, dout):
        return {"w": jax.random.normal(next(keys), (din, dout), jnp.float32) * 0.02,
                "b": jnp.zeros((dout,), jnp.float32)}

    def ln(d):
        return {"g": jnp.ones((d,), jnp.float32), "b": jnp.zeros((d,), jnp.float32)}

    params = {
        "patch_embed": lin(INPUT_CHANNELS * PATCH_SIZE * PATCH_SIZE, enc_dims[0]),
        "norm": ln(enc_dims[0]),
        "cond_proj": lin(INPUT_CHANNELS, enc_dims[0]),
        "logit_proj": lin(enc_dims[-1], 1),
        "levels": [],
    }
    for i, dim in enumerate(enc_dims):
        blocks = []
        for _ in range(DEPTHS[i]):
            blocks.append({
                "ln1": ln(dim),
                "qkv": lin(dim, 3 * dim),
                "proj": lin(dim, dim),
                "ln2": ln(dim),
                "fc1": lin(dim, MLP_RATIO * dim),
                "fc2": lin(MLP_RATIO * dim, dim),
            })
        level = {"blocks": blocks}
        if i < len(enc_dims) - 1:
            level["down"] = lin(dim * 4, enc_dims[i + 1])
        params["levels"].append(level)
    return params


def prepare_params(raw):
    """One-time conversion to the fused-kernel layout: bf16 matmul weights,
    (1, D) row biases, per-head-reshaped qkv / proj weights."""
    def wb(w): return w.astype(jnp.bfloat16)
    def row(b): return b.reshape(1, -1).astype(jnp.float32)

    prepared = {
        "stem": {
            "pw": wb(raw["patch_embed"]["w"]), "pb": row(raw["patch_embed"]["b"]),
            "ng": row(raw["norm"]["g"]), "nb": row(raw["norm"]["b"]),
            "cw": wb(raw["cond_proj"]["w"]), "cb": row(raw["cond_proj"]["b"]),
        },
        "logit": {"w": wb(raw["logit_proj"]["w"]), "b": row(raw["logit_proj"]["b"])},
        "levels": [],
    }
    for i, level in enumerate(raw["levels"]):
        D = BASE_DIM * DIM_MULTS[i]
        nh = D // HEAD_DIM
        blocks = []
        for bp in level["blocks"]:
            # qkv columns are ordered (which, head, d): (D, 3D) -> (3*nh, D, Dh)
            qkv_w = bp["qkv"]["w"].reshape(D, 3, nh, HEAD_DIM)
            qkv_w = jnp.transpose(qkv_w, (1, 2, 0, 3)).reshape(3 * nh, D, HEAD_DIM)
            qkv_b = bp["qkv"]["b"].reshape(3 * nh, 1, HEAD_DIM)
            # proj rows are head-concatenated: (D, D) -> (nh, Dh, D)
            proj_w = bp["proj"]["w"].reshape(nh, HEAD_DIM, D)
            blocks.append({
                "ln1_g": row(bp["ln1"]["g"]), "ln1_b": row(bp["ln1"]["b"]),
                "qkv_w": wb(qkv_w), "qkv_b": qkv_b.astype(jnp.float32),
                "proj_w": wb(proj_w), "proj_b": row(bp["proj"]["b"]),
                "ln2_g": row(bp["ln2"]["g"]), "ln2_b": row(bp["ln2"]["b"]),
                "fc1_w": wb(bp["fc1"]["w"]), "fc1_b": row(bp["fc1"]["b"]),
                "fc2_w": wb(bp["fc2"]["w"]), "fc2_b": row(bp["fc2"]["b"]),
            })
        lv = {"blocks": blocks}
        if "down" in level:
            lv["down"] = {"w": wb(level["down"]["w"]), "b": row(level["down"]["b"])}
        prepared["levels"].append(lv)
    return prepared


def hvit_discriminator(params, x, cond):
    B = x.shape[0]
    # NCHW -> NHWC tokens.  These are tiny HBM reshapes done once; all matmul /
    # norm / attention math happens inside the fused Pallas kernels.
    x = jnp.transpose(x, (0, 2, 3, 1))
    x = space_to_depth(x, PATCH_SIZE)                        # (B, 8, 8, 48)
    H, W = x.shape[1], x.shape[2]
    x = x.reshape(B, H * W, -1)
    cond = jnp.transpose(cond, (0, 2, 3, 1)).reshape(B, H * W, -1)

    # Fused stem: patch_embed + norm + cond_proj + add  (1 launch).
    t = fused_stem(x, cond, params["stem"])                  # (B, 64, 32)

    n_levels = len(DIM_MULTS)
    in_proj = None
    for i, level in enumerate(params["levels"]):
        D = BASE_DIM * DIM_MULTS[i]
        nh = D // HEAD_DIM
        is_global = (i == n_levels - 1)
        mask = None if is_global else nat_mask(H, W, KERNEL_SIZE)
        n_blocks = len(level["blocks"])
        for j, blk in enumerate(level["blocks"]):
            out_proj = None
            if is_global and j == n_blocks - 1:
                out_proj = (params["logit"]["w"], params["logit"]["b"])
            t = fused_block(t, blk, num_heads=nh, head_dim=HEAD_DIM, mask=mask,
                            in_proj=in_proj if j == 0 else None,
                            out_proj=out_proj)
        in_proj = None
        if not is_global:
            # Downsample: pixel shuffle in glue; its Linear is fused into the
            # next level's first block as `in_proj`.
            t = t.reshape(B, H, W, D)
            t = space_to_depth(t, 2)
            H, W = H // 2, W // 2
            t = t.reshape(B, H * W, -1)
            in_proj = (level["down"]["w"], level["down"]["b"])

    return t.reshape(B, H, W, 1)


if __name__ == "__main__":
    key = jax.random.PRNGKey(0)
    kx, kc, kp = jax.random.split(key, 3)
    x = jax.random.normal(kx, (2, INPUT_CHANNELS, IMAGE_SIZE, IMAGE_SIZE),
                          jnp.float32)
    patched = IMAGE_SIZE // PATCH_SIZE
    cond = jax.random.normal(kc, (2, INPUT_CHANNELS, patched, patched),
                             jnp.float32)

    params = prepare_params(init_params(kp))
    fwd = jax.jit(hvit_discriminator)
    logits = jax.block_until_ready(fwd(params, x, cond))

    latent = patched // (2 ** (len(DIM_MULTS) - 1))
    assert logits.shape == (2, latent, latent, 1), logits.shape
    assert bool(jnp.all(jnp.isfinite(logits)))
    print("KERNEL_OK")
</pallas_src>

<mosaic_0001>
module attributes {stable_mosaic.version = 11 : i64} {
  func.func @_stem_kernel(%arg0: i32, %arg1: memref<1x64x48xf32, #tpu.memory_space<vmem>>, %arg2: memref<1x64x3xf32, #tpu.memory_space<vmem>>, %arg3: memref<48x32xbf16, #tpu.memory_space<vmem>>, %arg4: memref<1x32xf32, #tpu.memory_space<vmem>>, %arg5: memref<1x32xf32, #tpu.memory_space<vmem>>, %arg6: memref<1x32xf32, #tpu.memory_space<vmem>>, %arg7: memref<3x32xbf16, #tpu.memory_space<vmem>>, %arg8: memref<1x32xf32, #tpu.memory_space<vmem>>, %arg9: memref<1x64x32xf32, #tpu.memory_space<vmem>>) attributes {dimension_semantics = [#tpu.dimension_semantics<parallel>], iteration_bounds = array<i64: 2>, scalar_prefetch = 0 : i64, scratch_operands = 0 : i64, tpu.core_type = #tpu.core_type<tc>, window_params = [{transform_indices = @transform_0, window_bounds = array<i64: 1, 64, 48>}, {transform_indices = @transform_1, window_bounds = array<i64: 1, 64, 3>}, {pipeline_mode = #tpu.pipeline_mode<synchronous>, transform_indices = @transform_2, window_bounds = array<i64: 48, 32>}, {pipeline_mode = #tpu.pipeline_mode<synchronous>, transform_indices = @transform_3, window_bounds = array<i64: 1, 32>}, {pipeline_mode = #tpu.pipeline_mode<synchronous>, transform_indices = @transform_4, window_bounds = array<i64: 1, 32>}, {pipeline_mode = #tpu.pipeline_mode<synchronous>, transform_indices = @transform_5, window_bounds = array<i64: 1, 32>}, {pipeline_mode = #tpu.pipeline_mode<synchronous>, transform_indices = @transform_6, window_bounds = array<i64: 3, 32>}, {pipeline_mode = #tpu.pipeline_mode<synchronous>, transform_indices = @transform_7, window_bounds = array<i64: 1, 32>}, {transform_indices = @transform_8, window_bounds = array<i64: 1, 64, 32>}]} {
    %c0 = arith.constant 0 : index
    %c0_0 = arith.constant 0 : index
    %c0_1 = arith.constant 0 : index
    %0 = vector.load %arg1[%c0, %c0_0, %c0_1] : memref<1x64x48xf32, #tpu.memory_space<vmem>>, vector<1x64x48xf32>
    %1 = vector.shape_cast %0 : vector<1x64x48xf32> to vector<64x48xf32>
    %2 = arith.truncf %1 : vector<64x48xf32> to vector<64x48xbf16>
    %c0_2 = arith.constant 0 : index
    %c0_3 = arith.constant 0 : index
    %3 = vector.load %arg3[%c0_2, %c0_3] : memref<48x32xbf16, #tpu.memory_space<vmem>>, vector<48x32xbf16>
    %cst = arith.constant dense<0.000000e+00> : vector<64x32xf32>
    %4 = tpu.matmul %2, %3, %cst {dimension_numbers = #tpu.dot_dimension_numbers<[1], [0], [0], [1], [0, 0, 1, 1], [], []>} : vector<64x48xbf16>, vector<48x32xbf16>, vector<64x32xf32> -> vector<64x32xf32>
    %c0_4 = arith.constant 0 : index
    %c0_5 = arith.constant 0 : index
    %5 = vector.load %arg4[%c0_4, %c0_5] : memref<1x32xf32, #tpu.memory_space<vmem>>, vector<1x32xf32>
    %6 = vector.broadcast %5 : vector<1x32xf32> to vector<64x32xf32>
    %7 = arith.addf %4, %6 : vector<64x32xf32>
    %c0_6 = arith.constant 0 : index
    %c0_7 = arith.constant 0 : index
    %8 = vector.load %arg5[%c0_6, %c0_7] : memref<1x32xf32, #tpu.memory_space<vmem>>, vector<1x32xf32>
    %c0_8 = arith.constant 0 : index
    %c0_9 = arith.constant 0 : index
    %9 = vector.load %arg6[%c0_8, %c0_9] : memref<1x32xf32, #tpu.memory_space<vmem>>, vector<1x32xf32>
    %cst_10 = arith.constant dense<0.000000e+00> : vector<64xf32>
    %10 = vector.multi_reduction <add>, %7, %cst_10 [1] : vector<64x32xf32> to vector<64xf32>
    %11 = vector.shape_cast %10 : vector<64xf32> to vector<64x1xf32>
    %cst_11 = arith.constant 3.200000e+01 : f32
    %12 = vector.broadcast %cst_11 : f32 to vector<64x1xf32>
    %13 = arith.divf %11, %12 : vector<64x1xf32>
    %14 = vector.broadcast %13 : vector<64x1xf32> to vector<64x32xf32>
    %15 = arith.subf %7, %14 : vector<64x32xf32>
    %16 = arith.mulf %15, %15 : vector<64x32xf32>
    %cst_12 = arith.constant dense<0.000000e+00> : vector<64xf32>
    %17 = vector.multi_reduction <add>, %16, %cst_12 [1] : vector<64x32xf32> to vector<64xf32>
    %18 = vector.shape_cast %17 : vector<64xf32> to vector<64x1xf32>
    %cst_13 = arith.constant 3.200000e+01 : f32
    %19 = vector.broadcast %cst_13 : f32 to vector<64x1xf32>
    %20 = arith.divf %18, %19 : vector<64x1xf32>
    %cst_14 = arith.constant 9.99999974E-6 : f32
    %21 = vector.broadcast %cst_14 : f32 to vector<64x1xf32>
    %22 = arith.addf %20, %21 : vector<64x1xf32>
    %23 = math.rsqrt %22 : vector<64x1xf32>
    %24 = vector.broadcast %23 : vector<64x1xf32> to vector<64x32xf32>
    %25 = arith.mulf %15, %24 : vector<64x32xf32>
    %26 = vector.broadcast %8 : vector<1x32xf32> to vector<64x32xf32>
    %27 = arith.mulf %25, %26 : vector<64x32xf32>
    %28 = vector.broadcast %9 : vector<1x32xf32> to vector<64x32xf32>
    %29 = arith.addf %27, %28 : vector<64x32xf32>
    %c0_15 = arith.constant 0 : index
    %c0_16 = arith.constant 0 : index
    %c0_17 = arith.constant 0 : index
    %30 = vector.load %arg2[%c0_15, %c0_16, %c0_17] : memref<1x64x3xf32, #tpu.memory_space<vmem>>, vector<1x64x3xf32>
    %31 = vector.shape_cast %30 : vector<1x64x3xf32> to vector<64x3xf32>
    %32 = arith.truncf %31 : vector<64x3xf32> to vector<64x3xbf16>
    %c0_18 = arith.constant 0 : index
    %c0_19 = arith.constant 0 : index
    %33 = vector.load %arg7[%c0_18, %c0_19] : memref<3x32xbf16, #tpu.memory_space<vmem>>, vector<3x32xbf16>
    %cst_20 = arith.constant dense<0.000000e+00> : vector<64x32xf32>
    %34 = tpu.matmul %32, %33, %cst_20 {dimension_numbers = #tpu.dot_dimension_numbers<[1], [0], [0], [1], [0, 0, 1, 1], [], []>} : vector<64x3xbf16>, vector<3x32xbf16>, vector<64x32xf32> -> vector<64x32xf32>
    %35 = arith.addf %29, %34 : vector<64x32xf32>
    %c0_21 = arith.constant 0 : index
    %c0_22 = arith.constant 0 : index
    %36 = vector.load %arg8[%c0_21, %c0_22] : memref<1x32xf32, #tpu.memory_space<vmem>>, vector<1x32xf32>
    %37 = vector.broadcast %36 : vector<1x32xf32> to vector<64x32xf32>
    %38 = arith.addf %35, %37 : vector<64x32xf32>
    %c0_23 = arith.constant 0 : index
    %c0_24 = arith.constant 0 : index
    %c0_25 = arith.constant 0 : index
    %39 = vector.load %arg9[%c0_23, %c0_24, %c0_25] : memref<1x64x32xf32, #tpu.memory_space<vmem>>, vector<1x64x32xf32>
    %40 = vector.shape_cast %39 : vector<1x64x32xf32> to vector<64x32xf32>
    %41 = vector.shape_cast %38 : vector<64x32xf32> to vector<1x64x32xf32>
    tpu.vector_store %arg9[%c0_23, %c0_24, %c0_25], %41 {strides = array<i32>} : memref<1x64x32xf32, #tpu.memory_space<vmem>>, vector<1x64x32xf32>,
    return
  }
  func.func @transform_0(%arg0: i32) -> (i32, i32, i32) {
    %c0_i32 = arith.constant 0 : i32
    %c0_i32_0 = arith.constant 0 : i32
    %c0_i32_1 = arith.constant 0 : i32
    return %arg0, %c0_i32, %c0_i32_0 : i32, i32, i32
  }
  func.func @transform_1(%arg0: i32) -> (i32, i32, i32) {
    %c0_i32 = arith.constant 0 : i32
    %c0_i32_0 = arith.constant 0 : i32
    %c0_i32_1 = arith.constant 0 : i32
    return %arg0, %c0_i32, %c0_i32_0 : i32, i32, i32
  }
  func.func @transform_2(%arg0: i32) -> (i32, i32) {
    %c0_i32 = arith.constant 0 : i32
    %c0_i32_0 = arith.constant 0 : i32
    %c0_i32_1 = arith.constant 0 : i32
    return %c0_i32, %c0_i32_0 : i32, i32
  }
  func.func @transform_3(%arg0: i32) -> (i32, i32) {
    %c0_i32 = arith.constant 0 : i32
    %c0_i32_0 = arith.constant 0 : i32
    %c0_i32_1 = arith.constant 0 : i32
    return %c0_i32, %c0_i32_0 : i32, i32
  }
  func.func @transform_4(%arg0: i32) -> (i32, i32) {
    %c0_i32 = arith.constant 0 : i32
    %c0_i32_0 = arith.constant 0 : i32
    %c0_i32_1 = arith.constant 0 : i32
    return %c0_i32, %c0_i32_0 : i32, i32
  }
  func.func @transform_5(%arg0: i32) -> (i32, i32) {
    %c0_i32 = arith.constant 0 : i32
    %c0_i32_0 = arith.constant 0 : i32
    %c0_i32_1 = arith.constant 0 : i32
    return %c0_i32, %c0_i32_0 : i32, i32
  }
  func.func @transform_6(%arg0: i32) -> (i32, i32) {
    %c0_i32 = arith.constant 0 : i32
    %c0_i32_0 = arith.constant 0 : i32
    %c0_i32_1 = arith.constant 0 : i32
    return %c0_i32, %c0_i32_0 : i32, i32
  }
  func.func @transform_7(%arg0: i32) -> (i32, i32) {
    %c0_i32 = arith.constant 0 : i32
    %c0_i32_0 = arith.constant 0 : i32
    %c0_i32_1 = arith.constant 0 : i32
    return %c0_i32, %c0_i32_0 : i32, i32
  }
  func.func @transform_8(%arg0: i32) -> (i32, i32, i32) {
    %c0_i32 = arith.constant 0 : i32
    %c0_i32_0 = arith.constant 0 : i32
    %c0_i32_1 = arith.constant 0 : i32
    return %arg0, %c0_i32, %c0_i32_0 : i32, i32, i32
  }
}

module attributes {stable_mosaic.version = 11 : i64} {
  func.func @_block_kernel(%arg0: i32, %arg1: memref<1x64x32xf32, #tpu.memory_space<vmem>>, %arg2: memref<1x32xf32, #tpu.memory_space<vmem>>, %arg3: memref<1x32xf32, #tpu.memory_space<vmem>>, %arg4: memref<6x32x16xbf16, #tpu.memory_space<vmem>>, %arg5: memref<6x1x16xf32, #tpu.memory_space<vmem>>, %arg6: memref<2x16x32xbf16, #tpu.memory_space<vmem>>, %arg7: memref<1x32xf32, #tpu.memory_space<vmem>>, %arg8: memref<1x32xf32, #tpu.memory_space<vmem>>, %arg9: memref<1x32xf32, #tpu.memory_space<vmem>>, %arg10: memref<32x128xbf16, #tpu.memory_space<vmem>>, %arg11: memref<1x128xf32, #tpu.memory_space<vmem>>, %arg12: memref<128x32xbf16, #tpu.memory_space<vmem>>, %arg13: memref<1x32xf32, #tpu.memory_space<vmem>>, %arg14: memref<64x64xf32, #tpu.memory_space<vmem>>, %arg15: memref<1x64x32xf32, #tpu.memory_space<vmem>>) attributes {dimension_semantics = [#tpu.dimension_semantics<parallel>], iteration_bounds = array<i64: 2>, scalar_prefetch = 0 : i64, scratch_operands = 0 : i64, tpu.core_type = #tpu.core_type<tc>, window_params = [{transform_indices = @transform_0, window_bounds = array<i64: 1, 64, 32>}, {pipeline_mode = #tpu.pipeline_mode<synchronous>, transform_indices = @transform_1, window_bounds = array<i64: 1, 32>}, {pipeline_mode = #tpu.pipeline_mode<synchronous>, transform_indices = @transform_2, window_bounds = array<i64: 1, 32>}, {pipeline_mode = #tpu.pipeline_mode<synchronous>, transform_indices = @transform_3, window_bounds = array<i64: 6, 32, 16>}, {pipeline_mode = #tpu.pipeline_mode<synchronous>, transform_indices = @transform_4, window_bounds = array<i64: 6, 1, 16>}, {pipeline_mode = #tpu.pipeline_mode<synchronous>, transform_indices = @transform_5, window_bounds = array<i64: 2, 16, 32>}, {pipeline_mode = #tpu.pipeline_mode<synchronous>, transform_indices = @transform_6, window_bounds = array<i64: 1, 32>}, {pipeline_mode = #tpu.pipeline_mode<synchronous>, transform_indices = @transform_7, window_bounds = array<i64: 1, 32>}, {pipeline_mode = #tpu.pipeline_mode<synchronous>, transform_indices = @transform_8, window_bounds = array<i64: 1, 32>}, {pipeline_mode = #tpu.pipeline_mode<synchronous>, transform_indices = @transform_9, window_bounds = array<i64: 32, 128>}, {pipeline_mode = #tpu.pipeline_mode<synchronous>, transform_indices = @transform_10, window_bounds = array<i64: 1, 128>}, {pipeline_mode = #tpu.pipeline_mode<synchronous>, transform_indices = @transform_11, window_bounds = array<i64: 128, 32>}, {pipeline_mode = #tpu.pipeline_mode<synchronous>, transform_indices = @transform_12, window_bounds = array<i64: 1, 32>}, {pipeline_mode = #tpu.pipeline_mode<synchronous>, transform_indices = @transform_13, window_bounds = array<i64: 64, 64>}, {transform_indices = @transform_14, window_bounds = array<i64: 1, 64, 32>}]} {
    %c0 = arith.constant 0 : index
    %c0_0 = arith.constant 0 : index
    %c0_1 = arith.constant 0 : index
    %0 = vector.load %arg1[%c0, %c0_0, %c0_1] : memref<1x64x32xf32, #tpu.memory_space<vmem>>, vector<1x64x32xf32>
    %1 = vector.shape_cast %0 : vector<1x64x32xf32> to vector<64x32xf32>
    %c0_2 = arith.constant 0 : index
    %c0_3 = arith.constant 0 : index
    %2 = vector.load %arg2[%c0_2, %c0_3] : memref<1x32xf32, #tpu.memory_space<vmem>>, vector<1x32xf32>
    %c0_4 = arith.constant 0 : index
    %c0_5 = arith.constant 0 : index
    %3 = vector.load %arg3[%c0_4, %c0_5] : memref<1x32xf32, #tpu.memory_space<vmem>>, vector<1x32xf32>
    %cst = arith.constant dense<0.000000e+00> : vector<64xf32>
    %4 = vector.multi_reduction <add>, %1, %cst [1] : vector<64x32xf32> to vector<64xf32>
    %5 = vector.shape_cast %4 : vector<64xf32> to vector<64x1xf32>
    %cst_6 = arith.constant 3.200000e+01 : f32
    %6 = vector.broadcast %cst_6 : f32 to vector<64x1xf32>
    %7 = arith.divf %5, %6 : vector<64x1xf32>
    %8 = vector.broadcast %7 : vector<64x1xf32> to vector<64x32xf32>
    %9 = arith.subf %1, %8 : vector<64x32xf32>
    %10 = arith.mulf %9, %9 : vector<64x32xf32>
    %cst_7 = arith.constant dense<0.000000e+00> : vector<64xf32>
    %11 = vector.multi_reduction <add>, %10, %cst_7 [1] : vector<64x32xf32> to vector<64xf32>
    %12 = vector.shape_cast %11 : vector<64xf32> to vector<64x1xf32>
    %cst_8 = arith.constant 3.200000e+01 : f32
    %13 = vector.broadcast %cst_8 : f32 to vector<64x1xf32>
    %14 = arith.divf %12, %13 : vector<64x1xf32>
    %cst_9 = arith.constant 9.99999974E-6 : f32
    %15 = vector.broadcast %cst_9 : f32 to vector<64x1xf32>
    %16 = arith.addf %14, %15 : vector<64x1xf32>
    %17 = math.rsqrt %16 : vector<64x1xf32>
    %18 = vector.broadcast %17 : vector<64x1xf32> to vector<64x32xf32>
    %19 = arith.mulf %9, %18 : vector<64x32xf32>
    %20 = vector.broadcast %2 : vector<1x32xf32> to vector<64x32xf32>
    %21 = arith.mulf %19, %20 : vector<64x32xf32>
    %22 = vector.broadcast %3 : vector<1x32xf32> to vector<64x32xf32>
    %23 = arith.addf %21, %22 : vector<64x32xf32>
    %24 = arith.truncf %23 : vector<64x32xf32> to vector<64x32xbf16>
    %cst_10 = arith.constant 0.000000e+00 : f32
    %25 = vector.broadcast %cst_10 : f32 to vector<64x32xf32>
    %c0_11 = arith.constant 0 : index
    %c0_12 = arith.constant 0 : index
    %c0_13 = arith.constant 0 : index
    %26 = vector.load %arg4[%c0_11, %c0_12, %c0_13] : memref<6x32x16xbf16, #tpu.memory_space<vmem>>, vector<1x32x16xbf16>
    %27 = vector.shape_cast %26 : vector<1x32x16xbf16> to vector<32x16xbf16>
    %cst_14 = arith.constant dense<0.000000e+00> : vector<64x16xf32>
    %28 = tpu.matmul %24, %27, %cst_14 {dimension_numbers = #tpu.dot_dimension_numbers<[1], [0], [0], [1], [0, 0, 1, 1], [], []>} : vector<64x32xbf16>, vector<32x16xbf16>, vector<64x16xf32> -> vector<64x16xf32>
    %c0_15 = arith.constant 0 : index
    %c0_16 = arith.constant 0 : index
    %c0_17 = arith.constant 0 : index
    %29 = vector.load %arg5[%c0_15, %c0_16, %c0_17] : memref<6x1x16xf32, #tpu.memory_space<vmem>>, vector<1x1x16xf32>
    %30 = vector.shape_cast %29 : vector<1x1x16xf32> to vector<1x16xf32>
    %31 = vector.broadcast %30 : vector<1x16xf32> to vector<64x16xf32>
    %32 = arith.addf %28, %31 : vector<64x16xf32>
    %c2 = arith.constant 2 : index
    %c0_18 = arith.constant 0 : index
    %c0_19 = arith.constant 0 : index
    %33 = vector.load %arg4[%c2, %c0_18, %c0_19] : memref<6x32x16xbf16, #tpu.memory_space<vmem>>, vector<1x32x16xbf16>
    %34 = vector.shape_cast %33 : vector<1x32x16xbf16> to vector<32x16xbf16>
    %cst_20 = arith.constant dense<0.000000e+00> : vector<64x16xf32>
    %35 = tpu.matmul %24, %34, %cst_20 {dimension_numbers = #tpu.dot_dimension_numbers<[1], [0], [0], [1], [0, 0, 1, 1], [], []>} : vector<64x32xbf16>, vector<32x16xbf16>, vector<64x16xf32> -> vector<64x16xf32>
    %c2_21 = arith.constant 2 : index
    %c0_22 = arith.constant 0 : index
    %c0_23 = arith.constant 0 : index
    %36 = vector.load %arg5[%c2_21, %c0_22, %c0_23] : memref<6x1x16xf32, #tpu.memory_space<vmem>>, vector<1x1x16xf32>
    %37 = vector.shape_cast %36 : vector<1x1x16xf32> to vector<1x16xf32>
    %38 = vector.broadcast %37 : vector<1x16xf32> to vector<64x16xf32>
    %39 = arith.addf %35, %38 : vector<64x16xf32>
    %c4 = arith.constant 4 : index
    %c0_24 = arith.constant 0 : index
    %c0_25 = arith.constant 0 : index
    %40 = vector.load %arg4[%c4, %c0_24, %c0_25] : memref<6x32x16xbf16, #tpu.memory_space<vmem>>, vector<1x32x16xbf16>
    %41 = vector.shape_cast %40 : vector<1x32x16xbf16> to vector<32x16xbf16>
    %cst_26 = arith.constant dense<0.000000e+00> : vector<64x16xf32>
    %42 = tpu.matmul %24, %41, %cst_26 {dimension_numbers = #tpu.dot_dimension_numbers<[1], [0], [0], [1], [0, 0, 1, 1], [], []>} : vector<64x32xbf16>, vector<32x16xbf16>, vector<64x16xf32> -> vector<64x16xf32>
    %c4_27 = arith.constant 4 : index
    %c0_28 = arith.constant 0 : index
    %c0_29 = arith.constant 0 : index
    %43 = vector.load %arg5[%c4_27, %c0_28, %c0_29] : memref<6x1x16xf32, #tpu.memory_space<vmem>>, vector<1x1x16xf32>
    %44 = vector.shape_cast %43 : vector<1x1x16xf32> to vector<1x16xf32>
    %45 = vector.broadcast %44 : vector<1x16xf32> to vector<64x16xf32>
    %46 = arith.addf %42, %45 : vector<64x16xf32>
    %47 = arith.truncf %32 : vector<64x16xf32> to vector<64x16xbf16>
    %48 = arith.truncf %39 : vector<64x16xf32> to vector<64x16xbf16>
    %cst_30 = arith.constant dense<0.000000e+00> : vector<64x64xf32>
    %49 = tpu.matmul %47, %48, %cst_30 {dimension_numbers = #tpu.dot_dimension_numbers<[1], [1], [0], [0], [0, 0, 1, 0], [], []>} : vector<64x16xbf16>, vector<64x16xbf16>, vector<64x64xf32> -> vector<64x64xf32>
    %cst_31 = arith.constant 2.500000e-01 : f32
    %50 = vector.broadcast %cst_31 : f32 to vector<64x64xf32>
    %51 = arith.mulf %49, %50 : vector<64x64xf32>
    %c0_32 = arith.constant 0 : index
    %c0_33 = arith.constant 0 : index
    %52 = vector.load %arg14[%c0_32, %c0_33] : memref<64x64xf32, #tpu.memory_space<vmem>>, vector<64x64xf32>
    %53 = arith.addf %51, %52 : vector<64x64xf32>
    %cst_34 = arith.constant dense<0xFF800000> : vector<64xf32>
    %54 = vector.multi_reduction <maximumf>, %53, %cst_34 [1] : vector<64x64xf32> to vector<64xf32>
    %55 = vector.shape_cast %54 : vector<64xf32> to vector<64x1xf32>
    %56 = vector.broadcast %55 : vector<64x1xf32> to vector<64x64xf32>
    %57 = arith.subf %53, %56 : vector<64x64xf32>
    %58 = math.exp %57 : vector<64x64xf32>
    %cst_35 = arith.constant dense<0.000000e+00> : vector<64xf32>
    %59 = vector.multi_reduction <add>, %58, %cst_35 [1] : vector<64x64xf32> to vector<64xf32>
    %60 = vector.shape_cast %59 : vector<64xf32> to vector<64x1xf32>
    %61 = tpu.reciprocal %60 {approx = true} : vector<64x1xf32> -> vector<64x1xf32>
    %62 = vector.broadcast %61 : vector<64x1xf32> to vector<64x64xf32>
    %63 = arith.mulf %58, %62 : vector<64x64xf32>
    %64 = arith.truncf %63 : vector<64x64xf32> to vector<64x64xbf16>
    %65 = arith.truncf %46 : vector<64x16xf32> to vector<64x16xbf16>
    %cst_36 = arith.constant dense<0.000000e+00> : vector<64x16xf32>
    %66 = tpu.matmul %64, %65, %cst_36 {dimension_numbers = #tpu.dot_dimension_numbers<[1], [0], [0], [1], [0, 0, 1, 1], [], []>} : vector<64x64xbf16>, vector<64x16xbf16>, vector<64x16xf32> -> vector<64x16xf32>
    %67 = arith.truncf %66 : vector<64x16xf32> to vector<64x16xbf16>
    %c0_37 = arith.constant 0 : index
    %c0_38 = arith.constant 0 : index
    %c0_39 = arith.constant 0 : index
    %68 = vector.load %arg6[%c0_37, %c0_38, %c0_39] : memref<2x16x32xbf16, #tpu.memory_space<vmem>>, vector<1x16x32xbf16>
    %69 = vector.shape_cast %68 : vector<1x16x32xbf16> to vector<16x32xbf16>
    %cst_40 = arith.constant dense<0.000000e+00> : vector<64x32xf32>
    %70 = tpu.matmul %67, %69, %cst_40 {dimension_numbers = #tpu.dot_dimension_numbers<[1], [0], [0], [1], [0, 0, 1, 1], [], []>} : vector<64x16xbf16>, vector<16x32xbf16>, vector<64x32xf32> -> vector<64x32xf32>
    %71 = arith.addf %25, %70 : vector<64x32xf32>
    %c1 = arith.constant 1 : index
    %c0_41 = arith.constant 0 : index
    %c0_42 = arith.constant 0 : index
    %72 = vector.load %arg4[%c1, %c0_41, %c0_42] : memref<6x32x16xbf16, #tpu.memory_space<vmem>>, vector<1x32x16xbf16>
    %73 = vector.shape_cast %72 : vector<1x32x16xbf16> to vector<32x16xbf16>
    %cst_43 = arith.constant dense<0.000000e+00> : vector<64x16xf32>
    %74 = tpu.matmul %24, %73, %cst_43 {dimension_numbers = #tpu.dot_dimension_numbers<[1], [0], [0], [1], [0, 0, 1, 1], [], []>} : vector<64x32xbf16>, vector<32x16xbf16>, vector<64x16xf32> -> vector<64x16xf32>
    %c1_44 = arith.constant 1 : index
    %c0_45 = arith.constant 0 : index
    %c0_46 = arith.constant 0 : index
    %75 = vector.load %arg5[%c1_44, %c0_45, %c0_46] : memref<6x1x16xf32, #tpu.memory_space<vmem>>, vector<1x1x16xf32>
    %76 = vector.shape_cast %75 : vector<1x1x16xf32> to vector<1x16xf32>
    %77 = vector.broadcast %76 : vector<1x16xf32> to vector<64x16xf32>
    %78 = arith.addf %74, %77 : vector<64x16xf32>
    %c3 = arith.constant 3 : index
    %c0_47 = arith.constant 0 : index
    %c0_48 = arith.constant 0 : index
    %79 = vector.load %arg4[%c3, %c0_47, %c0_48] : memref<6x32x16xbf16, #tpu.memory_space<vmem>>, vector<1x32x16xbf16>
    %80 = vector.shape_cast %79 : vector<1x32x16xbf16> to vector<32x16xbf16>
    %cst_49 = arith.constant dense<0.000000e+00> : vector<64x16xf32>
    %81 = tpu.matmul %24, %80, %cst_49 {dimension_numbers = #tpu.dot_dimension_numbers<[1], [0], [0], [1], [0, 0, 1, 1], [], []>} : vector<64x32xbf16>, vector<32x16xbf16>, vector<64x16xf32> -> vector<64x16xf32>
    %c3_50 = arith.constant 3 : index
    %c0_51 = arith.constant 0 : index
    %c0_52 = arith.constant 0 : index
    %82 = vector.load %arg5[%c3_50, %c0_51, %c0_52] : memref<6x1x16xf32, #tpu.memory_space<vmem>>, vector<1x1x16xf32>
    %83 = vector.shape_cast %82 : vector<1x1x16xf32> to vector<1x16xf32>
    %84 = vector.broadcast %83 : vector<1x16xf32> to vector<64x16xf32>
    %85 = arith.addf %81, %84 : vector<64x16xf32>
    %c5 = arith.constant 5 : index
    %c0_53 = arith.constant 0 : index
    %c0_54 = arith.constant 0 : index
    %86 = vector.load %arg4[%c5, %c0_53, %c0_54] : memref<6x32x16xbf16, #tpu.memory_space<vmem>>, vector<1x32x16xbf16>
    %87 = vector.shape_cast %86 : vector<1x32x16xbf16> to vector<32x16xbf16>
    %cst_55 = arith.constant dense<0.000000e+00> : vector<64x16xf32>
    %88 = tpu.matmul %24, %87, %cst_55 {dimension_numbers = #tpu.dot_dimension_numbers<[1], [0], [0], [1], [0, 0, 1, 1], [], []>} : vector<64x32xbf16>, vector<32x16xbf16>, vector<64x16xf32> -> vector<64x16xf32>
    %c5_56 = arith.constant 5 : index
    %c0_57 = arith.constant 0 : index
    %c0_58 = arith.constant 0 : index
    %89 = vector.load %arg5[%c5_56, %c0_57, %c0_58] : memref<6x1x16xf32, #tpu.memory_space<vmem>>, vector<1x1x16xf32>
    %90 = vector.shape_cast %89 : vector<1x1x16xf32> to vector<1x16xf32>
    %91 = vector.broadcast %90 : vector<1x16xf32> to vector<64x16xf32>
    %92 = arith.addf %88, %91 : vector<64x16xf32>
    %93 = arith.truncf %78 : vector<64x16xf32> to vector<64x16xbf16>
    %94 = arith.truncf %85 : vector<64x16xf32> to vector<64x16xbf16>
    %cst_59 = arith.constant dense<0.000000e+00> : vector<64x64xf32>
    %95 = tpu.matmul %93, %94, %cst_59 {dimension_numbers = #tpu.dot_dimension_numbers<[1], [1], [0], [0], [0, 0, 1, 0], [], []>} : vector<64x16xbf16>, vector<64x16xbf16>, vector<64x64xf32> -> vector<64x64xf32>
    %cst_60 = arith.constant 2.500000e-01 : f32
    %96 = vector.broadcast %cst_60 : f32 to vector<64x64xf32>
    %97 = arith.mulf %95, %96 : vector<64x64xf32>
    %c0_61 = arith.constant 0 : index
    %c0_62 = arith.constant 0 : index
    %98 = vector.load %arg14[%c0_61, %c0_62] : memref<64x64xf32, #tpu.memory_space<vmem>>, vector<64x64xf32>
    %99 = arith.addf %97, %98 : vector<64x64xf32>
    %cst_63 = arith.constant dense<0xFF800000> : vector<64xf32>
    %100 = vector.multi_reduction <maximumf>, %99, %cst_63 [1] : vector<64x64xf32> to vector<64xf32>
    %101 = vector.shape_cast %100 : vector<64xf32> to vector<64x1xf32>
    %102 = vector.broadcast %101 : vector<64x1xf32> to vector<64x64xf32>
    %103 = arith.subf %99, %102 : vector<64x64xf32>
    %104 = math.exp %103 : vector<64x64xf32>
    %cst_64 = arith.constant dense<0.000000e+00> : vector<64xf32>
    %105 = vector.multi_reduction <add>, %104, %cst_64 [1] : vector<64x64xf32> to vector<64xf32>
    %106 = vector.shape_cast %105 : vector<64xf32> to vector<64x1xf32>
    %107 = tpu.reciprocal %106 {approx = true} : vector<64x1xf32> -> vector<64x1xf32>
    %108 = vector.broadcast %107 : vector<64x1xf32> to vector<64x64xf32>
    %109 = arith.mulf %104, %108 : vector<64x64xf32>
    %110 = arith.truncf %109 : vector<64x64xf32> to vector<64x64xbf16>
    %111 = arith.truncf %92 : vector<64x16xf32> to vector<64x16xbf16>
    %cst_65 = arith.constant dense<0.000000e+00> : vector<64x16xf32>
    %112 = tpu.matmul %110, %111, %cst_65 {dimension_numbers = #tpu.dot_dimension_numbers<[1], [0], [0], [1], [0, 0, 1, 1], [], []>} : vector<64x64xbf16>, vector<64x16xbf16>, vector<64x16xf32> -> vector<64x16xf32>
    %113 = arith.truncf %112 : vector<64x16xf32> to vector<64x16xbf16>
    %c1_66 = arith.constant 1 : index
    %c0_67 = arith.constant 0 : index
    %c0_68 = arith.constant 0 : index
    %114 = vector.load %arg6[%c1_66, %c0_67, %c0_68] : memref<2x16x32xbf16, #tpu.memory_space<vmem>>, vector<1x16x32xbf16>
    %115 = vector.shape_cast %114 : vector<1x16x32xbf16> to vector<16x32xbf16>
    %cst_69 = arith.constant dense<0.000000e+00> : vector<64x32xf32>
    %116 = tpu.matmul %113, %115, %cst_69 {dimension_numbers = #tpu.dot_dimension_numbers<[1], [0], [0], [1], [0, 0, 1, 1], [], []>} : vector<64x16xbf16>, vector<16x32xbf16>, vector<64x32xf32> -> vector<64x32xf32>
    %117 = arith.addf %71, %116 : vector<64x32xf32>
    %118 = arith.addf %1, %117 : vector<64x32xf32>
    %c0_70 = arith.constant 0 : index
    %c0_71 = arith.constant 0 : index
    %119 = vector.load %arg7[%c0_70, %c0_71] : memref<1x32xf32, #tpu.memory_space<vmem>>, vector<1x32xf32>
    %120 = vector.broadcast %119 : vector<1x32xf32> to vector<64x32xf32>
    %121 = arith.addf %118, %120 : vector<64x32xf32>
    %c0_72 = arith.constant 0 : index
    %c0_73 = arith.constant 0 : index
    %122 = vector.load %arg8[%c0_72, %c0_73] : memref<1x32xf32, #tpu.memory_space<vmem>>, vector<1x32xf32>
    %c0_74 = arith.constant 0 : index
    %c0_75 = arith.constant 0 : index
    %123 = vector.load %arg9[%c0_74, %c0_75] : memref<1x32xf32, #tpu.memory_space<vmem>>, vector<1x32xf32>
    %cst_76 = arith.constant dense<0.000000e+00> : vector<64xf32>
    %124 = vector.multi_reduction <add>, %121, %cst_76 [1] : vector<64x32xf32> to vector<64xf32>
    %125 = vector.shape_cast %124 : vector<64xf32> to vector<64x1xf32>
    %cst_77 = arith.constant 3.200000e+01 : f32
    %126 = vector.broadcast %cst_77 : f32 to vector<64x1xf32>
    %127 = arith.divf %125, %126 : vector<64x1xf32>
    %128 = vector.broadcast %127 : vector<64x1xf32> to vector<64x32xf32>
    %129 = arith.subf %121, %128 : vector<64x32xf32>
    %130 = arith.mulf %129, %129 : vector<64x32xf32>
    %cst_78 = arith.constant dense<0.000000e+00> : vector<64xf32>
    %131 = vector.multi_reduction <add>, %130, %cst_78 [1] : vector<64x32xf32> to vector<64xf32>
    %132 = vector.shape_cast %131 : vector<64xf32> to vector<64x1xf32>
    %cst_79 = arith.constant 3.200000e+01 : f32
    %133 = vector.broadcast %cst_79 : f32 to vector<64x1xf32>
    %134 = arith.divf %132, %133 : vector<64x1xf32>
    %cst_80 = arith.constant 9.99999974E-6 : f32
    %135 = vector.broadcast %cst_80 : f32 to vector<64x1xf32>
    %136 = arith.addf %134, %135 : vector<64x1xf32>
    %137 = math.rsqrt %136 : vector<64x1xf32>
    %138 = vector.broadcast %137 : vector<64x1xf32> to vector<64x32xf32>
    %139 = arith.mulf %129, %138 : vector<64x32xf32>
    %140 = vector.broadcast %122 : vector<1x32xf32> to vector<64x32xf32>
    %141 = arith.mulf %139, %140 : vector<64x32xf32>
    %142 = vector.broadcast %123 : vector<1x32xf32> to vector<64x32xf32>
    %143 = arith.addf %141, %142 : vector<64x32xf32>
    %144 = arith.truncf %143 : vector<64x32xf32> to vector<64x32xbf16>
    %c0_81 = arith.constant 0 : index
    %c0_82 = arith.constant 0 : index
    %145 = vector.load %arg10[%c0_81, %c0_82] : memref<32x128xbf16, #tpu.memory_space<vmem>>, vector<32x128xbf16>
    %cst_83 = arith.constant dense<0.000000e+00> : vector<64x128xf32>
    %146 = tpu.matmul %144, %145, %cst_83 {dimension_numbers = #tpu.dot_dimension_numbers<[1], [0], [0], [1], [0, 0, 1, 1], [], []>} : vector<64x32xbf16>, vector<32x128xbf16>, vector<64x128xf32> -> vector<64x128xf32>
    %c0_84 = arith.constant 0 : index
    %c0_85 = arith.constant 0 : index
    %147 = vector.load %arg11[%c0_84, %c0_85] : memref<1x128xf32, #tpu.memory_space<vmem>>, vector<1x128xf32>
    %148 = vector.broadcast %147 : vector<1x128xf32> to vector<64x128xf32>
    %149 = arith.addf %146, %148 : vector<64x128xf32>
    %cst_86 = arith.constant 5.000000e-01 : f32
    %150 = vector.broadcast %cst_86 : f32 to vector<64x128xf32>
    %151 = arith.mulf %150, %149 : vector<64x128xf32>
    %cst_87 = arith.constant 4.471500e-02 : f32
    %152 = vector.broadcast %cst_87 : f32 to vector<64x128xf32>
    %153 = arith.mulf %152, %149 : vector<64x128xf32>
    %154 = arith.mulf %153, %149 : vector<64x128xf32>
    %155 = arith.mulf %154, %149 : vector<64x128xf32>
    %156 = arith.addf %149, %155 : vector<64x128xf32>
    %cst_88 = arith.constant 0.797884583 : f32
    %157 = vector.broadcast %cst_88 : f32 to vector<64x128xf32>
    %158 = arith.mulf %157, %156 : vector<64x128xf32>
    %159 = math.tanh %158 : vector<64x128xf32>
    %cst_89 = arith.constant 1.000000e+00 : f32
    %160 = vector.broadcast %cst_89 : f32 to vector<64x128xf32>
    %161 = arith.addf %160, %159 : vector<64x128xf32>
    %162 = arith.mulf %151, %161 : vector<64x128xf32>
    %163 = arith.truncf %162 : vector<64x128xf32> to vector<64x128xbf16>
    %c0_90 = arith.constant 0 : index
    %c0_91 = arith.constant 0 : index
    %164 = vector.load %arg12[%c0_90, %c0_91] : memref<128x32xbf16, #tpu.memory_space<vmem>>, vector<128x32xbf16>
    %cst_92 = arith.constant dense<0.000000e+00> : vector<64x32xf32>
    %165 = tpu.matmul %163, %164, %cst_92 {dimension_numbers = #tpu.dot_dimension_numbers<[1], [0], [0], [1], [0, 0, 1, 1], [], []>} : vector<64x128xbf16>, vector<128x32xbf16>, vector<64x32xf32> -> vector<64x32xf32>
    %c0_93 = arith.constant 0 : index
    %c0_94 = arith.constant 0 : index
    %166 = vector.load %arg13[%c0_93, %c0_94] : memref<1x32xf32, #tpu.memory_space<vmem>>, vector<1x32xf32>
    %167 = vector.broadcast %166 : vector<1x32xf32> to vector<64x32xf32>
    %168 = arith.addf %165, %167 : vector<64x32xf32>
    %169 = arith.addf %121, %168 : vector<64x32xf32>
    %c0_95 = arith.constant 0 : index
    %c0_96 = arith.constant 0 : index
    %c0_97 = arith.constant 0 : index
    %170 = vector.load %arg15[%c0_95, %c0_96, %c0_97] : memref<1x64x32xf32, #tpu.memory_space<vmem>>, vector<1x64x32xf32>
    %171 = vector.shape_cast %170 : vector<1x64x32xf32> to vector<64x32xf32>
    %172 = vector.shape_cast %169 : vector<64x32xf32> to vector<1x64x32xf32>
    tpu.vector_store %arg15[%c0_95, %c0_96, %c0_97], %172 {strides = array<i32>} : memref<1x64x32xf32, #tpu.memory_space<vmem>>, vector<1x64x32xf32>,
    return
  }
  func.func @transform_0(%arg0: i32) -> (i32, i32, i32) {
    %c0_i32 = arith.constant 0 : i32
    %c0_i32_0 = arith.constant 0 : i32
    %c0_i32_1 = arith.constant 0 : i32
    return %arg0, %c0_i32, %c0_i32_0 : i32, i32, i32
  }
  func.func @transform_1(%arg0: i32) -> (i32, i32) {
    %c0_i32 = arith.constant 0 : i32
    %c0_i32_0 = arith.constant 0 : i32
    %c0_i32_1 = arith.constant 0 : i32
    return %c0_i32, %c0_i32_0 : i32, i32
  }
  func.func @transform_2(%arg0: i32) -> (i32, i32) {
    %c0_i32 = arith.constant 0 : i32
    %c0_i32_0 = arith.constant 0 : i32
    %c0_i32_1 = arith.constant 0 : i32
    return %c0_i32, %c0_i32_0 : i32, i32
  }
  func.func @transform_3(%arg0: i32) -> (i32, i32, i32) {
    %c0_i32 = arith.constant 0 : i32
    %c0_i32_0 = arith.constant 0 : i32
    %c0_i32_1 = arith.constant 0 : i32
    %c0_i32_2 = arith.constant 0 : i32
    return %c0_i32, %c0_i32_0, %c0_i32_1 : i32, i32, i32
  }
  func.func @transform_4(%arg0: i32) -> (i32, i32, i32) {
    %c0_i32 = arith.constant 0 : i32
    %c0_i32_0 = arith.constant 0 : i32
    %c0_i32_1 = arith.constant 0 : i32
    %c0_i32_2 = arith.constant 0 : i32
    return %c0_i32, %c0_i32_0, %c0_i32_1 : i32, i32, i32
  }
  func.func @transform_5(%arg0: i32) -> (i32, i32, i32) {
    %c0_i32 = arith.constant 0 : i32
    %c0_i32_0 = arith.constant 0 : i32
    %c0_i32_1 = arith.constant 0 : i32
    %c0_i32_2 = arith.constant 0 : i32
    return %c0_i32, %c0_i32_0, %c0_i32_1 : i32, i32, i32
  }
  func.func @transform_6(%arg0: i32) -> (i32, i32) {
    %c0_i32 = arith.constant 0 : i32
    %c0_i32_0 = arith.constant 0 : i32
    %c0_i32_1 = arith.constant 0 : i32
    return %c0_i32, %c0_i32_0 : i32, i32
  }
  func.func @transform_7(%arg0: i32) -> (i32, i32) {
    %c0_i32 = arith.constant 0 : i32
    %c0_i32_0 = arith.constant 0 : i32
    %c0_i32_1 = arith.constant 0 : i32
    return %c0_i32, %c0_i32_0 : i32, i32
  }
  func.func @transform_8(%arg0: i32) -> (i32, i32) {
    %c0_i32 = arith.constant 0 : i32
    %c0_i32_0 = arith.constant 0 : i32
    %c0_i32_1 = arith.constant 0 : i32
    return %c0_i32, %c0_i32_0 : i32, i32
  }
  func.func @transform_9(%arg0: i32) -> (i32, i32) {
    %c0_i32 = arith.constant 0 : i32
    %c0_i32_0 = arith.constant 0 : i32
    %c0_i32_1 = arith.constant 0 : i32
    return %c0_i32, %c0_i32_0 : i32, i32
  }
  func.func @transform_10(%arg0: i32) -> (i32, i32) {
    %c0_i32 = arith.constant 0 : i32
    %c0_i32_0 = arith.constant 0 : i32
    %c0_i32_1 = arith.constant 0 : i32
    return %c0_i32, %c0_i32_0 : i32, i32
  }
  func.func @transform_11(%arg0: i32) -> (i32, i32) {
    %c0_i32 = arith.constant 0 : i32
    %c0_i32_0 = arith.constant 0 : i32
    %c0_i32_1 = arith.constant 0 : i32
    return %c0_i32, %c0_i32_0 : i32, i32
  }
  func.func @transform_12(%arg0: i32) -> (i32, i32) {
    %c0_i32 = arith.constant 0 : i32
    %c0_i32_0 = arith.constant 0 : i32
    %c0_i32_1 = arith.constant 0 : i32
    return %c0_i32, %c0_i32_0 : i32, i32
  }
  func.func @transform_13(%arg0: i32) -> (i32, i32) {
    %c0_i32 = arith.constant 0 : i32
    %c0_i32_0 = arith.constant 0 : i32
    %c0_i32_1 = arith.constant 0 : i32
    return %c0_i32, %c0_i32_0 : i32, i32
  }
  func.func @transform_14(%arg0: i32) -> (i32, i32, i32) {
    %c0_i32 = arith.constant 0 : i32
    %c0_i32_0 = arith.constant 0 : i32
    %c0_i32_1 = arith.constant 0 : i32
    return %arg0, %c0_i32, %c0_i32_0 : i32, i32, i32
  }
}

module attributes {stable_mosaic.version = 11 : i64} {
  func.func @_block_kernel(%arg0: i32, %arg1: memref<1x16x128xf32, #tpu.memory_space<vmem>>, %arg2: memref<128x64xbf16, #tpu.memory_space<vmem>>, %arg3: memref<1x64xf32, #tpu.memory_space<vmem>>, %arg4: memref<1x64xf32, #tpu.memory_space<vmem>>, %arg5: memref<1x64xf32, #tpu.memory_space<vmem>>, %arg6: memref<12x64x16xbf16, #tpu.memory_space<vmem>>, %arg7: memref<12x1x16xf32, #tpu.memory_space<vmem>>, %arg8: memref<4x16x64xbf16, #tpu.memory_space<vmem>>, %arg9: memref<1x64xf32, #tpu.memory_space<vmem>>, %arg10: memref<1x64xf32, #tpu.memory_space<vmem>>, %arg11: memref<1x64xf32, #tpu.memory_space<vmem>>, %arg12: memref<64x256xbf16, #tpu.memory_space<vmem>>, %arg13: memref<1x256xf32, #tpu.memory_space<vmem>>, %arg14: memref<256x64xbf16, #tpu.memory_space<vmem>>, %arg15: memref<1x64xf32, #tpu.memory_space<vmem>>, %arg16: memref<64x1xbf16, #tpu.memory_space<vmem>>, %arg17: memref<1x1xf32, #tpu.memory_space<vmem>>, %arg18: memref<1x16x1xf32, #tpu.memory_space<vmem>>) attributes {dimension_semantics = [#tpu.dimension_semantics<parallel>], iteration_bounds = array<i64: 2>, scalar_prefetch = 0 : i64, scratch_operands = 0 : i64, tpu.core_type = #tpu.core_type<tc>, window_params = [{transform_indices = @transform_0, window_bounds = array<i64: 1, 16, 128>}, {pipeline_mode = #tpu.pipeline_mode<synchronous>, transform_indices = @transform_1, window_bounds = array<i64: 128, 64>}, {pipeline_mode = #tpu.pipeline_mode<synchronous>, transform_indices = @transform_2, window_bounds = array<i64: 1, 64>}, {pipeline_mode = #tpu.pipeline_mode<synchronous>, transform_indices = @transform_3, window_bounds = array<i64: 1, 64>}, {pipeline_mode = #tpu.pipeline_mode<synchronous>, transform_indices = @transform_4, window_bounds = array<i64: 1, 64>}, {pipeline_mode = #tpu.pipeline_mode<synchronous>, transform_indices = @transform_5, window_bounds = array<i64: 12, 64, 16>}, {pipeline_mode = #tpu.pipeline_mode<synchronous>, transform_indices = @transform_6, window_bounds = array<i64: 12, 1, 16>}, {pipeline_mode = #tpu.pipeline_mode<synchronous>, transform_indices = @transform_7, window_bounds = array<i64: 4, 16, 64>}, {pipeline_mode = #tpu.pipeline_mode<synchronous>, transform_indices = @transform_8, window_bounds = array<i64: 1, 64>}, {pipeline_mode = #tpu.pipeline_mode<synchronous>, transform_indices = @transform_9, window_bounds = array<i64: 1, 64>}, {pipeline_mode = #tpu.pipeline_mode<synchronous>, transform_indices = @transform_10, window_bounds = array<i64: 1, 64>}, {pipeline_mode = #tpu.pipeline_mode<synchronous>, transform_indices = @transform_11, window_bounds = array<i64: 64, 256>}, {pipeline_mode = #tpu.pipeline_mode<synchronous>, transform_indices = @transform_12, window_bounds = array<i64: 1, 256>}, {pipeline_mode = #tpu.pipeline_mode<synchronous>, transform_indices = @transform_13, window_bounds = array<i64: 256, 64>}, {pipeline_mode = #tpu.pipeline_mode<synchronous>, transform_indices = @transform_14, window_bounds = array<i64: 1, 64>}, {pipeline_mode = #tpu.pipeline_mode<synchronous>, transform_indices = @transform_15, window_bounds = array<i64: 64, 1>}, {pipeline_mode = #tpu.pipeline_mode<synchronous>, transform_indices = @transform_16, window_bounds = array<i64: 1, 1>}, {transform_indices = @transform_17, window_bounds = array<i64: 1, 16, 1>}]} {
    %c0 = arith.constant 0 : index
    %c0_0 = arith.constant 0 : index
    %c0_1 = arith.constant 0 : index
    %0 = vector.load %arg1[%c0, %c0_0, %c0_1] : memref<1x16x128xf32, #tpu.memory_space<vmem>>, vector<1x16x128xf32>
    %1 = vector.shape_cast %0 : vector<1x16x128xf32> to vector<16x128xf32>
    %2 = arith.truncf %1 : vector<16x128xf32> to vector<16x128xbf16>
    %c0_2 = arith.constant 0 : index
    %c0_3 = arith.constant 0 : index
    %3 = vector.load %arg2[%c0_2, %c0_3] : memref<128x64xbf16, #tpu.memory_space<vmem>>, vector<128x64xbf16>
    %cst = arith.constant dense<0.000000e+00> : vector<16x64xf32>
    %4 = tpu.matmul %2, %3, %cst {dimension_numbers = #tpu.dot_dimension_numbers<[1], [0], [0], [1], [0, 0, 1, 1], [], []>} : vector<16x128xbf16>, vector<128x64xbf16>, vector<16x64xf32> -> vector<16x64xf32>
    %c0_4 = arith.constant 0 : index
    %c0_5 = arith.constant 0 : index
    %5 = vector.load %arg3[%c0_4, %c0_5] : memref<1x64xf32, #tpu.memory_space<vmem>>, vector<1x64xf32>
    %6 = vector.broadcast %5 : vector<1x64xf32> to vector<16x64xf32>
    %7 = arith.addf %4, %6 : vector<16x64xf32>
    %c0_6 = arith.constant 0 : index
    %c0_7 = arith.constant 0 : index
    %8 = vector.load %arg4[%c0_6, %c0_7] : memref<1x64xf32, #tpu.memory_space<vmem>>, vector<1x64xf32>
    %c0_8 = arith.constant 0 : index
    %c0_9 = arith.constant 0 : index
    %9 = vector.load %arg5[%c0_8, %c0_9] : memref<1x64xf32, #tpu.memory_space<vmem>>, vector<1x64xf32>
    %cst_10 = arith.constant dense<0.000000e+00> : vector<16xf32>
    %10 = vector.multi_reduction <add>, %7, %cst_10 [1] : vector<16x64xf32> to vector<16xf32>
    %11 = vector.shape_cast %10 : vector<16xf32> to vector<16x1xf32>
    %cst_11 = arith.constant 6.400000e+01 : f32
    %12 = vector.broadcast %cst_11 : f32 to vector<16x1xf32>
    %13 = arith.divf %11, %12 : vector<16x1xf32>
    %14 = vector.broadcast %13 : vector<16x1xf32> to vector<16x64xf32>
    %15 = arith.subf %7, %14 : vector<16x64xf32>
    %16 = arith.mulf %15, %15 : vector<16x64xf32>
    %cst_12 = arith.constant dense<0.000000e+00> : vector<16xf32>
    %17 = vector.multi_reduction <add>, %16, %cst_12 [1] : vector<16x64xf32> to vector<16xf32>
    %18 = vector.shape_cast %17 : vector<16xf32> to vector<16x1xf32>
    %cst_13 = arith.constant 6.400000e+01 : f32
    %19 = vector.broadcast %cst_13 : f32 to vector<16x1xf32>
    %20 = arith.divf %18, %19 : vector<16x1xf32>
    %cst_14 = arith.constant 9.99999974E-6 : f32
    %21 = vector.broadcast %cst_14 : f32 to vector<16x1xf32>
    %22 = arith.addf %20, %21 : vector<16x1xf32>
    %23 = math.rsqrt %22 : vector<16x1xf32>
    %24 = vector.broadcast %23 : vector<16x1xf32> to vector<16x64xf32>
    %25 = arith.mulf %15, %24 : vector<16x64xf32>
    %26 = vector.broadcast %8 : vector<1x64xf32> to vector<16x64xf32>
    %27 = arith.mulf %25, %26 : vector<16x64xf32>
    %28 = vector.broadcast %9 : vector<1x64xf32> to vector<16x64xf32>
    %29 = arith.addf %27, %28 : vector<16x64xf32>
    %30 = arith.truncf %29 : vector<16x64xf32> to vector<16x64xbf16>
    %cst_15 = arith.constant 0.000000e+00 : f32
    %31 = vector.broadcast %cst_15 : f32 to vector<16x64xf32>
    %c0_16 = arith.constant 0 : index
    %c0_17 = arith.constant 0 : index
    %c0_18 = arith.constant 0 : index
    %32 = vector.load %arg6[%c0_16, %c0_17, %c0_18] : memref<12x64x16xbf16, #tpu.memory_space<vmem>>, vector<1x64x16xbf16>
    %33 = vector.shape_cast %32 : vector<1x64x16xbf16> to vector<64x16xbf16>
    %cst_19 = arith.constant dense<0.000000e+00> : vector<16x16xf32>
    %34 = tpu.matmul %30, %33, %cst_19 {dimension_numbers = #tpu.dot_dimension_numbers<[1], [0], [0], [1], [0, 0, 1, 1], [], []>} : vector<16x64xbf16>, vector<64x16xbf16>, vector<16x16xf32> -> vector<16x16xf32>
    %c0_20 = arith.constant 0 : index
    %c0_21 = arith.constant 0 : index
    %c0_22 = arith.constant 0 : index
    %35 = vector.load %arg7[%c0_20, %c0_21, %c0_22] : memref<12x1x16xf32, #tpu.memory_space<vmem>>, vector<1x1x16xf32>
    %36 = vector.shape_cast %35 : vector<1x1x16xf32> to vector<1x16xf32>
    %37 = vector.broadcast %36 : vector<1x16xf32> to vector<16x16xf32>
    %38 = arith.addf %34, %37 : vector<16x16xf32>
    %c4 = arith.constant 4 : index
    %c0_23 = arith.constant 0 : index
    %c0_24 = arith.constant 0 : index
    %39 = vector.load %arg6[%c4, %c0_23, %c0_24] : memref<12x64x16xbf16, #tpu.memory_space<vmem>>, vector<1x64x16xbf16>
    %40 = vector.shape_cast %39 : vector<1x64x16xbf16> to vector<64x16xbf16>
    %cst_25 = arith.constant dense<0.000000e+00> : vector<16x16xf32>
    %41 = tpu.matmul %30, %40, %cst_25 {dimension_numbers = #tpu.dot_dimension_numbers<[1], [0], [0], [1], [0, 0, 1, 1], [], []>} : vector<16x64xbf16>, vector<64x16xbf16>, vector<16x16xf32> -> vector<16x16xf32>
    %c4_26 = arith.constant 4 : index
    %c0_27 = arith.constant 0 : index
    %c0_28 = arith.constant 0 : index
    %42 = vector.load %arg7[%c4_26, %c0_27, %c0_28] : memref<12x1x16xf32, #tpu.memory_space<vmem>>, vector<1x1x16xf32>
    %43 = vector.shape_cast %42 : vector<1x1x16xf32> to vector<1x16xf32>
    %44 = vector.broadcast %43 : vector<1x16xf32> to vector<16x16xf32>
    %45 = arith.addf %41, %44 : vector<16x16xf32>
    %c8 = arith.constant 8 : index
    %c0_29 = arith.constant 0 : index
    %c0_30 = arith.constant 0 : index
    %46 = vector.load %arg6[%c8, %c0_29, %c0_30] : memref<12x64x16xbf16, #tpu.memory_space<vmem>>, vector<1x64x16xbf16>
    %47 = vector.shape_cast %46 : vector<1x64x16xbf16> to vector<64x16xbf16>
    %cst_31 = arith.constant dense<0.000000e+00> : vector<16x16xf32>
    %48 = tpu.matmul %30, %47, %cst_31 {dimension_numbers = #tpu.dot_dimension_numbers<[1], [0], [0], [1], [0, 0, 1, 1], [], []>} : vector<16x64xbf16>, vector<64x16xbf16>, vector<16x16xf32> -> vector<16x16xf32>
    %c8_32 = arith.constant 8 : index
    %c0_33 = arith.constant 0 : index
    %c0_34 = arith.constant 0 : index
    %49 = vector.load %arg7[%c8_32, %c0_33, %c0_34] : memref<12x1x16xf32, #tpu.memory_space<vmem>>, vector<1x1x16xf32>
    %50 = vector.shape_cast %49 : vector<1x1x16xf32> to vector<1x16xf32>
    %51 = vector.broadcast %50 : vector<1x16xf32> to vector<16x16xf32>
    %52 = arith.addf %48, %51 : vector<16x16xf32>
    %53 = arith.truncf %38 : vector<16x16xf32> to vector<16x16xbf16>
    %54 = arith.truncf %45 : vector<16x16xf32> to vector<16x16xbf16>
    %cst_35 = arith.constant dense<0.000000e+00> : vector<16x16xf32>
    %55 = tpu.matmul %53, %54, %cst_35 {dimension_numbers = #tpu.dot_dimension_numbers<[1], [1], [0], [0], [0, 0, 1, 0], [], []>} : vector<16x16xbf16>, vector<16x16xbf16>, vector<16x16xf32> -> vector<16x16xf32>
    %cst_36 = arith.constant 2.500000e-01 : f32
    %56 = vector.broadcast %cst_36 : f32 to vector<16x16xf32>
    %57 = arith.mulf %55, %56 : vector<16x16xf32>
    %cst_37 = arith.constant dense<0xFF800000> : vector<16xf32>
    %58 = vector.multi_reduction <maximumf>, %57, %cst_37 [1] : vector<16x16xf32> to vector<16xf32>
    %59 = vector.shape_cast %58 : vector<16xf32> to vector<16x1xf32>
    %60 = vector.broadcast %59 : vector<16x1xf32> to vector<16x16xf32>
    %61 = arith.subf %57, %60 : vector<16x16xf32>
    %62 = math.exp %61 : vector<16x16xf32>
    %cst_38 = arith.constant dense<0.000000e+00> : vector<16xf32>
    %63 = vector.multi_reduction <add>, %62, %cst_38 [1] : vector<16x16xf32> to vector<16xf32>
    %64 = vector.shape_cast %63 : vector<16xf32> to vector<16x1xf32>
    %65 = tpu.reciprocal %64 {approx = true} : vector<16x1xf32> -> vector<16x1xf32>
    %66 = vector.broadcast %65 : vector<16x1xf32> to vector<16x16xf32>
    %67 = arith.mulf %62, %66 : vector<16x16xf32>
    %68 = arith.truncf %67 : vector<16x16xf32> to vector<16x16xbf16>
    %69 = arith.truncf %52 : vector<16x16xf32> to vector<16x16xbf16>
    %cst_39 = arith.constant dense<0.000000e+00> : vector<16x16xf32>
    %70 = tpu.matmul %68, %69, %cst_39 {dimension_numbers = #tpu.dot_dimension_numbers<[1], [0], [0], [1], [0, 0, 1, 1], [], []>} : vector<16x16xbf16>, vector<16x16xbf16>, vector<16x16xf32> -> vector<16x16xf32>
    %71 = arith.truncf %70 : vector<16x16xf32> to vector<16x16xbf16>
    %c0_40 = arith.constant 0 : index
    %c0_41 = arith.constant 0 : index
    %c0_42 = arith.constant 0 : index
    %72 = vector.load %arg8[%c0_40, %c0_41, %c0_42] : memref<4x16x64xbf16, #tpu.memory_space<vmem>>, vector<1x16x64xbf16>
    %73 = vector.shape_cast %72 : vector<1x16x64xbf16> to vector<16x64xbf16>
    %cst_43 = arith.constant dense<0.000000e+00> : vector<16x64xf32>
    %74 = tpu.matmul %71, %73, %cst_43 {dimension_numbers = #tpu.dot_dimension_numbers<[1], [0], [0], [1], [0, 0, 1, 1], [], []>} : vector<16x16xbf16>, vector<16x64xbf16>, vector<16x64xf32> -> vector<16x64xf32>
    %75 = arith.addf %31, %74 : vector<16x64xf32>
    %c1 = arith.constant 1 : index
    %c0_44 = arith.constant 0 : index
    %c0_45 = arith.constant 0 : index
    %76 = vector.load %arg6[%c1, %c0_44, %c0_45] : memref<12x64x16xbf16, #tpu.memory_space<vmem>>, vector<1x64x16xbf16>
    %77 = vector.shape_cast %76 : vector<1x64x16xbf16> to vector<64x16xbf16>
    %cst_46 = arith.constant dense<0.000000e+00> : vector<16x16xf32>
    %78 = tpu.matmul %30, %77, %cst_46 {dimension_numbers = #tpu.dot_dimension_numbers<[1], [0], [0], [1], [0, 0, 1, 1], [], []>} : vector<16x64xbf16>, vector<64x16xbf16>, vector<16x16xf32> -> vector<16x16xf32>
    %c1_47 = arith.constant 1 : index
    %c0_48 = arith.constant 0 : index
    %c0_49 = arith.constant 0 : index
    %79 = vector.load %arg7[%c1_47, %c0_48, %c0_49] : memref<12x1x16xf32, #tpu.memory_space<vmem>>, vector<1x1x16xf32>
    %80 = vector.shape_cast %79 : vector<1x1x16xf32> to vector<1x16xf32>
    %81 = vector.broadcast %80 : vector<1x16xf32> to vector<16x16xf32>
    %82 = arith.addf %78, %81 : vector<16x16xf32>
    %c5 = arith.constant 5 : index
    %c0_50 = arith.constant 0 : index
    %c0_51 = arith.constant 0 : index
    %83 = vector.load %arg6[%c5, %c0_50, %c0_51] : memref<12x64x16xbf16, #tpu.memory_space<vmem>>, vector<1x64x16xbf16>
    %84 = vector.shape_cast %83 : vector<1x64x16xbf16> to vector<64x16xbf16>
    %cst_52 = arith.constant dense<0.000000e+00> : vector<16x16xf32>
    %85 = tpu.matmul %30, %84, %cst_52 {dimension_numbers = #tpu.dot_dimension_numbers<[1], [0], [0], [1], [0, 0, 1, 1], [], []>} : vector<16x64xbf16>, vector<64x16xbf16>, vector<16x16xf32> -> vector<16x16xf32>
    %c5_53 = arith.constant 5 : index
    %c0_54 = arith.constant 0 : index
    %c0_55 = arith.constant 0 : index
    %86 = vector.load %arg7[%c5_53, %c0_54, %c0_55] : memref<12x1x16xf32, #tpu.memory_space<vmem>>, vector<1x1x16xf32>
    %87 = vector.shape_cast %86 : vector<1x1x16xf32> to vector<1x16xf32>
    %88 = vector.broadcast %87 : vector<1x16xf32> to vector<16x16xf32>
    %89 = arith.addf %85, %88 : vector<16x16xf32>
    %c9 = arith.constant 9 : index
    %c0_56 = arith.constant 0 : index
    %c0_57 = arith.constant 0 : index
    %90 = vector.load %arg6[%c9, %c0_56, %c0_57] : memref<12x64x16xbf16, #tpu.memory_space<vmem>>, vector<1x64x16xbf16>
    %91 = vector.shape_cast %90 : vector<1x64x16xbf16> to vector<64x16xbf16>
    %cst_58 = arith.constant dense<0.000000e+00> : vector<16x16xf32>
    %92 = tpu.matmul %30, %91, %cst_58 {dimension_numbers = #tpu.dot_dimension_numbers<[1], [0], [0], [1], [0, 0, 1, 1], [], []>} : vector<16x64xbf16>, vector<64x16xbf16>, vector<16x16xf32> -> vector<16x16xf32>
    %c9_59 = arith.constant 9 : index
    %c0_60 = arith.constant 0 : index
    %c0_61 = arith.constant 0 : index
    %93 = vector.load %arg7[%c9_59, %c0_60, %c0_61] : memref<12x1x16xf32, #tpu.memory_space<vmem>>, vector<1x1x16xf32>
    %94 = vector.shape_cast %93 : vector<1x1x16xf32> to vector<1x16xf32>
    %95 = vector.broadcast %94 : vector<1x16xf32> to vector<16x16xf32>
    %96 = arith.addf %92, %95 : vector<16x16xf32>
    %97 = arith.truncf %82 : vector<16x16xf32> to vector<16x16xbf16>
    %98 = arith.truncf %89 : vector<16x16xf32> to vector<16x16xbf16>
    %cst_62 = arith.constant dense<0.000000e+00> : vector<16x16xf32>
    %99 = tpu.matmul %97, %98, %cst_62 {dimension_numbers = #tpu.dot_dimension_numbers<[1], [1], [0], [0], [0, 0, 1, 0], [], []>} : vector<16x16xbf16>, vector<16x16xbf16>, vector<16x16xf32> -> vector<16x16xf32>
    %cst_63 = arith.constant 2.500000e-01 : f32
    %100 = vector.broadcast %cst_63 : f32 to vector<16x16xf32>
    %101 = arith.mulf %99, %100 : vector<16x16xf32>
    %cst_64 = arith.constant dense<0xFF800000> : vector<16xf32>
    %102 = vector.multi_reduction <maximumf>, %101, %cst_64 [1] : vector<16x16xf32> to vector<16xf32>
    %103 = vector.shape_cast %102 : vector<16xf32> to vector<16x1xf32>
    %104 = vector.broadcast %103 : vector<16x1xf32> to vector<16x16xf32>
    %105 = arith.subf %101, %104 : vector<16x16xf32>
    %106 = math.exp %105 : vector<16x16xf32>
    %cst_65 = arith.constant dense<0.000000e+00> : vector<16xf32>
    %107 = vector.multi_reduction <add>, %106, %cst_65 [1] : vector<16x16xf32> to vector<16xf32>
    %108 = vector.shape_cast %107 : vector<16xf32> to vector<16x1xf32>
    %109 = tpu.reciprocal %108 {approx = true} : vector<16x1xf32> -> vector<16x1xf32>
    %110 = vector.broadcast %109 : vector<16x1xf32> to vector<16x16xf32>
    %111 = arith.mulf %106, %110 : vector<16x16xf32>
    %112 = arith.truncf %111 : vector<16x16xf32> to vector<16x16xbf16>
    %113 = arith.truncf %96 : vector<16x16xf32> to vector<16x16xbf16>
    %cst_66 = arith.constant dense<0.000000e+00> : vector<16x16xf32>
    %114 = tpu.matmul %112, %113, %cst_66 {dimension_numbers = #tpu.dot_dimension_numbers<[1], [0], [0], [1], [0, 0, 1, 1], [], []>} : vector<16x16xbf16>, vector<16x16xbf16>, vector<16x16xf32> -> vector<16x16xf32>
    %115 = arith.truncf %114 : vector<16x16xf32> to vector<16x16xbf16>
    %c1_67 = arith.constant 1 : index
    %c0_68 = arith.constant 0 : index
    %c0_69 = arith.constant 0 : index
    %116 = vector.load %arg8[%c1_67, %c0_68, %c0_69] : memref<4x16x64xbf16, #tpu.memory_space<vmem>>, vector<1x16x64xbf16>
    %117 = vector.shape_cast %116 : vector<1x16x64xbf16> to vector<16x64xbf16>
    %cst_70 = arith.constant dense<0.000000e+00> : vector<16x64xf32>
    %118 = tpu.matmul %115, %117, %cst_70 {dimension_numbers = #tpu.dot_dimension_numbers<[1], [0], [0], [1], [0, 0, 1, 1], [], []>} : vector<16x16xbf16>, vector<16x64xbf16>, vector<16x64xf32> -> vector<16x64xf32>
    %119 = arith.addf %75, %118 : vector<16x64xf32>
    %c2 = arith.constant 2 : index
    %c0_71 = arith.constant 0 : index
    %c0_72 = arith.constant 0 : index
    %120 = vector.load %arg6[%c2, %c0_71, %c0_72] : memref<12x64x16xbf16, #tpu.memory_space<vmem>>, vector<1x64x16xbf16>
    %121 = vector.shape_cast %120 : vector<1x64x16xbf16> to vector<64x16xbf16>
    %cst_73 = arith.constant dense<0.000000e+00> : vector<16x16xf32>
    %122 = tpu.matmul %30, %121, %cst_73 {dimension_numbers = #tpu.dot_dimension_numbers<[1], [0], [0], [1], [0, 0, 1, 1], [], []>} : vector<16x64xbf16>, vector<64x16xbf16>, vector<16x16xf32> -> vector<16x16xf32>
    %c2_74 = arith.constant 2 : index
    %c0_75 = arith.constant 0 : index
    %c0_76 = arith.constant 0 : index
    %123 = vector.load %arg7[%c2_74, %c0_75, %c0_76] : memref<12x1x16xf32, #tpu.memory_space<vmem>>, vector<1x1x16xf32>
    %124 = vector.shape_cast %123 : vector<1x1x16xf32> to vector<1x16xf32>
    %125 = vector.broadcast %124 : vector<1x16xf32> to vector<16x16xf32>
    %126 = arith.addf %122, %125 : vector<16x16xf32>
    %c6 = arith.constant 6 : index
    %c0_77 = arith.constant 0 : index
    %c0_78 = arith.constant 0 : index
    %127 = vector.load %arg6[%c6, %c0_77, %c0_78] : memref<12x64x16xbf16, #tpu.memory_space<vmem>>, vector<1x64x16xbf16>
    %128 = vector.shape_cast %127 : vector<1x64x16xbf16> to vector<64x16xbf16>
    %cst_79 = arith.constant dense<0.000000e+00> : vector<16x16xf32>
    %129 = tpu.matmul %30, %128, %cst_79 {dimension_numbers = #tpu.dot_dimension_numbers<[1], [0], [0], [1], [0, 0, 1, 1], [], []>} : vector<16x64xbf16>, vector<64x16xbf16>, vector<16x16xf32> -> vector<16x16xf32>
    %c6_80 = arith.constant 6 : index
    %c0_81 = arith.constant 0 : index
    %c0_82 = arith.constant 0 : index
    %130 = vector.load %arg7[%c6_80, %c0_81, %c0_82] : memref<12x1x16xf32, #tpu.memory_space<vmem>>, vector<1x1x16xf32>
    %131 = vector.shape_cast %130 : vector<1x1x16xf32> to vector<1x16xf32>
    %132 = vector.broadcast %131 : vector<1x16xf32> to vector<16x16xf32>
    %133 = arith.addf %129, %132 : vector<16x16xf32>
    %c10 = arith.constant 10 : index
    %c0_83 = arith.constant 0 : index
    %c0_84 = arith.constant 0 : index
    %134 = vector.load %arg6[%c10, %c0_83, %c0_84] : memref<12x64x16xbf16, #tpu.memory_space<vmem>>, vector<1x64x16xbf16>
    %135 = vector.shape_cast %134 : vector<1x64x16xbf16> to vector<64x16xbf16>
    %cst_85 = arith.constant dense<0.000000e+00> : vector<16x16xf32>
    %136 = tpu.matmul %30, %135, %cst_85 {dimension_numbers = #tpu.dot_dimension_numbers<[1], [0], [0], [1], [0, 0, 1, 1], [], []>} : vector<16x64xbf16>, vector<64x16xbf16>, vector<16x16xf32> -> vector<16x16xf32>
    %c10_86 = arith.constant 10 : index
    %c0_87 = arith.constant 0 : index
    %c0_88 = arith.constant 0 : index
    %137 = vector.load %arg7[%c10_86, %c0_87, %c0_88] : memref<12x1x16xf32, #tpu.memory_space<vmem>>, vector<1x1x16xf32>
    %138 = vector.shape_cast %137 : vector<1x1x16xf32> to vector<1x16xf32>
    %139 = vector.broadcast %138 : vector<1x16xf32> to vector<16x16xf32>
    %140 = arith.addf %136, %139 : vector<16x16xf32>
    %141 = arith.truncf %126 : vector<16x16xf32> to vector<16x16xbf16>
    %142 = arith.truncf %133 : vector<16x16xf32> to vector<16x16xbf16>
    %cst_89 = arith.constant dense<0.000000e+00> : vector<16x16xf32>
    %143 = tpu.matmul %141, %142, %cst_89 {dimension_numbers = #tpu.dot_dimension_numbers<[1], [1], [0], [0], [0, 0, 1, 0], [], []>} : vector<16x16xbf16>, vector<16x16xbf16>, vector<16x16xf32> -> vector<16x16xf32>
    %cst_90 = arith.constant 2.500000e-01 : f32
    %144 = vector.broadcast %cst_90 : f32 to vector<16x16xf32>
    %145 = arith.mulf %143, %144 : vector<16x16xf32>
    %cst_91 = arith.constant dense<0xFF800000> : vector<16xf32>
    %146 = vector.multi_reduction <maximumf>, %145, %cst_91 [1] : vector<16x16xf32> to vector<16xf32>
    %147 = vector.shape_cast %146 : vector<16xf32> to vector<16x1xf32>
    %148 = vector.broadcast %147 : vector<16x1xf32> to vector<16x16xf32>
    %149 = arith.subf %145, %148 : vector<16x16xf32>
    %150 = math.exp %149 : vector<16x16xf32>
    %cst_92 = arith.constant dense<0.000000e+00> : vector<16xf32>
    %151 = vector.multi_reduction <add>, %150, %cst_92 [1] : vector<16x16xf32> to vector<16xf32>
    %152 = vector.shape_cast %151 : vector<16xf32> to vector<16x1xf32>
    %153 = tpu.reciprocal %152 {approx = true} : vector<16x1xf32> -> vector<16x1xf32>
    %154 = vector.broadcast %153 : vector<16x1xf32> to vector<16x16xf32>
    %155 = arith.mulf %150, %154 : vector<16x16xf32>
    %156 = arith.truncf %155 : vector<16x16xf32> to vector<16x16xbf16>
    %157 = arith.truncf %140 : vector<16x16xf32> to vector<16x16xbf16>
    %cst_93 = arith.constant dense<0.000000e+00> : vector<16x16xf32>
    %158 = tpu.matmul %156, %157, %cst_93 {dimension_numbers = #tpu.dot_dimension_numbers<[1], [0], [0], [1], [0, 0, 1, 1], [], []>} : vector<16x16xbf16>, vector<16x16xbf16>, vector<16x16xf32> -> vector<16x16xf32>
    %159 = arith.truncf %158 : vector<16x16xf32> to vector<16x16xbf16>
    %c2_94 = arith.constant 2 : index
    %c0_95 = arith.constant 0 : index
    %c0_96 = arith.constant 0 : index
    %160 = vector.load %arg8[%c2_94, %c0_95, %c0_96] : memref<4x16x64xbf16, #tpu.memory_space<vmem>>, vector<1x16x64xbf16>
    %161 = vector.shape_cast %160 : vector<1x16x64xbf16> to vector<16x64xbf16>
    %cst_97 = arith.constant dense<0.000000e+00> : vector<16x64xf32>
    %162 = tpu.matmul %159, %161, %cst_97 {dimension_numbers = #tpu.dot_dimension_numbers<[1], [0], [0], [1], [0, 0, 1, 1], [], []>} : vector<16x16xbf16>, vector<16x64xbf16>, vector<16x64xf32> -> vector<16x64xf32>
    %163 = arith.addf %119, %162 : vector<16x64xf32>
    %c3 = arith.constant 3 : index
    %c0_98 = arith.constant 0 : index
    %c0_99 = arith.constant 0 : index
    %164 = vector.load %arg6[%c3, %c0_98, %c0_99] : memref<12x64x16xbf16, #tpu.memory_space<vmem>>, vector<1x64x16xbf16>
    %165 = vector.shape_cast %164 : vector<1x64x16xbf16> to vector<64x16xbf16>
    %cst_100 = arith.constant dense<0.000000e+00> : vector<16x16xf32>
    %166 = tpu.matmul %30, %165, %cst_100 {dimension_numbers = #tpu.dot_dimension_numbers<[1], [0], [0], [1], [0, 0, 1, 1], [], []>} : vector<16x64xbf16>, vector<64x16xbf16>, vector<16x16xf32> -> vector<16x16xf32>
    %c3_101 = arith.constant 3 : index
    %c0_102 = arith.constant 0 : index
    %c0_103 = arith.constant 0 : index
    %167 = vector.load %arg7[%c3_101, %c0_102, %c0_103] : memref<12x1x16xf32, #tpu.memory_space<vmem>>, vector<1x1x16xf32>
    %168 = vector.shape_cast %167 : vector<1x1x16xf32> to vector<1x16xf32>
    %169 = vector.broadcast %168 : vector<1x16xf32> to vector<16x16xf32>
    %170 = arith.addf %166, %169 : vector<16x16xf32>
    %c7 = arith.constant 7 : index
    %c0_104 = arith.constant 0 : index
    %c0_105 = arith.constant 0 : index
    %171 = vector.load %arg6[%c7, %c0_104, %c0_105] : memref<12x64x16xbf16, #tpu.memory_space<vmem>>, vector<1x64x16xbf16>
    %172 = vector.shape_cast %171 : vector<1x64x16xbf16> to vector<64x16xbf16>
    %cst_106 = arith.constant dense<0.000000e+00> : vector<16x16xf32>
    %173 = tpu.matmul %30, %172, %cst_106 {dimension_numbers = #tpu.dot_dimension_numbers<[1], [0], [0], [1], [0, 0, 1, 1], [], []>} : vector<16x64xbf16>, vector<64x16xbf16>, vector<16x16xf32> -> vector<16x16xf32>
    %c7_107 = arith.constant 7 : index
    %c0_108 = arith.constant 0 : index
    %c0_109 = arith.constant 0 : index
    %174 = vector.load %arg7[%c7_107, %c0_108, %c0_109] : memref<12x1x16xf32, #tpu.memory_space<vmem>>, vector<1x1x16xf32>
    %175 = vector.shape_cast %174 : vector<1x1x16xf32> to vector<1x16xf32>
    %176 = vector.broadcast %175 : vector<1x16xf32> to vector<16x16xf32>
    %177 = arith.addf %173, %176 : vector<16x16xf32>
    %c11 = arith.constant 11 : index
    %c0_110 = arith.constant 0 : index
    %c0_111 = arith.constant 0 : index
    %178 = vector.load %arg6[%c11, %c0_110, %c0_111] : memref<12x64x16xbf16, #tpu.memory_space<vmem>>, vector<1x64x16xbf16>
    %179 = vector.shape_cast %178 : vector<1x64x16xbf16> to vector<64x16xbf16>
    %cst_112 = arith.constant dense<0.000000e+00> : vector<16x16xf32>
    %180 = tpu.matmul %30, %179, %cst_112 {dimension_numbers = #tpu.dot_dimension_numbers<[1], [0], [0], [1], [0, 0, 1, 1], [], []>} : vector<16x64xbf16>, vector<64x16xbf16>, vector<16x16xf32> -> vector<16x16xf32>
    %c11_113 = arith.constant 11 : index
    %c0_114 = arith.constant 0 : index
    %c0_115 = arith.constant 0 : index
    %181 = vector.load %arg7[%c11_113, %c0_114, %c0_115] : memref<12x1x16xf32, #tpu.memory_space<vmem>>, vector<1x1x16xf32>
    %182 = vector.shape_cast %181 : vector<1x1x16xf32> to vector<1x16xf32>
    %183 = vector.broadcast %182 : vector<1x16xf32> to vector<16x16xf32>
    %184 = arith.addf %180, %183 : vector<16x16xf32>
    %185 = arith.truncf %170 : vector<16x16xf32> to vector<16x16xbf16>
    %186 = arith.truncf %177 : vector<16x16xf32> to vector<16x16xbf16>
    %cst_116 = arith.constant dense<0.000000e+00> : vector<16x16xf32>
    %187 = tpu.matmul %185, %186, %cst_116 {dimension_numbers = #tpu.dot_dimension_numbers<[1], [1], [0], [0], [0, 0, 1, 0], [], []>} : vector<16x16xbf16>, vector<16x16xbf16>, vector<16x16xf32> -> vector<16x16xf32>
    %cst_117 = arith.constant 2.500000e-01 : f32
    %188 = vector.broadcast %cst_117 : f32 to vector<16x16xf32>
    %189 = arith.mulf %187, %188 : vector<16x16xf32>
    %cst_118 = arith.constant dense<0xFF800000> : vector<16xf32>
    %190 = vector.multi_reduction <maximumf>, %189, %cst_118 [1] : vector<16x16xf32> to vector<16xf32>
    %191 = vector.shape_cast %190 : vector<16xf32> to vector<16x1xf32>
    %192 = vector.broadcast %191 : vector<16x1xf32> to vector<16x16xf32>
    %193 = arith.subf %189, %192 : vector<16x16xf32>
    %194 = math.exp %193 : vector<16x16xf32>
    %cst_119 = arith.constant dense<0.000000e+00> : vector<16xf32>
    %195 = vector.multi_reduction <add>, %194, %cst_119 [1] : vector<16x16xf32> to vector<16xf32>
    %196 = vector.shape_cast %195 : vector<16xf32> to vector<16x1xf32>
    %197 = tpu.reciprocal %196 {approx = true} : vector<16x1xf32> -> vector<16x1xf32>
    %198 = vector.broadcast %197 : vector<16x1xf32> to vector<16x16xf32>
    %199 = arith.mulf %194, %198 : vector<16x16xf32>
    %200 = arith.truncf %199 : vector<16x16xf32> to vector<16x16xbf16>
    %201 = arith.truncf %184 : vector<16x16xf32> to vector<16x16xbf16>
    %cst_120 = arith.constant dense<0.000000e+00> : vector<16x16xf32>
    %202 = tpu.matmul %200, %201, %cst_120 {dimension_numbers = #tpu.dot_dimension_numbers<[1], [0], [0], [1], [0, 0, 1, 1], [], []>} : vector<16x16xbf16>, vector<16x16xbf16>, vector<16x16xf32> -> vector<16x16xf32>
    %203 = arith.truncf %202 : vector<16x16xf32> to vector<16x16xbf16>
    %c3_121 = arith.constant 3 : index
    %c0_122 = arith.constant 0 : index
    %c0_123 = arith.constant 0 : index
    %204 = vector.load %arg8[%c3_121, %c0_122, %c0_123] : memref<4x16x64xbf16, #tpu.memory_space<vmem>>, vector<1x16x64xbf16>
    %205 = vector.shape_cast %204 : vector<1x16x64xbf16> to vector<16x64xbf16>
    %cst_124 = arith.constant dense<0.000000e+00> : vector<16x64xf32>
    %206 = tpu.matmul %203, %205, %cst_124 {dimension_numbers = #tpu.dot_dimension_numbers<[1], [0], [0], [1], [0, 0, 1, 1], [], []>} : vector<16x16xbf16>, vector<16x64xbf16>, vector<16x64xf32> -> vector<16x64xf32>
    %207 = arith.addf %163, %206 : vector<16x64xf32>
    %208 = arith.addf %7, %207 : vector<16x64xf32>
    %c0_125 = arith.constant 0 : index
    %c0_126 = arith.constant 0 : index
    %209 = vector.load %arg9[%c0_125, %c0_126] : memref<1x64xf32, #tpu.memory_space<vmem>>, vector<1x64xf32>
    %210 = vector.broadcast %209 : vector<1x64xf32> to vector<16x64xf32>
    %211 = arith.addf %208, %210 : vector<16x64xf32>
    %c0_127 = arith.constant 0 : index
    %c0_128 = arith.constant 0 : index
    %212 = vector.load %arg10[%c0_127, %c0_128] : memref<1x64xf32, #tpu.memory_space<vmem>>, vector<1x64xf32>
    %c0_129 = arith.constant 0 : index
    %c0_130 = arith.constant 0 : index
    %213 = vector.load %arg11[%c0_129, %c0_130] : memref<1x64xf32, #tpu.memory_space<vmem>>, vector<1x64xf32>
    %cst_131 = arith.constant dense<0.000000e+00> : vector<16xf32>
    %214 = vector.multi_reduction <add>, %211, %cst_131 [1] : vector<16x64xf32> to vector<16xf32>
    %215 = vector.shape_cast %214 : vector<16xf32> to vector<16x1xf32>
    %cst_132 = arith.constant 6.400000e+01 : f32
    %216 = vector.broadcast %cst_132 : f32 to vector<16x1xf32>
    %217 = arith.divf %215, %216 : vector<16x1xf32>
    %218 = vector.broadcast %217 : vector<16x1xf32> to vector<16x64xf32>
    %219 = arith.subf %211, %218 : vector<16x64xf32>
    %220 = arith.mulf %219, %219 : vector<16x64xf32>
    %cst_133 = arith.constant dense<0.000000e+00> : vector<16xf32>
    %221 = vector.multi_reduction <add>, %220, %cst_133 [1] : vector<16x64xf32> to vector<16xf32>
    %222 = vector.shape_cast %221 : vector<16xf32> to vector<16x1xf32>
    %cst_134 = arith.constant 6.400000e+01 : f32
    %223 = vector.broadcast %cst_134 : f32 to vector<16x1xf32>
    %224 = arith.divf %222, %223 : vector<16x1xf32>
    %cst_135 = arith.constant 9.99999974E-6 : f32
    %225 = vector.broadcast %cst_135 : f32 to vector<16x1xf32>
    %226 = arith.addf %224, %225 : vector<16x1xf32>
    %227 = math.rsqrt %226 : vector<16x1xf32>
    %228 = vector.broadcast %227 : vector<16x1xf32> to vector<16x64xf32>
    %229 = arith.mulf %219, %228 : vector<16x64xf32>
    %230 = vector.broadcast %212 : vector<1x64xf32> to vector<16x64xf32>
    %231 = arith.mulf %229, %230 : vector<16x64xf32>
    %232 = vector.broadcast %213 : vector<1x64xf32> to vector<16x64xf32>
    %233 = arith.addf %231, %232 : vector<16x64xf32>
    %234 = arith.truncf %233 : vector<16x64xf32> to vector<16x64xbf16>
    %c0_136 = arith.constant 0 : index
    %c0_137 = arith.constant 0 : index
    %235 = vector.load %arg12[%c0_136, %c0_137] : memref<64x256xbf16, #tpu.memory_space<vmem>>, vector<64x256xbf16>
    %cst_138 = arith.constant dense<0.000000e+00> : vector<16x256xf32>
    %236 = tpu.matmul %234, %235, %cst_138 {dimension_numbers = #tpu.dot_dimension_numbers<[1], [0], [0], [1], [0, 0, 1, 1], [], []>} : vector<16x64xbf16>, vector<64x256xbf16>, vector<16x256xf32> -> vector<16x256xf32>
    %c0_139 = arith.constant 0 : index
    %c0_140 = arith.constant 0 : index
    %237 = vector.load %arg13[%c0_139, %c0_140] : memref<1x256xf32, #tpu.memory_space<vmem>>, vector<1x256xf32>
    %238 = vector.broadcast %237 : vector<1x256xf32> to vector<16x256xf32>
    %239 = arith.addf %236, %238 : vector<16x256xf32>
    %cst_141 = arith.constant 5.000000e-01 : f32
    %240 = vector.broadcast %cst_141 : f32 to vector<16x256xf32>
    %241 = arith.mulf %240, %239 : vector<16x256xf32>
    %cst_142 = arith.constant 4.471500e-02 : f32
    %242 = vector.broadcast %cst_142 : f32 to vector<16x256xf32>
    %243 = arith.mulf %242, %239 : vector<16x256xf32>
    %244 = arith.mulf %243, %239 : vector<16x256xf32>
    %245 = arith.mulf %244, %239 : vector<16x256xf32>
    %246 = arith.addf %239, %245 : vector<16x256xf32>
    %cst_143 = arith.constant 0.797884583 : f32
    %247 = vector.broadcast %cst_143 : f32 to vector<16x256xf32>
    %248 = arith.mulf %247, %246 : vector<16x256xf32>
    %249 = math.tanh %248 : vector<16x256xf32>
    %cst_144 = arith.constant 1.000000e+00 : f32
    %250 = vector.broadcast %cst_144 : f32 to vector<16x256xf32>
    %251 = arith.addf %250, %249 : vector<16x256xf32>
    %252 = arith.mulf %241, %251 : vector<16x256xf32>
    %253 = arith.truncf %252 : vector<16x256xf32> to vector<16x256xbf16>
    %c0_145 = arith.constant 0 : index
    %c0_146 = arith.constant 0 : index
    %254 = vector.load %arg14[%c0_145, %c0_146] : memref<256x64xbf16, #tpu.memory_space<vmem>>, vector<256x64xbf16>
    %cst_147 = arith.constant dense<0.000000e+00> : vector<16x64xf32>
    %255 = tpu.matmul %253, %254, %cst_147 {dimension_numbers = #tpu.dot_dimension_numbers<[1], [0], [0], [1], [0, 0, 1, 1], [], []>} : vector<16x256xbf16>, vector<256x64xbf16>, vector<16x64xf32> -> vector<16x64xf32>
    %c0_148 = arith.constant 0 : index
    %c0_149 = arith.constant 0 : index
    %256 = vector.load %arg15[%c0_148, %c0_149] : memref<1x64xf32, #tpu.memory_space<vmem>>, vector<1x64xf32>
    %257 = vector.broadcast %256 : vector<1x64xf32> to vector<16x64xf32>
    %258 = arith.addf %255, %257 : vector<16x64xf32>
    %259 = arith.addf %211, %258 : vector<16x64xf32>
    %260 = arith.truncf %259 : vector<16x64xf32> to vector<16x64xbf16>
    %c0_150 = arith.constant 0 : index
    %c0_151 = arith.constant 0 : index
    %261 = vector.load %arg16[%c0_150, %c0_151] : memref<64x1xbf16, #tpu.memory_space<vmem>>, vector<64x1xbf16>
    %cst_152 = arith.constant dense<0.000000e+00> : vector<16x1xf32>
    %262 = tpu.matmul %260, %261, %cst_152 {dimension_numbers = #tpu.dot_dimension_numbers<[1], [0], [0], [1], [0, 0, 1, 1], [], []>} : vector<16x64xbf16>, vector<64x1xbf16>, vector<16x1xf32> -> vector<16x1xf32>
    %c0_153 = arith.constant 0 : index
    %c0_154 = arith.constant 0 : index
    %263 = vector.load %arg17[%c0_153, %c0_154] : memref<1x1xf32, #tpu.memory_space<vmem>>, vector<1x1xf32>
    %264 = vector.broadcast %263 : vector<1x1xf32> to vector<16x1xf32>
    %265 = arith.addf %262, %264 : vector<16x1xf32>
    %c0_155 = arith.constant 0 : index
    %c0_156 = arith.constant 0 : index
    %c0_157 = arith.constant 0 : index
    %266 = vector.load %arg18[%c0_155, %c0_156, %c0_157] : memref<1x16x1xf32, #tpu.memory_space<vmem>>, vector<1x16x1xf32>
    %267 = vector.shape_cast %266 : vector<1x16x1xf32> to vector<16x1xf32>
    %268 = vector.shape_cast %265 : vector<16x1xf32> to vector<1x16x1xf32>
    tpu.vector_store %arg18[%c0_155, %c0_156, %c0_157], %268 {strides = array<i32>} : memref<1x16x1xf32, #tpu.memory_space<vmem>>, vector<1x16x1xf32>,
    return
  }
  func.func @transform_0(%arg0: i32) -> (i32, i32, i32) {
    %c0_i32 = arith.constant 0 : i32
    %c0_i32_0 = arith.constant 0 : i32
    %c0_i32_1 = arith.constant 0 : i32
    return %arg0, %c0_i32, %c0_i32_0 : i32, i32, i32
  }
  func.func @transform_1(%arg0: i32) -> (i32, i32) {
    %c0_i32 = arith.constant 0 : i32
    %c0_i32_0 = arith.constant 0 : i32
    %c0_i32_1 = arith.constant 0 : i32
    return %c0_i32, %c0_i32_0 : i32, i32
  }
  func.func @transform_2(%arg0: i32) -> (i32, i32) {
    %c0_i32 = arith.constant 0 : i32
    %c0_i32_0 = arith.constant 0 : i32
    %c0_i32_1 = arith.constant 0 : i32
    return %c0_i32, %c0_i32_0 : i32, i32
  }
  func.func @transform_3(%arg0: i32) -> (i32, i32) {
    %c0_i32 = arith.constant 0 : i32
    %c0_i32_0 = arith.constant 0 : i32
    %c0_i32_1 = arith.constant 0 : i32
    return %c0_i32, %c0_i32_0 : i32, i32
  }
  func.func @transform_4(%arg0: i32) -> (i32, i32) {
    %c0_i32 = arith.constant 0 : i32
    %c0_i32_0 = arith.constant 0 : i32
    %c0_i32_1 = arith.constant 0 : i32
    return %c0_i32, %c0_i32_0 : i32, i32
  }
  func.func @transform_5(%arg0: i32) -> (i32, i32, i32) {
    %c0_i32 = arith.constant 0 : i32
    %c0_i32_0 = arith.constant 0 : i32
    %c0_i32_1 = arith.constant 0 : i32
    %c0_i32_2 = arith.constant 0 : i32
    return %c0_i32, %c0_i32_0, %c0_i32_1 : i32, i32, i32
  }
  func.func @transform_6(%arg0: i32) -> (i32, i32, i32) {
    %c0_i32 = arith.constant 0 : i32
    %c0_i32_0 = arith.constant 0 : i32
    %c0_i32_1 = arith.constant 0 : i32
    %c0_i32_2 = arith.constant 0 : i32
    return %c0_i32, %c0_i32_0, %c0_i32_1 : i32, i32, i32
  }
  func.func @transform_7(%arg0: i32) -> (i32, i32, i32) {
    %c0_i32 = arith.constant 0 : i32
    %c0_i32_0 = arith.constant 0 : i32
    %c0_i32_1 = arith.constant 0 : i32
    %c0_i32_2 = arith.constant 0 : i32
    return %c0_i32, %c0_i32_0, %c0_i32_1 : i32, i32, i32
  }
  func.func @transform_8(%arg0: i32) -> (i32, i32) {
    %c0_i32 = arith.constant 0 : i32
    %c0_i32_0 = arith.constant 0 : i32
    %c0_i32_1 = arith.constant 0 : i32
    return %c0_i32, %c0_i32_0 : i32, i32
  }
  func.func @transform_9(%arg0: i32) -> (i32, i32) {
    %c0_i32 = arith.constant 0 : i32
    %c0_i32_0 = arith.constant 0 : i32
    %c0_i32_1 = arith.constant 0 : i32
    return %c0_i32, %c0_i32_0 : i32, i32
  }
  func.func @transform_10(%arg0: i32) -> (i32, i32) {
    %c0_i32 = arith.constant 0 : i32
    %c0_i32_0 = arith.constant 0 : i32
    %c0_i32_1 = arith.constant 0 : i32
    return %c0_i32, %c0_i32_0 : i32, i32
  }
  func.func @transform_11(%arg0: i32) -> (i32, i32) {
    %c0_i32 = arith.constant 0 : i32
    %c0_i32_0 = arith.constant 0 : i32
    %c0_i32_1 = arith.constant 0 : i32
    return %c0_i32, %c0_i32_0 : i32, i32
  }
  func.func @transform_12(%arg0: i32) -> (i32, i32) {
    %c0_i32 = arith.constant 0 : i32
    %c0_i32_0 = arith.constant 0 : i32
    %c0_i32_1 = arith.constant 0 : i32
    return %c0_i32, %c0_i32_0 : i32, i32
  }
  func.func @transform_13(%arg0: i32) -> (i32, i32) {
    %c0_i32 = arith.constant 0 : i32
    %c0_i32_0 = arith.constant 0 : i32
    %c0_i32_1 = arith.constant 0 : i32
    return %c0_i32, %c0_i32_0 : i32, i32
  }
  func.func @transform_14(%arg0: i32) -> (i32, i32) {
    %c0_i32 = arith.constant 0 : i32
    %c0_i32_0 = arith.constant 0 : i32
    %c0_i32_1 = arith.constant 0 : i32
    return %c0_i32, %c0_i32_0 : i32, i32
  }
  func.func @transform_15(%arg0: i32) -> (i32, i32) {
    %c0_i32 = arith.constant 0 : i32
    %c0_i32_0 = arith.constant 0 : i32
    %c0_i32_1 = arith.constant 0 : i32
    return %c0_i32, %c0_i32_0 : i32, i32
  }
  func.func @transform_16(%arg0: i32) -> (i32, i32) {
    %c0_i32 = arith.constant 0 : i32
    %c0_i32_0 = arith.constant 0 : i32
    %c0_i32_1 = arith.constant 0 : i32
    return %c0_i32, %c0_i32_0 : i32, i32
  }
  func.func @transform_17(%arg0: i32) -> (i32, i32, i32) {
    %c0_i32 = arith.constant 0 : i32
    %c0_i32_0 = arith.constant 0 : i32
    %c0_i32_1 = arith.constant 0 : i32
    return %arg0, %c0_i32, %c0_i32_0 : i32, i32, i32
  }
}

</mosaic_0001>

<llo_original>
// kernel: hvit_discriminator.3
$region0: #{hvit_discriminator.3}
  #allocation0 [shape = 'u32[]', space=smem, size = 0x4, offset = 0x4, fixed_abs, tag = 'smem constant byte address 0x4 - core index']
  #allocation1 [shape = 'u32[72,128]{1,0:T(1,128)}', space=vmem, size = 0x9000, scoped, tag = 'internal scratch']
  %s0 = inlined_call_operand.vmem [shape: f32[2,64,48], index: 0, kind: input, shape index: {}]
  %s1 = inlined_call_operand.vmem [shape: f32[2,64,3], index: 1, kind: input, shape index: {}]
  %s2 = inlined_call_operand.vmem [shape: bf16[48,32], index: 2, kind: input, shape index: {}]
  %s3 = inlined_call_operand.vmem [shape: f32[1,32], index: 3, kind: input, shape index: {}]
  %s4 = inlined_call_operand.vmem [shape: f32[1,32], index: 4, kind: input, shape index: {}]
  %s5 = inlined_call_operand.vmem [shape: f32[1,32], index: 5, kind: input, shape index: {}]
  %s6 = inlined_call_operand.vmem [shape: bf16[3,32], index: 6, kind: input, shape index: {}]
  %s7 = inlined_call_operand.vmem [shape: f32[1,32], index: 7, kind: input, shape index: {}]
  %s8 = inlined_call_operand.vmem [shape: f32[2,64,32], index: 8, kind: output, shape index: {}]
  %s9 = sld [smem:[#allocation0]]
  $region65: #{hvit_discriminator.3} parent=0
    _
  %s11 = ssub.s32 1, %s9
  %s12 = scalar_select 0, %s11, %s9
  loop: start=0, step=1, limit=4
  $region2: #{hvit_discriminator.3} parent=0 // loop_pre_header
    _
  $region3: #{hvit_discriminator.3} parent=0 // loop_header
    %s14 = sphi 0, %s18
    %p15 = scmp.ge.s32.totalorder %s14, 4
    %s24 = sphi 0, %s26
    %s27 = sphi 0, %s24
    %s28 = sphi 0, %s27
    %s44 = sphi 0, %s28
    %s50 = sphi 0, %s52
    %s53 = sphi 0, %s50
    %s54 = sphi 0, %s53
    %s70 = sphi 0, %s54
    %s74 = sphi 0, %s74
    %s76 = sphi 0, %s74
    %s77 = sphi 0, %s76
    %s91 = sphi 0, %s77
    %s95 = sphi 0, %s95
    %s97 = sphi 0, %s95
    %s98 = sphi 0, %s97
    %s112 = sphi 0, %s98
    %s116 = sphi 0, %s116
    %s118 = sphi 0, %s116
    %s119 = sphi 0, %s118
    %s133 = sphi 0, %s119
    %s137 = sphi 0, %s137
    %s139 = sphi 0, %s137
    %s140 = sphi 0, %s139
    %s154 = sphi 0, %s140
    %s158 = sphi 0, %s158
    %s160 = sphi 0, %s158
    %s161 = sphi 0, %s160
    %s175 = sphi 0, %s161
    %s179 = sphi 0, %s179
    %s181 = sphi 0, %s179
    %s182 = sphi 0, %s181
    %s196 = sphi 0, %s182
    %s202 = sphi 0, %s204
    %s205 = sphi 0, %s202
    %s206 = sphi 0, %s205
    %s222 = sphi 0, %s206
  $region4: #{hvit_discriminator.3} parent=0 // loop_header_branch
    %17 = sbr.rel (%p15) target = $region8
  $region5: #{hvit_discriminator.3} parent=0 // loop_body
    %s19 = ssub.s32 %s14, 1
    %s20 = ssub.s32 %s14, 2
    %s21 = sadd.s32 %s14, 1
    %s22 = ssub.s32 %s14, %s21
    %p23 = scmp.eq.s32.totalorder %s22, 0
    %s25 = sadd.s32 %s24, 1
    %s26 = scalar_select %p23, %s24, %s25
    %p29 = pneg %p23
    %p30 = scmp.eq.s32.totalorder %s14, 1
    %p31 = por %p29, %p30
    %p32 = scmp.ne.s32.totalorder %s24, %s27
    %p33 = scmp.eq.s32.totalorder %s14, 0
    %p34 = por %p32, %p33
    %p35 = scmp.ne.s32.totalorder %s24, %s27
    %p36 = scmp.eq.s32.totalorder %s19, 1
    %p37 = por %p35, %p36
    %p38 = scmp.ne.s32.totalorder %s27, %s28
    %p39 = scmp.eq.s32.totalorder %s19, 0
    %p40 = por %p38, %p39
    %p41 = scmp.ne.s32.totalorder %s27, %s28
    %p42 = scmp.eq.s32.totalorder %s20, 1
    %p43 = por %p41, %p42
    %p45 = scmp.ne.s32.totalorder %s28, %s44
    %p46 = scmp.eq.s32.totalorder %s20, 0
    %p47 = por %p45, %p46
    %s48 = ssub.s32 %s14, %s21
    %p49 = scmp.eq.s32.totalorder %s48, 0
    %s51 = sadd.s32 %s50, 1
    %s52 = scalar_select %p49, %s50, %s51
    %p55 = pneg %p49
    %p56 = scmp.eq.s32.totalorder %s14, 1
    %p57 = por %p55, %p56
    %p58 = scmp.ne.s32.totalorder %s50, %s53
    %p59 = scmp.eq.s32.totalorder %s14, 0
    %p60 = por %p58, %p59
    %p61 = scmp.ne.s32.totalorder %s50, %s53
    %p62 = scmp.eq.s32.totalorder %s19, 1
    %p63 = por %p61, %p62
    %p64 = scmp.ne.s32.totalorder %s53, %s54
    %p65 = scmp.eq.s32.totalorder %s19, 0
    %p66 = por %p64, %p65
    %p67 = scmp.ne.s32.totalorder %s53, %s54
    %p68 = scmp.eq.s32.totalorder %s20, 1
    %p69 = por %p67, %p68
    %p71 = scmp.ne.s32.totalorder %s54, %s70
    %p72 = scmp.eq.s32.totalorder %s20, 0
    %p73 = por %p71, %p72
    %s75 = sadd.s32 %s74, 1
    %p78 = scmp.eq.s32.totalorder %s14, 1
    %p79 = scmp.ne.s32.totalorder %s74, %s76
    %p80 = scmp.eq.s32.totalorder %s14, 0
    %p81 = por %p79, %p80
    %p82 = scmp.ne.s32.totalorder %s74, %s76
    %p83 = scmp.eq.s32.totalorder %s19, 1
    %p84 = por %p82, %p83
    %p85 = scmp.ne.s32.totalorder %s76, %s77
    %p86 = scmp.eq.s32.totalorder %s19, 0
    %p87 = por %p85, %p86
    %p88 = scmp.ne.s32.totalorder %s76, %s77
    %p89 = scmp.eq.s32.totalorder %s20, 1
    %p90 = por %p88, %p89
    %p92 = scmp.ne.s32.totalorder %s77, %s91
    %p93 = scmp.eq.s32.totalorder %s20, 0
    %p94 = por %p92, %p93
    %s96 = sadd.s32 %s95, 1
    %p99 = scmp.eq.s32.totalorder %s14, 1
    %p100 = scmp.ne.s32.totalorder %s95, %s97
    %p101 = scmp.eq.s32.totalorder %s14, 0
    %p102 = por %p100, %p101
    %p103 = scmp.ne.s32.totalorder %s95, %s97
    %p104 = scmp.eq.s32.totalorder %s19, 1
    %p105 = por %p103, %p104
    %p106 = scmp.ne.s32.totalorder %s97, %s98
    %p107 = scmp.eq.s32.totalorder %s19, 0
    %p108 = por %p106, %p107
    %p109 = scmp.ne.s32.totalorder %s97, %s98
    %p110 = scmp.eq.s32.totalorder %s20, 1
    %p111 = por %p109, %p110
    %p113 = scmp.ne.s32.totalorder %s98, %s112
    %p114 = scmp.eq.s32.totalorder %s20, 0
    %p115 = por %p113, %p114
    %s117 = sadd.s32 %s116, 1
    %p120 = scmp.eq.s32.totalorder %s14, 1
    %p121 = scmp.ne.s32.totalorder %s116, %s118
    %p122 = scmp.eq.s32.totalorder %s14, 0
    %p123 = por %p121, %p122
    %p124 = scmp.ne.s32.totalorder %s116, %s118
    %p125 = scmp.eq.s32.totalorder %s19, 1
    %p126 = por %p124, %p125
    %p127 = scmp.ne.s32.totalorder %s118, %s119
    %p128 = scmp.eq.s32.totalorder %s19, 0
    %p129 = por %p127, %p128
    %p130 = scmp.ne.s32.totalorder %s118, %s119
    %p131 = scmp.eq.s32.totalorder %s20, 1
    %p132 = por %p130, %p131
    %p134 = scmp.ne.s32.totalorder %s119, %s133
    %p135 = scmp.eq.s32.totalorder %s20, 0
    %p136 = por %p134, %p135
    %s138 = sadd.s32 %s137, 1
    %p141 = scmp.eq.s32.totalorder %s14, 1
    %p142 = scmp.ne.s32.totalorder %s137, %s139
    %p143 = scmp.eq.s32.totalorder %s14, 0
    %p144 = por %p142, %p143
    %p145 = scmp.ne.s32.totalorder %s137, %s139
    %p146 = scmp.eq.s32.totalorder %s19, 1
    %p147 = por %p145, %p146
    %p148 = scmp.ne.s32.totalorder %s139, %s140
    %p149 = scmp.eq.s32.totalorder %s19, 0
    %p150 = por %p148, %p149
    %p151 = scmp.ne.s32.totalorder %s139, %s140
    %p152 = scmp.eq.s32.totalorder %s20, 1
    %p153 = por %p151, %p152
    %p155 = scmp.ne.s32.totalorder %s140, %s154
    %p156 = scmp.eq.s32.totalorder %s20, 0
    %p157 = por %p155, %p156
    %s159 = sadd.s32 %s158, 1
    %p162 = scmp.eq.s32.totalorder %s14, 1
    %p163 = scmp.ne.s32.totalorder %s158, %s160
    %p164 = scmp.eq.s32.totalorder %s14, 0
    %p165 = por %p163, %p164
    %p166 = scmp.ne.s32.totalorder %s158, %s160
    %p167 = scmp.eq.s32.totalorder %s19, 1
    %p168 = por %p166, %p167
    %p169 = scmp.ne.s32.totalorder %s160, %s161
    %p170 = scmp.eq.s32.totalorder %s19, 0
    %p171 = por %p169, %p170
    %p172 = scmp.ne.s32.totalorder %s160, %s161
    %p173 = scmp.eq.s32.totalorder %s20, 1
    %p174 = por %p172, %p173
    %p176 = scmp.ne.s32.totalorder %s161, %s175
    %p177 = scmp.eq.s32.totalorder %s20, 0
    %p178 = por %p176, %p177
    %s180 = sadd.s32 %s179, 1
    %p183 = scmp.eq.s32.totalorder %s14, 1
    %p184 = scmp.ne.s32.totalorder %s179, %s181
    %p185 = scmp.eq.s32.totalorder %s14, 0
    %p186 = por %p184, %p185
    %p187 = scmp.ne.s32.totalorder %s179, %s181
    %p188 = scmp.eq.s32.totalorder %s19, 1
    %p189 = por %p187, %p188
    %p190 = scmp.ne.s32.totalorder %s181, %s182
    %p191 = scmp.eq.s32.totalorder %s19, 0
    %p192 = por %p190, %p191
    %p193 = scmp.ne.s32.totalorder %s181, %s182
    %p194 = scmp.eq.s32.totalorder %s20, 1
    %p195 = por %p193, %p194
    %p197 = scmp.ne.s32.totalorder %s182, %s196
    %p198 = scmp.eq.s32.totalorder %s20, 0
    %p199 = por %p197, %p198
    %s200 = ssub.s32 %s14, %s21
    %p201 = scmp.eq.s32.totalorder %s200, 0
    %s203 = sadd.s32 %s202, 1
    %s204 = scalar_select %p201, %s202, %s203
    %p207 = pneg %p201
    %p208 = scmp.eq.s32.totalorder %s14, 1
    %p209 = por %p207, %p208
    %p210 = scmp.ne.s32.totalorder %s202, %s205
    %p211 = scmp.eq.s32.totalorder %s14, 0
    %p212 = por %p210, %p211
    %p213 = scmp.ne.s32.totalorder %s202, %s205
    %p214 = scmp.eq.s32.totalorder %s19, 1
    %p215 = por %p213, %p214
    %p216 = scmp.ne.s32.totalorder %s205, %s206
    %p217 = scmp.eq.s32.totalorder %s19, 0
    %p218 = por %p216, %p217
    %p219 = scmp.ne.s32.totalorder %s205, %s206
    %p220 = scmp.eq.s32.totalorder %s20, 1
    %p221 = por %p219, %p220
    %p223 = scmp.ne.s32.totalorder %s206, %s222
    %p224 = scmp.eq.s32.totalorder %s20, 0
    %p225 = por %p223, %p224
    %p226 = scmp.le.s32.totalorder 1, %s14
    %p227 = scmp.lt.s32.totalorder %s14, 3
    %p228 = pnand %p226, %p227
    %p229 = pneg %p228
    // Predicated region
    $region9: #{hvit_discriminator.3} parent=5 // pred_check
      _
    $region10: #{hvit_discriminator.3} parent=5 // pred_check_branch
      %231 = sbr.rel (%p228) target = $region12
    $region11: #{hvit_discriminator.3} parent=5 // pred_region
      %s232 = ssub.s32 %s14, 1
      // Predicated region
      $region13: #{hvit_discriminator.3} parent=11 // pred_check
        %p233 = pneg %p87
      $region14: #{hvit_discriminator.3} parent=11 // pred_check_branch
        %235 = sbr.rel (%p233) target = $region16
      $region15: #{hvit_discriminator.3} parent=11 // pred_region
        _
      $region16: #{hvit_discriminator.3} parent=11 // pred_fallthru
        _
      // Predicated region
      $region17: #{hvit_discriminator.3} parent=11 // pred_check
        %p236 = pneg %p108
      $region18: #{hvit_discriminator.3} parent=11 // pred_check_branch
        %238 = sbr.rel (%p236) target = $region20
      $region19: #{hvit_discriminator.3} parent=11 // pred_region
        _
      $region20: #{hvit_discriminator.3} parent=11 // pred_fallthru
        _
      // Predicated region
      $region21: #{hvit_discriminator.3} parent=11 // pred_check
        %p239 = pneg %p129
      $region22: #{hvit_discriminator.3} parent=11 // pred_check_branch
        %241 = sbr.rel (%p239) target = $region24
      $region23: #{hvit_discriminator.3} parent=11 // pred_region
        _
      $region24: #{hvit_discriminator.3} parent=11 // pred_fallthru
        _
      // Predicated region
      $region25: #{hvit_discriminator.3} parent=11 // pred_check
        %p242 = pneg %p150
      $region26: #{hvit_discriminator.3} parent=11 // pred_check_branch
        %244 = sbr.rel (%p242) target = $region28
      $region27: #{hvit_discriminator.3} parent=11 // pred_region
        _
      $region28: #{hvit_discriminator.3} parent=11 // pred_fallthru
        _
      // Predicated region
      $region29: #{hvit_discriminator.3} parent=11 // pred_check
        %p245 = pneg %p171
      $region30: #{hvit_discriminator.3} parent=11 // pred_check_branch
        %247 = sbr.rel (%p245) target = $region32
      $region31: #{hvit_discriminator.3} parent=11 // pred_region
        _
      $region32: #{hvit_discriminator.3} parent=11 // pred_fallthru
        _
      // Predicated region
      $region33: #{hvit_discriminator.3} parent=11 // pred_check
        %p248 = pneg %p192
      $region34: #{hvit_discriminator.3} parent=11 // pred_check_branch
        %250 = sbr.rel (%p248) target = $region36
      $region35: #{hvit_discriminator.3} parent=11 // pred_region
        _
      $region36: #{hvit_discriminator.3} parent=11 // pred_fallthru
        _
    $region12: #{hvit_discriminator.3} parent=5 // pred_fallthru
      _
    %p251 = scmp.lt.s32.totalorder %s14, 2
    // Predicated region
    $region37: #{hvit_discriminator.3} parent=5 // pred_check
      %p252 = pneg %p251
    $region38: #{hvit_discriminator.3} parent=5 // pred_check_branch
      %254 = sbr.rel (%p252) target = $region40
    $region39: #{hvit_discriminator.3} parent=5 // pred_region
      // Predicated region
      $region41: #{hvit_discriminator.3} parent=39 // pred_check
        %p255 = pneg %p34
      $region42: #{hvit_discriminator.3} parent=39 // pred_check_branch
        %257 = sbr.rel (%p255) target = $region44
      $region43: #{hvit_discriminator.3} parent=39 // pred_region
        %p258 = scmp.lt.s32.totalorder %s14, 1
        %s259 = scalar_select %p258, %s14, 1
        %s260 = smul.addr %s259, 8
        %s261 = smul.addr %s260, 8
        %s262 = scalar_lea.vmem %s0, %s261
      $region44: #{hvit_discriminator.3} parent=39 // pred_fallthru
        _
      // Predicated region
      $region45: #{hvit_discriminator.3} parent=39 // pred_check
        %p263 = pneg %p60
      $region46: #{hvit_discriminator.3} parent=39 // pred_check_branch
        %265 = sbr.rel (%p263) target = $region48
      $region47: #{hvit_discriminator.3} parent=39 // pred_region
        %p266 = scmp.lt.s32.totalorder %s14, 1
        %s267 = scalar_select %p266, %s14, 1
        %s268 = smul.addr %s267, 8
        %s269 = smul.addr %s268, 8
        %s270 = scalar_lea.vmem %s1, %s269
      $region48: #{hvit_discriminator.3} parent=39 // pred_fallthru
        _
    $region40: #{hvit_discriminator.3} parent=5 // pred_fallthru
      _
    %p271 = scmp.le.s32.totalorder 1, %s14
    %p272 = scmp.lt.s32.totalorder %s14, 3
    %p273 = pnand %p271, %p272
    %p274 = pneg %p273
    // Predicated region
    $region49: #{hvit_discriminator.3} parent=5 // pred_check
      _
    $region50: #{hvit_discriminator.3} parent=5 // pred_check_branch
      %276 = sbr.rel (%p273) target = $region52
    $region51: #{hvit_discriminator.3} parent=5 // pred_region
      %s277 = ssub.s32 %s14, 1
      %p278 = scmp.lt.s32.totalorder %s19, 1
      %s279 = scalar_select %p278, %s19, 1
      %s280 = smul.addr %s279, 8
      %s281 = smul.addr %s280, 8
      %s282 = scalar_lea.vmem %s0, %s281
      %p283 = pneg %p40
      %p284 = pneg %p37
      %p285 = scmp.lt.s32.totalorder %s19, 1
      %s286 = scalar_select %p285, %s19, 1
      %s287 = smul.addr %s286, 8
      %s288 = smul.addr %s287, 8
      %s289 = scalar_lea.vmem %s1, %s288
      %p290 = pneg %p66
      %p291 = pneg %p63
      %p292 = pneg %p87
      %p293 = pneg %p84
      %p294 = pneg %p108
      %p295 = pneg %p105
      %p296 = pneg %p129
      %p297 = pneg %p126
      %p298 = pneg %p150
      %p299 = pneg %p147
      %p300 = pneg %p171
      %p301 = pneg %p168
      %p302 = pneg %p192
      %p303 = pneg %p189
      %p304 = pneg %p218
      %p305 = pneg %p215
      %p306 = scmp.lt.s32.totalorder %s19, 1
      %s307 = scalar_select %p306, %s19, 1
      %s308 = smul.addr %s307, 8
      %s309 = smul.addr %s308, 8
      %s310 = scalar_lea.vmem %s8, %s309
      %p311 = scmp.lt.s32.totalorder %s19, 1
      %s312 = scalar_select %p311, %s19, 1
      %s313 = smul.addr %s312, 8
      %s314 = smul.addr %s313, 8
      %s315 = scalar_lea.vmem %s0, %s314
      %p316 = scmp.lt.s32.totalorder %s19, 1
      %s317 = scalar_select %p316, %s19, 1
      %s318 = smul.addr %s317, 8
      %s319 = smul.addr %s318, 8
      %s320 = scalar_lea.vmem %s1, %s319
      %p321 = scmp.lt.s32.totalorder %s19, 1
      %s322 = scalar_select %p321, %s19, 1
      %s323 = smul.addr %s322, 8
      %s324 = smul.addr %s323, 8
      %s325 = scalar_lea.vmem %s8, %s324
      %v327 = vld [vmem:[%s315] sm:$0xff]
      %v328 = vld [vmem:[%s315 + $0x8] sm:$0xff]
      %v329 = vld [vmem:[%s315 + $0x10] sm:$0xff]
      %v330 = vld [vmem:[%s315 + $0x18] sm:$0xff]
      %v331 = vld [vmem:[%s315 + $0x20] sm:$0xff]
      %v332 = vld [vmem:[%s315 + $0x28] sm:$0xff]
      %v333 = vld [vmem:[%s315 + $0x30] sm:$0xff]
      %v334 = vld [vmem:[%s315 + $0x38] sm:$0xff]
      %v335 = vpack.c.bf16 %v328, %v327
      %v336 = vpack.c.bf16 %v330, %v329
      %v337 = vpack.c.bf16 %v332, %v331
      %v338 = vpack.c.bf16 %v334, %v333
      %v339 = vld [vmem:[%s2] sm:$0xf]
      %v340 = vld [vmem:[%s2 + $0x4] sm:$0xf]
      %v341 = vld [vmem:[%s2 + $0x8] sm:$0xf]
      %v342 = vld [vmem:[%s2 + $0xc] sm:$0xf]
      %v343 = vld [vmem:[%s2 + $0x10] sm:$0xf]
      %v344 = vld [vmem:[%s2 + $0x14] sm:$0xf]
      %v345 = vld [vmem:[%s3] sm:$0x1]
      %v347 = vperm.slane %v345, 0
      %v355 = vunpack.c.l.b16 %v339
      %v356 = vunpack.c.l.b16 %v340
      %v357 = vunpack.c.l.b16 %v341
      %v358 = vunpack.c.l.b16 %v342
      %v359 = vunpack.c.l.b16 %v343
      %v360 = vunpack.c.l.b16 %v344
      %v361 = vpack.c.b16 %v356, %v355
      %v362 = vpack.c.b16 %v358, %v357
      %v363 = vpack.c.b16 %v360, %v359
      %vm367 = vcmask 392192
      %v369 = vsel %vm367, %v335, 0
      %v372 = vsel %vm367, %v336, 0
      %v375 = vsel %vm367, %v337, 0
      %v378 = vsel %vm367, %v338, 0
      %380 = vmatpush.bf16.msra.mxu0 0
      %381 = vmatpush.bf16.msra.mxu0 0
      %382 = vmatpush.bf16.msra.mxu0 0
      %383 = vmatpush.bf16.msra.mxu0 0
      %384 = vmatpush.bf16.msra.mxu0 0
      %385 = vmatpush.bf16.msra.mxu0 %v363
      %386 = vmatpush.bf16.msra.mxu0 %v362
      %387 = vmatpush.bf16.msra.mxu0 %v361
      %388 = vmatmul.bf16.gmra.mxu0 %v369
      %v389 = vpop.f32.mrf.mxu0
      %v390 = vadd.f32 %v347, %v389
      %v391 = vpop.f32.mrf.mxu0
      %v392 = vadd.f32 %v347, %v391
      %393 = vmatmul.bf16.gmra.mxu0 %v372
      %v394 = vpop.f32.mrf.mxu0
      %v395 = vadd.f32 %v347, %v394
      %v396 = vpop.f32.mrf.mxu0
      %v397 = vadd.f32 %v347, %v396
      %398 = vmatmul.bf16.gmra.mxu0 %v375
      %v399 = vpop.f32.mrf.mxu0
      %v400 = vadd.f32 %v347, %v399
      %v401 = vpop.f32.mrf.mxu0
      %v402 = vadd.f32 %v347, %v401
      %403 = vmatmul.bf16.gmra.mxu0 %v378
      %v404 = vpop.f32.mrf.mxu0
      %v405 = vadd.f32 %v347, %v404
      %v406 = vpop.f32.mrf.mxu0
      %v407 = vadd.f32 %v347, %v406
      %408 = vdwg.mxu0
      %v409 = vld [vmem:[%s4] sm:$0x1]
      %v410 = vld [vmem:[%s5] sm:$0x1]
      %vm411 = vcmask 261120
      %v412 = vsel %vm411, %v390, 0.0
      %413 = vadd.xlane.f32.xlu0 %v412
      %v414 = vpop.xlane.xlu0 %413
      %v415 = vsel %vm411, %v392, 0.0
      %416 = vadd.xlane.f32.xlu0 %v415
      %v417 = vpop.xlane.xlu0 %416
      %v418 = vsel %vm411, %v395, 0.0
      %419 = vadd.xlane.f32.xlu0 %v418
      %v420 = vpop.xlane.xlu0 %419
      %v421 = vsel %vm411, %v397, 0.0
      %422 = vadd.xlane.f32.xlu0 %v421
      %v423 = vpop.xlane.xlu0 %422
      %v424 = vsel %vm411, %v400, 0.0
      %425 = vadd.xlane.f32.xlu0 %v424
      %v426 = vpop.xlane.xlu0 %425
      %v427 = vsel %vm411, %v402, 0.0
      %428 = vadd.xlane.f32.xlu0 %v427
      %v429 = vpop.xlane.xlu0 %428
      %v430 = vsel %vm411, %v405, 0.0
      %431 = vadd.xlane.f32.xlu0 %v430
      %v432 = vpop.xlane.xlu0 %431
      %v433 = vsel %vm411, %v407, 0.0
      %434 = vadd.xlane.f32.xlu0 %v433
      %v435 = vpop.xlane.xlu0 %434
      %v436 = vrcp.pop 32.0
      %v437 = vmul.f32 32.0, %v436
      %v438 = vsub.f32 1.0, %v437
      %v439 = vmul.f32 %v436, %v438
      %v440 = vadd.f32 %v436, %v439
      %vm441 = vweird.f32 %v436
      %v442 = vsel %vm441, %v436, %v440
      %v443 = vmul.f32 %v414, %v442
      %v444 = vmul.f32 %v417, %v442
      %v445 = vmul.f32 %v420, %v442
      %v446 = vmul.f32 %v423, %v442
      %v447 = vmul.f32 %v426, %v442
      %v448 = vmul.f32 %v429, %v442
      %v449 = vmul.f32 %v432, %v442
      %v450 = vmul.f32 %v435, %v442
      %v451 = vsub.f32 %v390, %v443
      %v452 = vsub.f32 %v392, %v444
      %v453 = vsub.f32 %v395, %v445
      %v454 = vsub.f32 %v397, %v446
      %v455 = vsub.f32 %v400, %v447
      %v456 = vsub.f32 %v402, %v448
      %v457 = vsub.f32 %v405, %v449
      %v458 = vsub.f32 %v407, %v450
      %v459 = vmul.f32 %v451, %v451
      %v460 = vmul.f32 %v452, %v452
      %v461 = vmul.f32 %v453, %v453
      %v462 = vmul.f32 %v454, %v454
      %v463 = vmul.f32 %v455, %v455
      %v464 = vmul.f32 %v456, %v456
      %v465 = vmul.f32 %v457, %v457
      %v466 = vmul.f32 %v458, %v458
      %v467 = vsel %vm411, %v459, 0.0
      %468 = vadd.xlane.f32.xlu0 %v467
      %v469 = vpop.xlane.xlu0 %468
      %v470 = vsel %vm411, %v460, 0.0
      %471 = vadd.xlane.f32.xlu0 %v470
      %v472 = vpop.xlane.xlu0 %471
      %v473 = vsel %vm411, %v461, 0.0
      %474 = vadd.xlane.f32.xlu0 %v473
      %v475 = vpop.xlane.xlu0 %474
      %v476 = vsel %vm411, %v462, 0.0
      %477 = vadd.xlane.f32.xlu0 %v476
      %v478 = vpop.xlane.xlu0 %477
      %v479 = vsel %vm411, %v463, 0.0
      %480 = vadd.xlane.f32.xlu0 %v479
      %v481 = vpop.xlane.xlu0 %480
      %v482 = vsel %vm411, %v464, 0.0
      %483 = vadd.xlane.f32.xlu0 %v482
      %v484 = vpop.xlane.xlu0 %483
      %v485 = vsel %vm411, %v465, 0.0
      %486 = vadd.xlane.f32.xlu0 %v485
      %v487 = vpop.xlane.xlu0 %486
      %v488 = vsel %vm411, %v466, 0.0
      %489 = vadd.xlane.f32.xlu0 %v488
      %v490 = vpop.xlane.xlu0 %489
      %v491 = vmul.f32 %v469, %v442
      %v492 = vmul.f32 %v472, %v442
      %v493 = vmul.f32 %v475, %v442
      %v494 = vmul.f32 %v478, %v442
      %v495 = vmul.f32 %v481, %v442
      %v496 = vmul.f32 %v484, %v442
      %v497 = vmul.f32 %v487, %v442
      %v498 = vmul.f32 %v490, %v442
      %v499 = vadd.f32 %v491, 1e-05
      %v500 = vadd.f32 %v492, 1e-05
      %v501 = vadd.f32 %v493, 1e-05
      %v502 = vadd.f32 %v494, 1e-05
      %v503 = vadd.f32 %v495, 1e-05
      %v504 = vadd.f32 %v496, 1e-05
      %v505 = vadd.f32 %v497, 1e-05
      %v506 = vadd.f32 %v498, 1e-05
      %v507 = vrsqrt.pop %v499
      %v508 = vmul.f32 %v507, %v499
      %v509 = vmul.f32 %v508, %v507
      %v510 = vmul.f32 0.5, %v509
      %v511 = vsub.f32 1.5, %v510
      %v512 = vmul.f32 %v507, %v511
      %vm513 = vweird.f32 %v499
      %vm514 = vweird.f32 %v507
      %vm515 = vmor %vm513, %vm514
      %v516 = vsel %vm515, %v507, %v512
      %v517 = vrsqrt.pop %v500
      %v518 = vmul.f32 %v517, %v500
      %v519 = vmul.f32 %v518, %v517
      %v520 = vmul.f32 0.5, %v519
      %v521 = vsub.f32 1.5, %v520
      %v522 = vmul.f32 %v517, %v521
      %vm523 = vweird.f32 %v500
      %vm524 = vweird.f32 %v517
      %vm525 = vmor %vm523, %vm524
      %v526 = vsel %vm525, %v517, %v522
      %v527 = vrsqrt.pop %v501
      %v528 = vmul.f32 %v527, %v501
      %v529 = vmul.f32 %v528, %v527
      %v530 = vmul.f32 0.5, %v529
      %v531 = vsub.f32 1.5, %v530
      %v532 = vmul.f32 %v527, %v531
      %vm533 = vweird.f32 %v501
      %vm534 = vweird.f32 %v527
      %vm535 = vmor %vm533, %vm534
      %v536 = vsel %vm535, %v527, %v532
      %v537 = vrsqrt.pop %v502
      %v538 = vmul.f32 %v537, %v502
      %v539 = vmul.f32 %v538, %v537
      %v540 = vmul.f32 0.5, %v539
      %v541 = vsub.f32 1.5, %v540
      %v542 = vmul.f32 %v537, %v541
      %vm543 = vweird.f32 %v502
      %vm544 = vweird.f32 %v537
      %vm545 = vmor %vm543, %vm544
      %v546 = vsel %vm545, %v537, %v542
      %v547 = vrsqrt.pop %v503
      %v548 = vmul.f32 %v547, %v503
      %v549 = vmul.f32 %v548, %v547
      %v550 = vmul.f32 0.5, %v549
      %v551 = vsub.f32 1.5, %v550
      %v552 = vmul.f32 %v547, %v551
      %vm553 = vweird.f32 %v503
      %vm554 = vweird.f32 %v547
      %vm555 = vmor %vm553, %vm554
      %v556 = vsel %vm555, %v547, %v552
      %v557 = vrsqrt.pop %v504
      %v558 = vmul.f32 %v557, %v504
      %v559 = vmul.f32 %v558, %v557
      %v560 = vmul.f32 0.5, %v559
      %v561 = vsub.f32 1.5, %v560
      %v562 = vmul.f32 %v557, %v561
      %vm563 = vweird.f32 %v504
      %vm564 = vweird.f32 %v557
      %vm565 = vmor %vm563, %vm564
      %v566 = vsel %vm565, %v557, %v562
      %v567 = vrsqrt.pop %v505
      %v568 = vmul.f32 %v567, %v505
      %v569 = vmul.f32 %v568, %v567
      %v570 = vmul.f32 0.5, %v569
      %v571 = vsub.f32 1.5, %v570
      %v572 = vmul.f32 %v567, %v571
      %vm573 = vweird.f32 %v505
      %vm574 = vweird.f32 %v567
      %vm575 = vmor %vm573, %vm574
      %v576 = vsel %vm575, %v567, %v572
      %v577 = vrsqrt.pop %v506
      %v578 = vmul.f32 %v577, %v506
      %v579 = vmul.f32 %v578, %v577
      %v580 = vmul.f32 0.5, %v579
      %v581 = vsub.f32 1.5, %v580
      %v582 = vmul.f32 %v577, %v581
      %vm583 = vweird.f32 %v506
      %vm584 = vweird.f32 %v577
      %vm585 = vmor %vm583, %vm584
      %v586 = vsel %vm585, %v577, %v582
      %v587 = vmul.f32 %v451, %v516
      %v588 = vmul.f32 %v452, %v526
      %v589 = vmul.f32 %v453, %v536
      %v590 = vmul.f32 %v454, %v546
      %v591 = vmul.f32 %v455, %v556
      %v592 = vmul.f32 %v456, %v566
      %v593 = vmul.f32 %v457, %v576
      %v594 = vmul.f32 %v458, %v586
      %v596 = vperm.slane %v409, 0
      %v598 = vmul.f32 %v587, %v596
      %v599 = vmul.f32 %v588, %v596
      %v600 = vmul.f32 %v589, %v596
      %v601 = vmul.f32 %v590, %v596
      %v602 = vmul.f32 %v591, %v596
      %v603 = vmul.f32 %v592, %v596
      %v604 = vmul.f32 %v593, %v596
      %v605 = vmul.f32 %v594, %v596
      %v607 = vperm.slane %v410, 0
      %v609 = vadd.f32 %v598, %v607
      %v610 = vadd.f32 %v599, %v607
      %v611 = vadd.f32 %v600, %v607
      %v612 = vadd.f32 %v601, %v607
      %v613 = vadd.f32 %v602, %v607
      %v614 = vadd.f32 %v603, %v607
      %v615 = vadd.f32 %v604, %v607
      %v616 = vadd.f32 %v605, %v607
      %v617 = vld [vmem:[%s320] sm:$0xff]
      %v618 = vld [vmem:[%s320 + $0x8] sm:$0xff]
      %v619 = vld [vmem:[%s320 + $0x10] sm:$0xff]
      %v620 = vld [vmem:[%s320 + $0x18] sm:$0xff]
      %v621 = vld [vmem:[%s320 + $0x20] sm:$0xff]
      %v622 = vld [vmem:[%s320 + $0x28] sm:$0xff]
      %v623 = vld [vmem:[%s320 + $0x30] sm:$0xff]
      %v624 = vld [vmem:[%s320 + $0x38] sm:$0xff]
      %v625 = vpack.c.bf16 %v618, %v617
      %v626 = vpack.c.bf16 %v620, %v619
      %v627 = vpack.c.bf16 %v622, %v621
      %v628 = vpack.c.bf16 %v624, %v623
      %v629 = vld [vmem:[%s6] sm:$0x3]
      %vm630 = vcmask 23552
      %v632 = vsel %vm630, %v625, 0
      %v635 = vsel %vm630, %v626, 0
      %v638 = vsel %vm630, %v627, 0
      %v641 = vsel %vm630, %v628, 0
      %vm643 = vcmask 1040384
      %vm644 = vcmask 1041408
      %v645 = vsel %vm643, 4294967295, 65535
      %v646 = vsel %vm644, %v645, 0
      %v648 = vand.u32 %v629, %v646
      %650 = vmatpush.bf16.msra.mxu0 0
      %651 = vmatpush.bf16.msra.mxu0 0
      %652 = vmatpush.bf16.msra.mxu0 0
      %653 = vmatpush.bf16.msra.mxu0 0
      %654 = vmatpush.bf16.msra.mxu0 0
      %655 = vmatpush.bf16.msra.mxu0 0
      %656 = vmatpush.bf16.msra.mxu0 0
      %657 = vmatpush.bf16.msra.mxu0 %v648
      %658 = vmatmul.bf16.gmra.mxu0 %v632
      %v659 = vpop.f32.mrf.mxu0
      %v660 = vadd.f32 0.0, %v659
      %v661 = vpop.f32.mrf.mxu0
      %v662 = vadd.f32 0.0, %v661
      %663 = vmatmul.bf16.gmra.mxu0 %v635
      %v664 = vpop.f32.mrf.mxu0
      %v665 = vadd.f32 0.0, %v664
      %v666 = vpop.f32.mrf.mxu0
      %v667 = vadd.f32 0.0, %v666
      %668 = vmatmul.bf16.gmra.mxu0 %v638
      %v669 = vpop.f32.mrf.mxu0
      %v670 = vadd.f32 0.0, %v669
      %v671 = vpop.f32.mrf.mxu0
      %v672 = vadd.f32 0.0, %v671
      %673 = vmatmul.bf16.gmra.mxu0 %v641
      %v674 = vpop.f32.mrf.mxu0
      %v675 = vadd.f32 0.0, %v674
      %v676 = vpop.f32.mrf.mxu0
      %v677 = vadd.f32 0.0, %v676
      %678 = vdwg.mxu0
      %v679 = vadd.f32 %v609, %v660
      %v680 = vadd.f32 %v610, %v662
      %v681 = vadd.f32 %v611, %v665
      %v682 = vadd.f32 %v612, %v667
      %v683 = vadd.f32 %v613, %v670
      %v684 = vadd.f32 %v614, %v672
      %v685 = vadd.f32 %v615, %v675
      %v686 = vadd.f32 %v616, %v677
      %v687 = vld [vmem:[%s7] sm:$0x1]
      %v689 = vperm.slane %v687, 0
      %v691 = vadd.f32 %v679, %v689
      %v692 = vadd.f32 %v680, %v689
      %v693 = vadd.f32 %v681, %v689
      %v694 = vadd.f32 %v682, %v689
      %v695 = vadd.f32 %v683, %v689
      %v696 = vadd.f32 %v684, %v689
      %v697 = vadd.f32 %v685, %v689
      %v698 = vadd.f32 %v686, %v689
      %699 = vst.msk [vmem:[%s325] sm:$0xff] %vm411, %v691
      %700 = vst.msk [vmem:[%s325 + $0x8] sm:$0xff] %vm411, %v692
      %701 = vst.msk [vmem:[%s325 + $0x10] sm:$0xff] %vm411, %v693
      %702 = vst.msk [vmem:[%s325 + $0x18] sm:$0xff] %vm411, %v694
      %703 = vst.msk [vmem:[%s325 + $0x20] sm:$0xff] %vm411, %v695
      %704 = vst.msk [vmem:[%s325 + $0x28] sm:$0xff] %vm411, %v696
      %705 = vst.msk [vmem:[%s325 + $0x30] sm:$0xff] %vm411, %v697
      %706 = vst.msk [vmem:[%s325 + $0x38] sm:$0xff] %vm411, %v698
      %p707 = scmp.lt.s32.totalorder %s19, 1
      %s708 = scalar_select %p707, %s19, 1
      %s709 = smul.addr %s708, 8
      %s710 = smul.addr %s709, 8
      %s711 = scalar_lea.vmem %s8, %s710
      // Predicated region
      $region53: #{hvit_discriminator.3} parent=51 // pred_check
        %p712 = pneg %p215
      $region54: #{hvit_discriminator.3} parent=51 // pred_check_branch
        %714 = sbr.rel (%p712) target = $region56
      $region55: #{hvit_discriminator.3} parent=51 // pred_region
        _
      $region56: #{hvit_discriminator.3} parent=51 // pred_fallthru
        _
    $region52: #{hvit_discriminator.3} parent=5 // pred_fallthru
      _
    %p715 = scmp.le.s32.totalorder 2, %s14
    // Predicated region
    $region57: #{hvit_discriminator.3} parent=5 // pred_check
      %p716 = pneg %p715
    $region58: #{hvit_discriminator.3} parent=5 // pred_check_branch
      %718 = sbr.rel (%p716) target = $region60
    $region59: #{hvit_discriminator.3} parent=5 // pred_region
      %s719 = ssub.s32 %s14, 2
      // Predicated region
      $region61: #{hvit_discriminator.3} parent=59 // pred_check
        %p720 = pneg %p221
      $region62: #{hvit_discriminator.3} parent=59 // pred_check_branch
        %722 = sbr.rel (%p720) target = $region64
      $region63: #{hvit_discriminator.3} parent=59 // pred_region
        %p723 = scmp.lt.s32.totalorder %s20, 1
        %s724 = scalar_select %p723, %s20, 1
        %s725 = smul.addr %s724, 8
        %s726 = smul.addr %s725, 8
        %s727 = scalar_lea.vmem %s8, %s726
      $region64: #{hvit_discriminator.3} parent=59 // pred_fallthru
        _
    $region60: #{hvit_discriminator.3} parent=5 // pred_fallthru
      _
  $region6: #{hvit_discriminator.3} parent=0 // loop_footer
    %s18 = sadd.s32 1, %s14
  $region7: #{hvit_discriminator.3} parent=0 // loop_footer_branch
    %13 = sbr.rel target = $region3
  $region8: #{hvit_discriminator.3} parent=0 // loop_exit
    _

// kernel: hvit_discriminator.4
$region0: #{hvit_discriminator.4}
  #allocation0 [shape = 'u32[]', space=smem, size = 0x4, offset = 0x4, fixed_abs, tag = 'smem constant byte address 0x4 - core index']
  #allocation1 [shape = 'u32[72,128]{1,0:T(1,128)}', space=vmem, size = 0x9000, scoped, tag = 'internal scratch']
  %s0 = inlined_call_operand.vmem [shape: f32[2,64,32], index: 0, kind: input, shape index: {}]
  %s1 = inlined_call_operand.vmem [shape: f32[1,32], index: 1, kind: input, shape index: {}]
  %s2 = inlined_call_operand.vmem [shape: f32[1,32], index: 2, kind: input, shape index: {}]
  %s3 = inlined_call_operand.vmem [shape: bf16[6,32,16], index: 3, kind: input, shape index: {}]
  %s4 = inlined_call_operand.vmem [shape: f32[6,1,16], index: 4, kind: input, shape index: {}]
  %s5 = inlined_call_operand.vmem [shape: bf16[2,16,32], index: 5, kind: input, shape index: {}]
  %s6 = inlined_call_operand.vmem [shape: f32[1,32], index: 6, kind: input, shape index: {}]
  %s7 = inlined_call_operand.vmem [shape: f32[1,32], index: 7, kind: input, shape index: {}]
  %s8 = inlined_call_operand.vmem [shape: f32[1,32], index: 8, kind: input, shape index: {}]
  %s9 = inlined_call_operand.vmem [shape: bf16[32,128], index: 9, kind: input, shape index: {}]
  %s10 = inlined_call_operand.vmem [shape: f32[1,128], index: 10, kind: input, shape index: {}]
  %s11 = inlined_call_operand.vmem [shape: bf16[128,32], index: 11, kind: input, shape index: {}]
  %s12 = inlined_call_operand.vmem [shape: f32[1,32], index: 12, kind: input, shape index: {}]
  %s13 = inlined_call_operand.vmem [shape: f32[64,64], index: 13, kind: input, shape index: {}]
  %s14 = inlined_call_operand.vmem [shape: f32[2,64,32], index: 14, kind: output, shape index: {}]
  %s15 = sld [smem:[#allocation0]]
  $region89: #{hvit_discriminator.4} parent=0
    _
  %s17 = ssub.s32 1, %s15
  %s18 = scalar_select 0, %s17, %s15
  loop: start=0, step=1, limit=4
  $region2: #{hvit_discriminator.4} parent=0 // loop_pre_header
    _
  $region3: #{hvit_discriminator.4} parent=0 // loop_header
    %s20 = sphi 0, %s24
    %p21 = scmp.ge.s32.totalorder %s20, 4
    %s30 = sphi 0, %s32
    %s33 = sphi 0, %s30
    %s34 = sphi 0, %s33
    %s50 = sphi 0, %s34
    %s54 = sphi 0, %s54
    %s56 = sphi 0, %s54
    %s57 = sphi 0, %s56
    %s71 = sphi 0, %s57
    %s75 = sphi 0, %s75
    %s77 = sphi 0, %s75
    %s78 = sphi 0, %s77
    %s92 = sphi 0, %s78
    %s96 = sphi 0, %s96
    %s98 = sphi 0, %s96
    %s99 = sphi 0, %s98
    %s113 = sphi 0, %s99
    %s117 = sphi 0, %s117
    %s119 = sphi 0, %s117
    %s120 = sphi 0, %s119
    %s134 = sphi 0, %s120
    %s138 = sphi 0, %s138
    %s140 = sphi 0, %s138
    %s141 = sphi 0, %s140
    %s155 = sphi 0, %s141
    %s159 = sphi 0, %s159
    %s161 = sphi 0, %s159
    %s162 = sphi 0, %s161
    %s176 = sphi 0, %s162
    %s180 = sphi 0, %s180
    %s182 = sphi 0, %s180
    %s183 = sphi 0, %s182
    %s197 = sphi 0, %s183
    %s201 = sphi 0, %s201
    %s203 = sphi 0, %s201
    %s204 = sphi 0, %s203
    %s218 = sphi 0, %s204
    %s222 = sphi 0, %s222
    %s224 = sphi 0, %s222
    %s225 = sphi 0, %s224
    %s239 = sphi 0, %s225
    %s243 = sphi 0, %s243
    %s245 = sphi 0, %s243
    %s246 = sphi 0, %s245
    %s260 = sphi 0, %s246
    %s264 = sphi 0, %s264
    %s266 = sphi 0, %s264
    %s267 = sphi 0, %s266
    %s281 = sphi 0, %s267
    %s285 = sphi 0, %s285
    %s287 = sphi 0, %s285
    %s288 = sphi 0, %s287
    %s302 = sphi 0, %s288
    %s306 = sphi 0, %s306
    %s308 = sphi 0, %s306
    %s309 = sphi 0, %s308
    %s323 = sphi 0, %s309
    %s329 = sphi 0, %s331
    %s332 = sphi 0, %s329
    %s333 = sphi 0, %s332
    %s349 = sphi 0, %s333
  $region4: #{hvit_discriminator.4} parent=0 // loop_header_branch
    %23 = sbr.rel (%p21) target = $region8
  $region5: #{hvit_discriminator.4} parent=0 // loop_body
    %s25 = ssub.s32 %s20, 1
    %s26 = ssub.s32 %s20, 2
    %s27 = sadd.s32 %s20, 1
    %s28 = ssub.s32 %s20, %s27
    %p29 = scmp.eq.s32.totalorder %s28, 0
    %s31 = sadd.s32 %s30, 1
    %s32 = scalar_select %p29, %s30, %s31
    %p35 = pneg %p29
    %p36 = scmp.eq.s32.totalorder %s20, 1
    %p37 = por %p35, %p36
    %p38 = scmp.ne.s32.totalorder %s30, %s33
    %p39 = scmp.eq.s32.totalorder %s20, 0
    %p40 = por %p38, %p39
    %p41 = scmp.ne.s32.totalorder %s30, %s33
    %p42 = scmp.eq.s32.totalorder %s25, 1
    %p43 = por %p41, %p42
    %p44 = scmp.ne.s32.totalorder %s33, %s34
    %p45 = scmp.eq.s32.totalorder %s25, 0
    %p46 = por %p44, %p45
    %p47 = scmp.ne.s32.totalorder %s33, %s34
    %p48 = scmp.eq.s32.totalorder %s26, 1
    %p49 = por %p47, %p48
    %p51 = scmp.ne.s32.totalorder %s34, %s50
    %p52 = scmp.eq.s32.totalorder %s26, 0
    %p53 = por %p51, %p52
    %s55 = sadd.s32 %s54, 1
    %p58 = scmp.eq.s32.totalorder %s20, 1
    %p59 = scmp.ne.s32.totalorder %s54, %s56
    %p60 = scmp.eq.s32.totalorder %s20, 0
    %p61 = por %p59, %p60
    %p62 = scmp.ne.s32.totalorder %s54, %s56
    %p63 = scmp.eq.s32.totalorder %s25, 1
    %p64 = por %p62, %p63
    %p65 = scmp.ne.s32.totalorder %s56, %s57
    %p66 = scmp.eq.s32.totalorder %s25, 0
    %p67 = por %p65, %p66
    %p68 = scmp.ne.s32.totalorder %s56, %s57
    %p69 = scmp.eq.s32.totalorder %s26, 1
    %p70 = por %p68, %p69
    %p72 = scmp.ne.s32.totalorder %s57, %s71
    %p73 = scmp.eq.s32.totalorder %s26, 0
    %p74 = por %p72, %p73
    %s76 = sadd.s32 %s75, 1
    %p79 = scmp.eq.s32.totalorder %s20, 1
    %p80 = scmp.ne.s32.totalorder %s75, %s77
    %p81 = scmp.eq.s32.totalorder %s20, 0
    %p82 = por %p80, %p81
    %p83 = scmp.ne.s32.totalorder %s75, %s77
    %p84 = scmp.eq.s32.totalorder %s25, 1
    %p85 = por %p83, %p84
    %p86 = scmp.ne.s32.totalorder %s77, %s78
    %p87 = scmp.eq.s32.totalorder %s25, 0
    %p88 = por %p86, %p87
    %p89 = scmp.ne.s32.totalorder %s77, %s78
    %p90 = scmp.eq.s32.totalorder %s26, 1
    %p91 = por %p89, %p90
    %p93 = scmp.ne.s32.totalorder %s78, %s92
    %p94 = scmp.eq.s32.totalorder %s26, 0
    %p95 = por %p93, %p94
    %s97 = sadd.s32 %s96, 1
    %p100 = scmp.eq.s32.totalorder %s20, 1
    %p101 = scmp.ne.s32.totalorder %s96, %s98
    %p102 = scmp.eq.s32.totalorder %s20, 0
    %p103 = por %p101, %p102
    %p104 = scmp.ne.s32.totalorder %s96, %s98
    %p105 = scmp.eq.s32.totalorder %s25, 1
    %p106 = por %p104, %p105
    %p107 = scmp.ne.s32.totalorder %s98, %s99
    %p108 = scmp.eq.s32.totalorder %s25, 0
    %p109 = por %p107, %p108
    %p110 = scmp.ne.s32.totalorder %s98, %s99
    %p111 = scmp.eq.s32.totalorder %s26, 1
    %p112 = por %p110, %p111
    %p114 = scmp.ne.s32.totalorder %s99, %s113
    %p115 = scmp.eq.s32.totalorder %s26, 0
    %p116 = por %p114, %p115
    %s118 = sadd.s32 %s117, 1
    %p121 = scmp.eq.s32.totalorder %s20, 1
    %p122 = scmp.ne.s32.totalorder %s117, %s119
    %p123 = scmp.eq.s32.totalorder %s20, 0
    %p124 = por %p122, %p123
    %p125 = scmp.ne.s32.totalorder %s117, %s119
    %p126 = scmp.eq.s32.totalorder %s25, 1
    %p127 = por %p125, %p126
    %p128 = scmp.ne.s32.totalorder %s119, %s120
    %p129 = scmp.eq.s32.totalorder %s25, 0
    %p130 = por %p128, %p129
    %p131 = scmp.ne.s32.totalorder %s119, %s120
    %p132 = scmp.eq.s32.totalorder %s26, 1
    %p133 = por %p131, %p132
    %p135 = scmp.ne.s32.totalorder %s120, %s134
    %p136 = scmp.eq.s32.totalorder %s26, 0
    %p137 = por %p135, %p136
    %s139 = sadd.s32 %s138, 1
    %p142 = scmp.eq.s32.totalorder %s20, 1
    %p143 = scmp.ne.s32.totalorder %s138, %s140
    %p144 = scmp.eq.s32.totalorder %s20, 0
    %p145 = por %p143, %p144
    %p146 = scmp.ne.s32.totalorder %s138, %s140
    %p147 = scmp.eq.s32.totalorder %s25, 1
    %p148 = por %p146, %p147
    %p149 = scmp.ne.s32.totalorder %s140, %s141
    %p150 = scmp.eq.s32.totalorder %s25, 0
    %p151 = por %p149, %p150
    %p152 = scmp.ne.s32.totalorder %s140, %s141
    %p153 = scmp.eq.s32.totalorder %s26, 1
    %p154 = por %p152, %p153
    %p156 = scmp.ne.s32.totalorder %s141, %s155
    %p157 = scmp.eq.s32.totalorder %s26, 0
    %p158 = por %p156, %p157
    %s160 = sadd.s32 %s159, 1
    %p163 = scmp.eq.s32.totalorder %s20, 1
    %p164 = scmp.ne.s32.totalorder %s159, %s161
    %p165 = scmp.eq.s32.totalorder %s20, 0
    %p166 = por %p164, %p165
    %p167 = scmp.ne.s32.totalorder %s159, %s161
    %p168 = scmp.eq.s32.totalorder %s25, 1
    %p169 = por %p167, %p168
    %p170 = scmp.ne.s32.totalorder %s161, %s162
    %p171 = scmp.eq.s32.totalorder %s25, 0
    %p172 = por %p170, %p171
    %p173 = scmp.ne.s32.totalorder %s161, %s162
    %p174 = scmp.eq.s32.totalorder %s26, 1
    %p175 = por %p173, %p174
    %p177 = scmp.ne.s32.totalorder %s162, %s176
    %p178 = scmp.eq.s32.totalorder %s26, 0
    %p179 = por %p177, %p178
    %s181 = sadd.s32 %s180, 1
    %p184 = scmp.eq.s32.totalorder %s20, 1
    %p185 = scmp.ne.s32.totalorder %s180, %s182
    %p186 = scmp.eq.s32.totalorder %s20, 0
    %p187 = por %p185, %p186
    %p188 = scmp.ne.s32.totalorder %s180, %s182
    %p189 = scmp.eq.s32.totalorder %s25, 1
    %p190 = por %p188, %p189
    %p191 = scmp.ne.s32.totalorder %s182, %s183
    %p192 = scmp.eq.s32.totalorder %s25, 0
    %p193 = por %p191, %p192
    %p194 = scmp.ne.s32.totalorder %s182, %s183
    %p195 = scmp.eq.s32.totalorder %s26, 1
    %p196 = por %p194, %p195
    %p198 = scmp.ne.s32.totalorder %s183, %s197
    %p199 = scmp.eq.s32.totalorder %s26, 0
    %p200 = por %p198, %p199
    %s202 = sadd.s32 %s201, 1
    %p205 = scmp.eq.s32.totalorder %s20, 1
    %p206 = scmp.ne.s32.totalorder %s201, %s203
    %p207 = scmp.eq.s32.totalorder %s20, 0
    %p208 = por %p206, %p207
    %p209 = scmp.ne.s32.totalorder %s201, %s203
    %p210 = scmp.eq.s32.totalorder %s25, 1
    %p211 = por %p209, %p210
    %p212 = scmp.ne.s32.totalorder %s203, %s204
    %p213 = scmp.eq.s32.totalorder %s25, 0
    %p214 = por %p212, %p213
    %p215 = scmp.ne.s32.totalorder %s203, %s204
    %p216 = scmp.eq.s32.totalorder %s26, 1
    %p217 = por %p215, %p216
    %p219 = scmp.ne.s32.totalorder %s204, %s218
    %p220 = scmp.eq.s32.totalorder %s26, 0
    %p221 = por %p219, %p220
    %s223 = sadd.s32 %s222, 1
    %p226 = scmp.eq.s32.totalorder %s20, 1
    %p227 = scmp.ne.s32.totalorder %s222, %s224
    %p228 = scmp.eq.s32.totalorder %s20, 0
    %p229 = por %p227, %p228
    %p230 = scmp.ne.s32.totalorder %s222, %s224
    %p231 = scmp.eq.s32.totalorder %s25, 1
    %p232 = por %p230, %p231
    %p233 = scmp.ne.s32.totalorder %s224, %s225
    %p234 = scmp.eq.s32.totalorder %s25, 0
    %p235 = por %p233, %p234
    %p236 = scmp.ne.s32.totalorder %s224, %s225
    %p237 = scmp.eq.s32.totalorder %s26, 1
    %p238 = por %p236, %p237
    %p240 = scmp.ne.s32.totalorder %s225, %s239
    %p241 = scmp.eq.s32.totalorder %s26, 0
    %p242 = por %p240, %p241
    %s244 = sadd.s32 %s243, 1
    %p247 = scmp.eq.s32.totalorder %s20, 1
    %p248 = scmp.ne.s32.totalorder %s243, %s245
    %p249 = scmp.eq.s32.totalorder %s20, 0
    %p250 = por %p248, %p249
    %p251 = scmp.ne.s32.totalorder %s243, %s245
    %p252 = scmp.eq.s32.totalorder %s25, 1
    %p253 = por %p251, %p252
    %p254 = scmp.ne.s32.totalorder %s245, %s246
    %p255 = scmp.eq.s32.totalorder %s25, 0
    %p256 = por %p254, %p255
    %p257 = scmp.ne.s32.totalorder %s245, %s246
    %p258 = scmp.eq.s32.totalorder %s26, 1
    %p259 = por %p257, %p258
    %p261 = scmp.ne.s32.totalorder %s246, %s260
    %p262 = scmp.eq.s32.totalorder %s26, 0
    %p263 = por %p261, %p262
    %s265 = sadd.s32 %s264, 1
    %p268 = scmp.eq.s32.totalorder %s20, 1
    %p269 = scmp.ne.s32.totalorder %s264, %s266
    %p270 = scmp.eq.s32.totalorder %s20, 0
    %p271 = por %p269, %p270
    %p272 = scmp.ne.s32.totalorder %s264, %s266
    %p273 = scmp.eq.s32.totalorder %s25, 1
    %p274 = por %p272, %p273
    %p275 = scmp.ne.s32.totalorder %s266, %s267
    %p276 = scmp.eq.s32.totalorder %s25, 0
    %p277 = por %p275, %p276
    %p278 = scmp.ne.s32.totalorder %s266, %s267
    %p279 = scmp.eq.s32.totalorder %s26, 1
    %p280 = por %p278, %p279
    %p282 = scmp.ne.s32.totalorder %s267, %s281
    %p283 = scmp.eq.s32.totalorder %s26, 0
    %p284 = por %p282, %p283
    %s286 = sadd.s32 %s285, 1
    %p289 = scmp.eq.s32.totalorder %s20, 1
    %p290 = scmp.ne.s32.totalorder %s285, %s287
    %p291 = scmp.eq.s32.totalorder %s20, 0
    %p292 = por %p290, %p291
    %p293 = scmp.ne.s32.totalorder %s285, %s287
    %p294 = scmp.eq.s32.totalorder %s25, 1
    %p295 = por %p293, %p294
    %p296 = scmp.ne.s32.totalorder %s287, %s288
    %p297 = scmp.eq.s32.totalorder %s25, 0
    %p298 = por %p296, %p297
    %p299 = scmp.ne.s32.totalorder %s287, %s288
    %p300 = scmp.eq.s32.totalorder %s26, 1
    %p301 = por %p299, %p300
    %p303 = scmp.ne.s32.totalorder %s288, %s302
    %p304 = scmp.eq.s32.totalorder %s26, 0
    %p305 = por %p303, %p304
    %s307 = sadd.s32 %s306, 1
    %p310 = scmp.eq.s32.totalorder %s20, 1
    %p311 = scmp.ne.s32.totalorder %s306, %s308
    %p312 = scmp.eq.s32.totalorder %s20, 0
    %p313 = por %p311, %p312
    %p314 = scmp.ne.s32.totalorder %s306, %s308
    %p315 = scmp.eq.s32.totalorder %s25, 1
    %p316 = por %p314, %p315
    %p317 = scmp.ne.s32.totalorder %s308, %s309
    %p318 = scmp.eq.s32.totalorder %s25, 0
    %p319 = por %p317, %p318
    %p320 = scmp.ne.s32.totalorder %s308, %s309
    %p321 = scmp.eq.s32.totalorder %s26, 1
    %p322 = por %p320, %p321
    %p324 = scmp.ne.s32.totalorder %s309, %s323
    %p325 = scmp.eq.s32.totalorder %s26, 0
    %p326 = por %p324, %p325
    %s327 = ssub.s32 %s20, %s27
    %p328 = scmp.eq.s32.totalorder %s327, 0
    %s330 = sadd.s32 %s329, 1
    %s331 = scalar_select %p328, %s329, %s330
    %p334 = pneg %p328
    %p335 = scmp.eq.s32.totalorder %s20, 1
    %p336 = por %p334, %p335
    %p337 = scmp.ne.s32.totalorder %s329, %s332
    %p338 = scmp.eq.s32.totalorder %s20, 0
    %p339 = por %p337, %p338
    %p340 = scmp.ne.s32.totalorder %s329, %s332
    %p341 = scmp.eq.s32.totalorder %s25, 1
    %p342 = por %p340, %p341
    %p343 = scmp.ne.s32.totalorder %s332, %s333
    %p344 = scmp.eq.s32.totalorder %s25, 0
    %p345 = por %p343, %p344
    %p346 = scmp.ne.s32.totalorder %s332, %s333
    %p347 = scmp.eq.s32.totalorder %s26, 1
    %p348 = por %p346, %p347
    %p350 = scmp.ne.s32.totalorder %s333, %s349
    %p351 = scmp.eq.s32.totalorder %s26, 0
    %p352 = por %p350, %p351
    %p353 = scmp.le.s32.totalorder 1, %s20
    %p354 = scmp.lt.s32.totalorder %s20, 3
    %p355 = pnand %p353, %p354
    %p356 = pneg %p355
    // Predicated region
    $region9: #{hvit_discriminator.4} parent=5 // pred_check
      _
    $region10: #{hvit_discriminator.4} parent=5 // pred_check_branch
      %358 = sbr.rel (%p355) target = $region12
    $region11: #{hvit_discriminator.4} parent=5 // pred_region
      %s359 = ssub.s32 %s20, 1
      // Predicated region
      $region13: #{hvit_discriminator.4} parent=11 // pred_check
        %p360 = pneg %p67
      $region14: #{hvit_discriminator.4} parent=11 // pred_check_branch
        %362 = sbr.rel (%p360) target = $region16
      $region15: #{hvit_discriminator.4} parent=11 // pred_region
        _
      $region16: #{hvit_discriminator.4} parent=11 // pred_fallthru
        _
      // Predicated region
      $region17: #{hvit_discriminator.4} parent=11 // pred_check
        %p363 = pneg %p88
      $region18: #{hvit_discriminator.4} parent=11 // pred_check_branch
        %365 = sbr.rel (%p363) target = $region20
      $region19: #{hvit_discriminator.4} parent=11 // pred_region
        _
      $region20: #{hvit_discriminator.4} parent=11 // pred_fallthru
        _
      // Predicated region
      $region21: #{hvit_discriminator.4} parent=11 // pred_check
        %p366 = pneg %p109
      $region22: #{hvit_discriminator.4} parent=11 // pred_check_branch
        %368 = sbr.rel (%p366) target = $region24
      $region23: #{hvit_discriminator.4} parent=11 // pred_region
        _
      $region24: #{hvit_discriminator.4} parent=11 // pred_fallthru
        _
      // Predicated region
      $region25: #{hvit_discriminator.4} parent=11 // pred_check
        %p369 = pneg %p130
      $region26: #{hvit_discriminator.4} parent=11 // pred_check_branch
        %371 = sbr.rel (%p369) target = $region28
      $region27: #{hvit_discriminator.4} parent=11 // pred_region
        _
      $region28: #{hvit_discriminator.4} parent=11 // pred_fallthru
        _
      // Predicated region
      $region29: #{hvit_discriminator.4} parent=11 // pred_check
        %p372 = pneg %p151
      $region30: #{hvit_discriminator.4} parent=11 // pred_check_branch
        %374 = sbr.rel (%p372) target = $region32
      $region31: #{hvit_discriminator.4} parent=11 // pred_region
        _
      $region32: #{hvit_discriminator.4} parent=11 // pred_fallthru
        _
      // Predicated region
      $region33: #{hvit_discriminator.4} parent=11 // pred_check
        %p375 = pneg %p172
      $region34: #{hvit_discriminator.4} parent=11 // pred_check_branch
        %377 = sbr.rel (%p375) target = $region36
      $region35: #{hvit_discriminator.4} parent=11 // pred_region
        _
      $region36: #{hvit_discriminator.4} parent=11 // pred_fallthru
        _
      // Predicated region
      $region37: #{hvit_discriminator.4} parent=11 // pred_check
        %p378 = pneg %p193
      $region38: #{hvit_discriminator.4} parent=11 // pred_check_branch
        %380 = sbr.rel (%p378) target = $region40
      $region39: #{hvit_discriminator.4} parent=11 // pred_region
        _
      $region40: #{hvit_discriminator.4} parent=11 // pred_fallthru
        _
      // Predicated region
      $region41: #{hvit_discriminator.4} parent=11 // pred_check
        %p381 = pneg %p214
      $region42: #{hvit_discriminator.4} parent=11 // pred_check_branch
        %383 = sbr.rel (%p381) target = $region44
      $region43: #{hvit_discriminator.4} parent=11 // pred_region
        _
      $region44: #{hvit_discriminator.4} parent=11 // pred_fallthru
        _
      // Predicated region
      $region45: #{hvit_discriminator.4} parent=11 // pred_check
        %p384 = pneg %p235
      $region46: #{hvit_discriminator.4} parent=11 // pred_check_branch
        %386 = sbr.rel (%p384) target = $region48
      $region47: #{hvit_discriminator.4} parent=11 // pred_region
        _
      $region48: #{hvit_discriminator.4} parent=11 // pred_fallthru
        _
      // Predicated region
      $region49: #{hvit_discriminator.4} parent=11 // pred_check
        %p387 = pneg %p256
      $region50: #{hvit_discriminator.4} parent=11 // pred_check_branch
        %389 = sbr.rel (%p387) target = $region52
      $region51: #{hvit_discriminator.4} parent=11 // pred_region
        _
      $region52: #{hvit_discriminator.4} parent=11 // pred_fallthru
        _
      // Predicated region
      $region53: #{hvit_discriminator.4} parent=11 // pred_check
        %p390 = pneg %p277
      $region54: #{hvit_discriminator.4} parent=11 // pred_check_branch
        %392 = sbr.rel (%p390) target = $region56
      $region55: #{hvit_discriminator.4} parent=11 // pred_region
        _
      $region56: #{hvit_discriminator.4} parent=11 // pred_fallthru
        _
      // Predicated region
      $region57: #{hvit_discriminator.4} parent=11 // pred_check
        %p393 = pneg %p298
      $region58: #{hvit_discriminator.4} parent=11 // pred_check_branch
        %395 = sbr.rel (%p393) target = $region60
      $region59: #{hvit_discriminator.4} parent=11 // pred_region
        _
      $region60: #{hvit_discriminator.4} parent=11 // pred_fallthru
        _
      // Predicated region
      $region61: #{hvit_discriminator.4} parent=11 // pred_check
        %p396 = pneg %p319
      $region62: #{hvit_discriminator.4} parent=11 // pred_check_branch
        %398 = sbr.rel (%p396) target = $region64
      $region63: #{hvit_discriminator.4} parent=11 // pred_region
        _
      $region64: #{hvit_discriminator.4} parent=11 // pred_fallthru
        _
    $region12: #{hvit_discriminator.4} parent=5 // pred_fallthru
      _
    %p399 = scmp.lt.s32.totalorder %s20, 2
    // Predicated region
    $region65: #{hvit_discriminator.4} parent=5 // pred_check
      %p400 = pneg %p399
    $region66: #{hvit_discriminator.4} parent=5 // pred_check_branch
      %402 = sbr.rel (%p400) target = $region68
    $region67: #{hvit_discriminator.4} parent=5 // pred_region
      // Predicated region
      $region69: #{hvit_discriminator.4} parent=67 // pred_check
        %p403 = pneg %p40
      $region70: #{hvit_discriminator.4} parent=67 // pred_check_branch
        %405 = sbr.rel (%p403) target = $region72
      $region71: #{hvit_discriminator.4} parent=67 // pred_region
        %p406 = scmp.lt.s32.totalorder %s20, 1
        %s407 = scalar_select %p406, %s20, 1
        %s408 = smul.addr %s407, 8
        %s409 = smul.addr %s408, 8
        %s410 = scalar_lea.vmem %s0, %s409
      $region72: #{hvit_discriminator.4} parent=67 // pred_fallthru
        _
    $region68: #{hvit_discriminator.4} parent=5 // pred_fallthru
      _
    %p411 = scmp.le.s32.totalorder 1, %s20
    %p412 = scmp.lt.s32.totalorder %s20, 3
    %p413 = pnand %p411, %p412
    %p414 = pneg %p413
    // Predicated region
    $region73: #{hvit_discriminator.4} parent=5 // pred_check
      _
    $region74: #{hvit_discriminator.4} parent=5 // pred_check_branch
      %416 = sbr.rel (%p413) target = $region76
    $region75: #{hvit_discriminator.4} parent=5 // pred_region
      %s417 = ssub.s32 %s20, 1
      %p418 = scmp.lt.s32.totalorder %s25, 1
      %s419 = scalar_select %p418, %s25, 1
      %s420 = smul.addr %s419, 8
      %s421 = smul.addr %s420, 8
      %s422 = scalar_lea.vmem %s0, %s421
      %p423 = pneg %p46
      %p424 = pneg %p43
      %p425 = pneg %p67
      %p426 = pneg %p64
      %p427 = pneg %p88
      %p428 = pneg %p85
      %p429 = pneg %p109
      %p430 = pneg %p106
      %p431 = pneg %p130
      %p432 = pneg %p127
      %p433 = pneg %p151
      %p434 = pneg %p148
      %p435 = pneg %p172
      %p436 = pneg %p169
      %p437 = pneg %p193
      %p438 = pneg %p190
      %p439 = pneg %p214
      %p440 = pneg %p211
      %p441 = pneg %p235
      %p442 = pneg %p232
      %p443 = pneg %p256
      %p444 = pneg %p253
      %p445 = pneg %p277
      %p446 = pneg %p274
      %p447 = pneg %p298
      %p448 = pneg %p295
      %p449 = pneg %p319
      %p450 = pneg %p316
      %p451 = pneg %p345
      %p452 = pneg %p342
      %p453 = scmp.lt.s32.totalorder %s25, 1
      %s454 = scalar_select %p453, %s25, 1
      %s455 = smul.addr %s454, 8
      %s456 = smul.addr %s455, 8
      %s457 = scalar_lea.vmem %s14, %s456
      %p458 = scmp.lt.s32.totalorder %s25, 1
      %s459 = scalar_select %p458, %s25, 1
      %s460 = smul.addr %s459, 8
      %s461 = smul.addr %s460, 8
      %s462 = scalar_lea.vmem %s0, %s461
      %p463 = scmp.lt.s32.totalorder %s25, 1
      %s464 = scalar_select %p463, %s25, 1
      %s465 = smul.addr %s464, 8
      %s466 = smul.addr %s465, 8
      %s467 = scalar_lea.vmem %s14, %s466
      %v469 = vld [vmem:[%s462] sm:$0xff]
      %v470 = vld [vmem:[%s462 + $0x8] sm:$0xff]
      %v471 = vld [vmem:[%s462 + $0x10] sm:$0xff]
      %v472 = vld [vmem:[%s462 + $0x18] sm:$0xff]
      %v473 = vld [vmem:[%s462 + $0x20] sm:$0xff]
      %v474 = vld [vmem:[%s462 + $0x28] sm:$0xff]
      %v475 = vld [vmem:[%s462 + $0x30] sm:$0xff]
      %v476 = vld [vmem:[%s462 + $0x38] sm:$0xff]
      %v477 = vld [vmem:[%s1] sm:$0x1]
      %v478 = vld [vmem:[%s2] sm:$0x1]
      %vm479 = vcmask 261120
      %v480 = vsel %vm479, %v469, 0.0
      %481 = vadd.xlane.f32.xlu0 %v480
      %v482 = vpop.xlane.xlu0 %481
      %v483 = vsel %vm479, %v470, 0.0
      %484 = vadd.xlane.f32.xlu0 %v483
      %v485 = vpop.xlane.xlu0 %484
      %v486 = vsel %vm479, %v471, 0.0
      %487 = vadd.xlane.f32.xlu0 %v486
      %v488 = vpop.xlane.xlu0 %487
      %v489 = vsel %vm479, %v472, 0.0
      %490 = vadd.xlane.f32.xlu0 %v489
      %v491 = vpop.xlane.xlu0 %490
      %v492 = vsel %vm479, %v473, 0.0
      %493 = vadd.xlane.f32.xlu0 %v492
      %v494 = vpop.xlane.xlu0 %493
      %v495 = vsel %vm479, %v474, 0.0
      %496 = vadd.xlane.f32.xlu0 %v495
      %v497 = vpop.xlane.xlu0 %496
      %v498 = vsel %vm479, %v475, 0.0
      %499 = vadd.xlane.f32.xlu0 %v498
      %v500 = vpop.xlane.xlu0 %499
      %v501 = vsel %vm479, %v476, 0.0
      %502 = vadd.xlane.f32.xlu0 %v501
      %v503 = vpop.xlane.xlu0 %502
      %v504 = vrcp.pop 32.0
      %v505 = vmul.f32 32.0, %v504
      %v506 = vsub.f32 1.0, %v505
      %v507 = vmul.f32 %v504, %v506
      %v508 = vadd.f32 %v504, %v507
      %vm509 = vweird.f32 %v504
      %v510 = vsel %vm509, %v504, %v508
      %v511 = vmul.f32 %v482, %v510
      %v512 = vmul.f32 %v485, %v510
      %v513 = vmul.f32 %v488, %v510
      %v514 = vmul.f32 %v491, %v510
      %v515 = vmul.f32 %v494, %v510
      %v516 = vmul.f32 %v497, %v510
      %v517 = vmul.f32 %v500, %v510
      %v518 = vmul.f32 %v503, %v510
      %v519 = vsub.f32 %v469, %v511
      %v520 = vsub.f32 %v470, %v512
      %v521 = vsub.f32 %v471, %v513
      %v522 = vsub.f32 %v472, %v514
      %v523 = vsub.f32 %v473, %v515
      %v524 = vsub.f32 %v474, %v516
      %v525 = vsub.f32 %v475, %v517
      %v526 = vsub.f32 %v476, %v518
      %v527 = vmul.f32 %v519, %v519
      %v528 = vmul.f32 %v520, %v520
      %v529 = vmul.f32 %v521, %v521
      %v530 = vmul.f32 %v522, %v522
      %v531 = vmul.f32 %v523, %v523
      %v532 = vmul.f32 %v524, %v524
      %v533 = vmul.f32 %v525, %v525
      %v534 = vmul.f32 %v526, %v526
      %v535 = vsel %vm479, %v527, 0.0
      %536 = vadd.xlane.f32.xlu0 %v535
      %v537 = vpop.xlane.xlu0 %536
      %v538 = vsel %vm479, %v528, 0.0
      %539 = vadd.xlane.f32.xlu0 %v538
      %v540 = vpop.xlane.xlu0 %539
      %v541 = vsel %vm479, %v529, 0.0
      %542 = vadd.xlane.f32.xlu0 %v541
      %v543 = vpop.xlane.xlu0 %542
      %v544 = vsel %vm479, %v530, 0.0
      %545 = vadd.xlane.f32.xlu0 %v544
      %v546 = vpop.xlane.xlu0 %545
      %v547 = vsel %vm479, %v531, 0.0
      %548 = vadd.xlane.f32.xlu0 %v547
      %v549 = vpop.xlane.xlu0 %548
      %v550 = vsel %vm479, %v532, 0.0
      %551 = vadd.xlane.f32.xlu0 %v550
      %v552 = vpop.xlane.xlu0 %551
      %v553 = vsel %vm479, %v533, 0.0
      %554 = vadd.xlane.f32.xlu0 %v553
      %v555 = vpop.xlane.xlu0 %554
      %v556 = vsel %vm479, %v534, 0.0
      %557 = vadd.xlane.f32.xlu0 %v556
      %v558 = vpop.xlane.xlu0 %557
      %v559 = vmul.f32 %v537, %v510
      %v560 = vmul.f32 %v540, %v510
      %v561 = vmul.f32 %v543, %v510
      %v562 = vmul.f32 %v546, %v510
      %v563 = vmul.f32 %v549, %v510
      %v564 = vmul.f32 %v552, %v510
      %v565 = vmul.f32 %v555, %v510
      %v566 = vmul.f32 %v558, %v510
      %v567 = vadd.f32 %v559, 1e-05
      %v568 = vadd.f32 %v560, 1e-05
      %v569 = vadd.f32 %v561, 1e-05
      %v570 = vadd.f32 %v562, 1e-05
      %v571 = vadd.f32 %v563, 1e-05
      %v572 = vadd.f32 %v564, 1e-05
      %v573 = vadd.f32 %v565, 1e-05
      %v574 = vadd.f32 %v566, 1e-05
      %v575 = vrsqrt.pop %v567
      %v576 = vmul.f32 %v575, %v567
      %v577 = vmul.f32 %v576, %v575
      %v578 = vmul.f32 0.5, %v577
      %v579 = vsub.f32 1.5, %v578
      %v580 = vmul.f32 %v575, %v579
      %vm581 = vweird.f32 %v567
      %vm582 = vweird.f32 %v575
      %vm583 = vmor %vm581, %vm582
      %v584 = vsel %vm583, %v575, %v580
      %v585 = vrsqrt.pop %v568
      %v586 = vmul.f32 %v585, %v568
      %v587 = vmul.f32 %v586, %v585
      %v588 = vmul.f32 0.5, %v587
      %v589 = vsub.f32 1.5, %v588
      %v590 = vmul.f32 %v585, %v589
      %vm591 = vweird.f32 %v568
      %vm592 = vweird.f32 %v585
      %vm593 = vmor %vm591, %vm592
      %v594 = vsel %vm593, %v585, %v590
      %v595 = vrsqrt.pop %v569
      %v596 = vmul.f32 %v595, %v569
      %v597 = vmul.f32 %v596, %v595
      %v598 = vmul.f32 0.5, %v597
      %v599 = vsub.f32 1.5, %v598
      %v600 = vmul.f32 %v595, %v599
      %vm601 = vweird.f32 %v569
      %vm602 = vweird.f32 %v595
      %vm603 = vmor %vm601, %vm602
      %v604 = vsel %vm603, %v595, %v600
      %v605 = vrsqrt.pop %v570
      %v606 = vmul.f32 %v605, %v570
      %v607 = vmul.f32 %v606, %v605
      %v608 = vmul.f32 0.5, %v607
      %v609 = vsub.f32 1.5, %v608
      %v610 = vmul.f32 %v605, %v609
      %vm611 = vweird.f32 %v570
      %vm612 = vweird.f32 %v605
      %vm613 = vmor %vm611, %vm612
      %v614 = vsel %vm613, %v605, %v610
      %v615 = vrsqrt.pop %v571
      %v616 = vmul.f32 %v615, %v571
      %v617 = vmul.f32 %v616, %v615
      %v618 = vmul.f32 0.5, %v617
      %v619 = vsub.f32 1.5, %v618
      %v620 = vmul.f32 %v615, %v619
      %vm621 = vweird.f32 %v571
      %vm622 = vweird.f32 %v615
      %vm623 = vmor %vm621, %vm622
      %v624 = vsel %vm623, %v615, %v620
      %v625 = vrsqrt.pop %v572
      %v626 = vmul.f32 %v625, %v572
      %v627 = vmul.f32 %v626, %v625
      %v628 = vmul.f32 0.5, %v627
      %v629 = vsub.f32 1.5, %v628
      %v630 = vmul.f32 %v625, %v629
      %vm631 = vweird.f32 %v572
      %vm632 = vweird.f32 %v625
      %vm633 = vmor %vm631, %vm632
      %v634 = vsel %vm633, %v625, %v630
      %v635 = vrsqrt.pop %v573
      %v636 = vmul.f32 %v635, %v573
      %v637 = vmul.f32 %v636, %v635
      %v638 = vmul.f32 0.5, %v637
      %v639 = vsub.f32 1.5, %v638
      %v640 = vmul.f32 %v635, %v639
      %vm641 = vweird.f32 %v573
      %vm642 = vweird.f32 %v635
      %vm643 = vmor %vm641, %vm642
      %v644 = vsel %vm643, %v635, %v640
      %v645 = vrsqrt.pop %v574
      %v646 = vmul.f32 %v645, %v574
      %v647 = vmul.f32 %v646, %v645
      %v648 = vmul.f32 0.5, %v647
      %v649 = vsub.f32 1.5, %v648
      %v650 = vmul.f32 %v645, %v649
      %vm651 = vweird.f32 %v574
      %vm652 = vweird.f32 %v645
      %vm653 = vmor %vm651, %vm652
      %v654 = vsel %vm653, %v645, %v650
      %v655 = vmul.f32 %v519, %v584
      %v656 = vmul.f32 %v520, %v594
      %v657 = vmul.f32 %v521, %v604
      %v658 = vmul.f32 %v522, %v614
      %v659 = vmul.f32 %v523, %v624
      %v660 = vmul.f32 %v524, %v634
      %v661 = vmul.f32 %v525, %v644
      %v662 = vmul.f32 %v526, %v654
      %v664 = vperm.slane %v477, 0
      %v666 = vmul.f32 %v655, %v664
      %v667 = vmul.f32 %v656, %v664
      %v668 = vmul.f32 %v657, %v664
      %v669 = vmul.f32 %v658, %v664
      %v670 = vmul.f32 %v659, %v664
      %v671 = vmul.f32 %v660, %v664
      %v672 = vmul.f32 %v661, %v664
      %v673 = vmul.f32 %v662, %v664
      %v675 = vperm.slane %v478, 0
      %v677 = vadd.f32 %v666, %v675
      %v678 = vadd.f32 %v667, %v675
      %v679 = vadd.f32 %v668, %v675
      %v680 = vadd.f32 %v669, %v675
      %v681 = vadd.f32 %v670, %v675
      %v682 = vadd.f32 %v671, %v675
      %v683 = vadd.f32 %v672, %v675
      %v684 = vadd.f32 %v673, %v675
      %v685 = vpack.c.bf16 %v678, %v677
      %v686 = vpack.c.bf16 %v680, %v679
      %v687 = vpack.c.bf16 %v682, %v681
      %v688 = vpack.c.bf16 %v684, %v683
      %v689 = vld [vmem:[%s3] sm:$0xf]
      %v690 = vld [vmem:[%s3 + $0x4] sm:$0xf]
      %v691 = vld [vmem:[%s3 + $0x8] sm:$0xf]
      %v692 = vld [vmem:[%s3 + $0xc] sm:$0xf]
      %v693 = vld [vmem:[%s4] sm:$0x1]
      %v695 = vperm.slane %v693, 0
      %v701 = vunpack.c.l.b16 %v689
      %v702 = vunpack.c.l.b16 %v690
      %v703 = vunpack.c.l.b16 %v691
      %v704 = vunpack.c.l.b16 %v692
      %v705 = vpack.c.b16 %v702, %v701
      %v706 = vpack.c.b16 %v704, %v703
      %v710 = vsel %vm479, %v685, 0
      %v713 = vsel %vm479, %v686, 0
      %v716 = vsel %vm479, %v687, 0
      %v719 = vsel %vm479, %v688, 0
      %721 = vmatpush.bf16.msra.mxu0 0
      %722 = vmatpush.bf16.msra.mxu0 0
      %723 = vmatpush.bf16.msra.mxu0 0
      %724 = vmatpush.bf16.msra.mxu0 0
      %725 = vmatpush.bf16.msra.mxu0 0
      %726 = vmatpush.bf16.msra.mxu0 0
      %727 = vmatpush.bf16.msra.mxu0 %v706
      %728 = vmatpush.bf16.msra.mxu0 %v705
      %729 = vmatmul.bf16.gmra.mxu0 %v710
      %v730 = vpop.f32.mrf.mxu0
      %v731 = vadd.f32 %v695, %v730
      %v732 = vpop.f32.mrf.mxu0
      %v733 = vadd.f32 %v695, %v732
      %734 = vmatmul.bf16.gmra.mxu0 %v713
      %v735 = vpop.f32.mrf.mxu0
      %v736 = vadd.f32 %v695, %v735
      %v737 = vpop.f32.mrf.mxu0
      %v738 = vadd.f32 %v695, %v737
      %739 = vmatmul.bf16.gmra.mxu0 %v716
      %v740 = vpop.f32.mrf.mxu0
      %v741 = vadd.f32 %v695, %v740
      %v742 = vpop.f32.mrf.mxu0
      %v743 = vadd.f32 %v695, %v742
      %744 = vmatmul.bf16.gmra.mxu0 %v719
      %v745 = vpop.f32.mrf.mxu0
      %v746 = vadd.f32 %v695, %v745
      %v747 = vpop.f32.mrf.mxu0
      %v748 = vadd.f32 %v695, %v747
      %749 = vdwg.mxu0
      %s750 = scalar_lea.vmem %s3, 32
      %v751 = vld [vmem:[%s750] sm:$0xf]
      %v752 = vld [vmem:[%s750 + $0x4] sm:$0xf]
      %v753 = vld [vmem:[%s750 + $0x8] sm:$0xf]
      %v754 = vld [vmem:[%s750 + $0xc] sm:$0xf]
      %s755 = scalar_lea.vmem %s4, 2
      %v756 = vld [vmem:[%s755] sm:$0x1]
      %v758 = vperm.slane %v756, 0
      %v764 = vunpack.c.l.b16 %v751
      %v765 = vunpack.c.l.b16 %v752
      %v766 = vunpack.c.l.b16 %v753
      %v767 = vunpack.c.l.b16 %v754
      %v768 = vpack.c.b16 %v765, %v764
      %v769 = vpack.c.b16 %v767, %v766
      %772 = vmatpush.bf16.msra.mxu0 0
      %773 = vmatpush.bf16.msra.mxu0 0
      %774 = vmatpush.bf16.msra.mxu0 0
      %775 = vmatpush.bf16.msra.mxu0 0
      %776 = vmatpush.bf16.msra.mxu0 0
      %777 = vmatpush.bf16.msra.mxu0 0
      %778 = vmatpush.bf16.msra.mxu0 %v769
      %779 = vmatpush.bf16.msra.mxu0 %v768
      %780 = vmatmul.bf16.gmra.mxu0 %v710
      %v781 = vpop.f32.mrf.mxu0
      %v782 = vadd.f32 %v758, %v781
      %v783 = vpop.f32.mrf.mxu0
      %v784 = vadd.f32 %v758, %v783
      %785 = vmatmul.bf16.gmra.mxu0 %v713
      %v786 = vpop.f32.mrf.mxu0
      %v787 = vadd.f32 %v758, %v786
      %v788 = vpop.f32.mrf.mxu0
      %v789 = vadd.f32 %v758, %v788
      %790 = vmatmul.bf16.gmra.mxu0 %v716
      %v791 = vpop.f32.mrf.mxu0
      %v792 = vadd.f32 %v758, %v791
      %v793 = vpop.f32.mrf.mxu0
      %v794 = vadd.f32 %v758, %v793
      %795 = vmatmul.bf16.gmra.mxu0 %v719
      %v796 = vpop.f32.mrf.mxu0
      %v797 = vadd.f32 %v758, %v796
      %v798 = vpop.f32.mrf.mxu0
      %v799 = vadd.f32 %v758, %v798
      %800 = vdwg.mxu0
      %s801 = scalar_lea.vmem %s3, 64
      %v802 = vld [vmem:[%s801] sm:$0xf]
      %v803 = vld [vmem:[%s801 + $0x4] sm:$0xf]
      %v804 = vld [vmem:[%s801 + $0x8] sm:$0xf]
      %v805 = vld [vmem:[%s801 + $0xc] sm:$0xf]
      %s806 = scalar_lea.vmem %s4, 4
      %v807 = vld [vmem:[%s806] sm:$0x1]
      %v809 = vperm.slane %v807, 0
      %v815 = vunpack.c.l.b16 %v802
      %v816 = vunpack.c.l.b16 %v803
      %v817 = vunpack.c.l.b16 %v804
      %v818 = vunpack.c.l.b16 %v805
      %v819 = vpack.c.b16 %v816, %v815
      %v820 = vpack.c.b16 %v818, %v817
      %823 = vmatpush.bf16.msra.mxu0 0
      %824 = vmatpush.bf16.msra.mxu0 0
      %825 = vmatpush.bf16.msra.mxu0 0
      %826 = vmatpush.bf16.msra.mxu0 0
      %827 = vmatpush.bf16.msra.mxu0 0
      %828 = vmatpush.bf16.msra.mxu0 0
      %829 = vmatpush.bf16.msra.mxu0 %v820
      %830 = vmatpush.bf16.msra.mxu0 %v819
      %831 = vmatmul.bf16.gmra.mxu0 %v710
      %v832 = vpop.f32.mrf.mxu0
      %v833 = vadd.f32 %v809, %v832
      %v834 = vpop.f32.mrf.mxu0
      %v835 = vadd.f32 %v809, %v834
      %836 = vmatmul.bf16.gmra.mxu0 %v713
      %v837 = vpop.f32.mrf.mxu0
      %v838 = vadd.f32 %v809, %v837
      %v839 = vpop.f32.mrf.mxu0
      %v840 = vadd.f32 %v809, %v839
      %841 = vmatmul.bf16.gmra.mxu0 %v716
      %v842 = vpop.f32.mrf.mxu0
      %v843 = vadd.f32 %v809, %v842
      %v844 = vpop.f32.mrf.mxu0
      %v845 = vadd.f32 %v809, %v844
      %846 = vmatmul.bf16.gmra.mxu0 %v719
      %v847 = vpop.f32.mrf.mxu0
      %v848 = vadd.f32 %v809, %v847
      %v849 = vpop.f32.mrf.mxu0
      %v850 = vadd.f32 %v809, %v849
      %851 = vdwg.mxu0
      %v852 = vpack.c.bf16 %v733, %v731
      %v853 = vpack.c.bf16 %v738, %v736
      %v854 = vpack.c.bf16 %v743, %v741
      %v855 = vpack.c.bf16 %v748, %v746
      %v856 = vpack.c.bf16 %v784, %v782
      %v857 = vpack.c.bf16 %v789, %v787
      %v858 = vpack.c.bf16 %v794, %v792
      %v859 = vpack.c.bf16 %v799, %v797
      %vm860 = vcmask 130048
      %v862 = vsel %vm860, %v852, 0
      %v865 = vsel %vm860, %v853, 0
      %v868 = vsel %vm860, %v854, 0
      %v871 = vsel %vm860, %v855, 0
      %v874 = vsel %vm860, %v856, 0
      %v877 = vsel %vm860, %v857, 0
      %v880 = vsel %vm860, %v858, 0
      %v883 = vsel %vm860, %v859, 0
      %885 = vmatpush.bf16.xpose.msra.mxu0 0
      %886 = vmatpush.bf16.xpose.msra.mxu0 0
      %887 = vmatpush.bf16.xpose.msra.mxu0 0
      %888 = vmatpush.bf16.xpose.msra.mxu0 0
      %889 = vmatpush.bf16.xpose.msra.mxu0 %v883
      %890 = vmatpush.bf16.xpose.msra.mxu0 %v880
      %891 = vmatpush.bf16.xpose.msra.mxu0 %v877
      %892 = vmatpush.bf16.xpose.msra.mxu0 %v874
      %893 = vmatmul.bf16.gmra.mxu0 %v862
      %v894 = vpop.f32.mrf.mxu0
      %v895 = vadd.f32 0.0, %v894
      %v896 = vpop.f32.mrf.mxu0
      %v897 = vadd.f32 0.0, %v896
      %898 = vmatmul.bf16.gmra.mxu0 %v865
      %v899 = vpop.f32.mrf.mxu0
      %v900 = vadd.f32 0.0, %v899
      %v901 = vpop.f32.mrf.mxu0
      %v902 = vadd.f32 0.0, %v901
      %903 = vmatmul.bf16.gmra.mxu0 %v868
      %v904 = vpop.f32.mrf.mxu0
      %v905 = vadd.f32 0.0, %v904
      %v906 = vpop.f32.mrf.mxu0
      %v907 = vadd.f32 0.0, %v906
      %908 = vmatmul.bf16.gmra.mxu0 %v871
      %v909 = vpop.f32.mrf.mxu0
      %v910 = vadd.f32 0.0, %v909
      %v911 = vpop.f32.mrf.mxu0
      %v912 = vadd.f32 0.0, %v911
      %913 = vdwg.mxu0
      %v914 = vmul.f32 %v895, 0.25
      %v915 = vmul.f32 %v897, 0.25
      %v916 = vmul.f32 %v900, 0.25
      %v917 = vmul.f32 %v902, 0.25
      %v918 = vmul.f32 %v905, 0.25
      %v919 = vmul.f32 %v907, 0.25
      %v920 = vmul.f32 %v910, 0.25
      %v921 = vmul.f32 %v912, 0.25
      %v922 = vld [vmem:[%s13] sm:$0xff]
      %v923 = vld [vmem:[%s13 + $0x8] sm:$0xff]
      %v924 = vld [vmem:[%s13 + $0x10] sm:$0xff]
      %v925 = vld [vmem:[%s13 + $0x18] sm:$0xff]
      %v926 = vld [vmem:[%s13 + $0x20] sm:$0xff]
      %v927 = vld [vmem:[%s13 + $0x28] sm:$0xff]
      %v928 = vld [vmem:[%s13 + $0x30] sm:$0xff]
      %v929 = vld [vmem:[%s13 + $0x38] sm:$0xff]
      %v930 = vadd.f32 %v914, %v922
      %v931 = vadd.f32 %v915, %v923
      %v932 = vadd.f32 %v916, %v924
      %v933 = vadd.f32 %v917, %v925
      %v934 = vadd.f32 %v918, %v926
      %v935 = vadd.f32 %v919, %v927
      %v936 = vadd.f32 %v920, %v928
      %v937 = vadd.f32 %v921, %v929
      %vm938 = vcmask 523264
      %v939 = vsel %vm938, %v930, -inf
      %940 = vmax.xlane.f32.xlu0 %v939
      %v941 = vpop.xlane.xlu0 %940
      %v942 = vsel %vm938, %v931, -inf
      %943 = vmax.xlane.f32.xlu0 %v942
      %v944 = vpop.xlane.xlu0 %943
      %v945 = vsel %vm938, %v932, -inf
      %946 = vmax.xlane.f32.xlu0 %v945
      %v947 = vpop.xlane.xlu0 %946
      %v948 = vsel %vm938, %v933, -inf
      %949 = vmax.xlane.f32.xlu0 %v948
      %v950 = vpop.xlane.xlu0 %949
      %v951 = vsel %vm938, %v934, -inf
      %952 = vmax.xlane.f32.xlu0 %v951
      %v953 = vpop.xlane.xlu0 %952
      %v954 = vsel %vm938, %v935, -inf
      %955 = vmax.xlane.f32.xlu0 %v954
      %v956 = vpop.xlane.xlu0 %955
      %v957 = vsel %vm938, %v936, -inf
      %958 = vmax.xlane.f32.xlu0 %v957
      %v959 = vpop.xlane.xlu0 %958
      %v960 = vsel %vm938, %v937, -inf
      %961 = vmax.xlane.f32.xlu0 %v960
      %v962 = vpop.xlane.xlu0 %961
      %v963 = vsub.f32 %v930, %v941
      %v964 = vsub.f32 %v931, %v944
      %v965 = vsub.f32 %v932, %v947
      %v966 = vsub.f32 %v933, %v950
      %v967 = vsub.f32 %v934, %v953
      %v968 = vsub.f32 %v935, %v956
      %v969 = vsub.f32 %v936, %v959
      %v970 = vsub.f32 %v937, %v962
      %v971 = vmul.f32 %v963, 1.442695
      %v972 = vpow.pop %v971
      %v973 = vmul.f32 %v964, 1.442695
      %v974 = vpow.pop %v973
      %v975 = vmul.f32 %v965, 1.442695
      %v976 = vpow.pop %v975
      %v977 = vmul.f32 %v966, 1.442695
      %v978 = vpow.pop %v977
      %v979 = vmul.f32 %v967, 1.442695
      %v980 = vpow.pop %v979
      %v981 = vmul.f32 %v968, 1.442695
      %v982 = vpow.pop %v981
      %v983 = vmul.f32 %v969, 1.442695
      %v984 = vpow.pop %v983
      %v985 = vmul.f32 %v970, 1.442695
      %v986 = vpow.pop %v985
      %v987 = vsel %vm938, %v972, 0.0
      %988 = vadd.xlane.f32.xlu0 %v987
      %v989 = vpop.xlane.xlu0 %988
      %v990 = vsel %vm938, %v974, 0.0
      %991 = vadd.xlane.f32.xlu0 %v990
      %v992 = vpop.xlane.xlu0 %991
      %v993 = vsel %vm938, %v976, 0.0
      %994 = vadd.xlane.f32.xlu0 %v993
      %v995 = vpop.xlane.xlu0 %994
      %v996 = vsel %vm938, %v978, 0.0
      %997 = vadd.xlane.f32.xlu0 %v996
      %v998 = vpop.xlane.xlu0 %997
      %v999 = vsel %vm938, %v980, 0.0
      %1000 = vadd.xlane.f32.xlu0 %v999
      %v1001 = vpop.xlane.xlu0 %1000
      %v1002 = vsel %vm938, %v982, 0.0
      %1003 = vadd.xlane.f32.xlu0 %v1002
      %v1004 = vpop.xlane.xlu0 %1003
      %v1005 = vsel %vm938, %v984, 0.0
      %1006 = vadd.xlane.f32.xlu0 %v1005
      %v1007 = vpop.xlane.xlu0 %1006
      %v1008 = vsel %vm938, %v986, 0.0
      %1009 = vadd.xlane.f32.xlu0 %v1008
      %v1010 = vpop.xlane.xlu0 %1009
      %v1011 = vrcp.pop %v989
      %v1012 = vrcp.pop %v992
      %v1013 = vrcp.pop %v995
      %v1014 = vrcp.pop %v998
      %v1015 = vrcp.pop %v1001
      %v1016 = vrcp.pop %v1004
      %v1017 = vrcp.pop %v1007
      %v1018 = vrcp.pop %v1010
      %v1019 = vmul.f32 %v972, %v1011
      %v1020 = vmul.f32 %v974, %v1012
      %v1021 = vmul.f32 %v976, %v1013
      %v1022 = vmul.f32 %v978, %v1014
      %v1023 = vmul.f32 %v980, %v1015
      %v1024 = vmul.f32 %v982, %v1016
      %v1025 = vmul.f32 %v984, %v1017
      %v1026 = vmul.f32 %v986, %v1018
      %v1027 = vpack.c.bf16 %v1020, %v1019
      %v1028 = vpack.c.bf16 %v1022, %v1021
      %v1029 = vpack.c.bf16 %v1024, %v1023
      %v1030 = vpack.c.bf16 %v1026, %v1025
      %v1031 = vpack.c.bf16 %v835, %v833
      %v1032 = vpack.c.bf16 %v840, %v838
      %v1033 = vpack.c.bf16 %v845, %v843
      %v1034 = vpack.c.bf16 %v850, %v848
      %v1036 = vsel %vm938, %v1027, 0
      %v1039 = vsel %vm938, %v1028, 0
      %v1042 = vsel %vm938, %v1029, 0
      %v1045 = vsel %vm938, %v1030, 0
      %1047 = vmatpush.bf16.msra.mxu0 0
      %1048 = vmatpush.bf16.msra.mxu0 0
      %1049 = vmatpush.bf16.msra.mxu0 0
      %1050 = vmatpush.bf16.msra.mxu0 0
      %1051 = vmatpush.bf16.msra.mxu0 %v1034
      %1052 = vmatpush.bf16.msra.mxu0 %v1033
      %1053 = vmatpush.bf16.msra.mxu0 %v1032
      %1054 = vmatpush.bf16.msra.mxu0 %v1031
      %1055 = vmatmul.bf16.gmra.mxu0 %v1036
      %v1056 = vpop.f32.mrf.mxu0
      %v1057 = vadd.f32 0.0, %v1056
      %v1058 = vpop.f32.mrf.mxu0
      %v1059 = vadd.f32 0.0, %v1058
      %1060 = vmatmul.bf16.gmra.mxu0 %v1039
      %v1061 = vpop.f32.mrf.mxu0
      %v1062 = vadd.f32 0.0, %v1061
      %v1063 = vpop.f32.mrf.mxu0
      %v1064 = vadd.f32 0.0, %v1063
      %1065 = vmatmul.bf16.gmra.mxu0 %v1042
      %v1066 = vpop.f32.mrf.mxu0
      %v1067 = vadd.f32 0.0, %v1066
      %v1068 = vpop.f32.mrf.mxu0
      %v1069 = vadd.f32 0.0, %v1068
      %1070 = vmatmul.bf16.gmra.mxu0 %v1045
      %v1071 = vpop.f32.mrf.mxu0
      %v1072 = vadd.f32 0.0, %v1071
      %v1073 = vpop.f32.mrf.mxu0
      %v1074 = vadd.f32 0.0, %v1073
      %1075 = vdwg.mxu0
      %v1076 = vpack.c.bf16 %v1059, %v1057
      %v1077 = vpack.c.bf16 %v1064, %v1062
      %v1078 = vpack.c.bf16 %v1069, %v1067
      %v1079 = vpack.c.bf16 %v1074, %v1072
      %v1080 = vld [vmem:[%s5] sm:$0xf]
      %v1081 = vld [vmem:[%s5 + $0x4] sm:$0xf]
      %s1082 = scalar_lea.vmem %s3, 16
      %v1083 = vld [vmem:[%s1082] sm:$0xf]
      %v1084 = vld [vmem:[%s1082 + $0x4] sm:$0xf]
      %v1085 = vld [vmem:[%s1082 + $0x8] sm:$0xf]
      %v1086 = vld [vmem:[%s1082 + $0xc] sm:$0xf]
      %s1087 = scalar_lea.vmem %s4, 1
      %v1088 = vld [vmem:[%s1087] sm:$0x1]
      %v1090 = vperm.slane %v1088, 0
      %v1096 = vunpack.c.l.b16 %v1083
      %v1097 = vunpack.c.l.b16 %v1084
      %v1098 = vunpack.c.l.b16 %v1085
      %v1099 = vunpack.c.l.b16 %v1086
      %v1100 = vpack.c.b16 %v1097, %v1096
      %v1101 = vpack.c.b16 %v1099, %v1098
      %1104 = vmatpush.bf16.msra.mxu0 0
      %1105 = vmatpush.bf16.msra.mxu0 0
      %1106 = vmatpush.bf16.msra.mxu0 0
      %1107 = vmatpush.bf16.msra.mxu0 0
      %1108 = vmatpush.bf16.msra.mxu0 0
      %1109 = vmatpush.bf16.msra.mxu0 0
      %1110 = vmatpush.bf16.msra.mxu0 %v1101
      %1111 = vmatpush.bf16.msra.mxu0 %v1100
      %1112 = vmatmul.bf16.gmra.mxu0 %v710
      %v1113 = vpop.f32.mrf.mxu0
      %v1114 = vadd.f32 %v1090, %v1113
      %v1115 = vpop.f32.mrf.mxu0
      %v1116 = vadd.f32 %v1090, %v1115
      %1117 = vmatmul.bf16.gmra.mxu0 %v713
      %v1118 = vpop.f32.mrf.mxu0
      %v1119 = vadd.f32 %v1090, %v1118
      %v1120 = vpop.f32.mrf.mxu0
      %v1121 = vadd.f32 %v1090, %v1120
      %1122 = vmatmul.bf16.gmra.mxu0 %v716
      %v1123 = vpop.f32.mrf.mxu0
      %v1124 = vadd.f32 %v1090, %v1123
      %v1125 = vpop.f32.mrf.mxu0
      %v1126 = vadd.f32 %v1090, %v1125
      %1127 = vmatmul.bf16.gmra.mxu0 %v719
      %v1128 = vpop.f32.mrf.mxu0
      %v1129 = vadd.f32 %v1090, %v1128
      %v1130 = vpop.f32.mrf.mxu0
      %v1131 = vadd.f32 %v1090, %v1130
      %1132 = vdwg.mxu0
      %s1133 = scalar_lea.vmem %s3, 48
      %v1134 = vld [vmem:[%s1133] sm:$0xf]
      %v1135 = vld [vmem:[%s1133 + $0x4] sm:$0xf]
      %v1136 = vld [vmem:[%s1133 + $0x8] sm:$0xf]
      %v1137 = vld [vmem:[%s1133 + $0xc] sm:$0xf]
      %s1138 = scalar_lea.vmem %s4, 3
      %v1139 = vld [vmem:[%s1138] sm:$0x1]
      %v1141 = vperm.slane %v1139, 0
      %v1147 = vunpack.c.l.b16 %v1134
      %v1148 = vunpack.c.l.b16 %v1135
      %v1149 = vunpack.c.l.b16 %v1136
      %v1150 = vunpack.c.l.b16 %v1137
      %v1151 = vpack.c.b16 %v1148, %v1147
      %v1152 = vpack.c.b16 %v1150, %v1149
      %1155 = vmatpush.bf16.msra.mxu0 0
      %1156 = vmatpush.bf16.msra.mxu0 0
      %1157 = vmatpush.bf16.msra.mxu0 0
      %1158 = vmatpush.bf16.msra.mxu0 0
      %1159 = vmatpush.bf16.msra.mxu0 0
      %1160 = vmatpush.bf16.msra.mxu0 0
      %1161 = vmatpush.bf16.msra.mxu0 %v1152
      %1162 = vmatpush.bf16.msra.mxu0 %v1151
      %1163 = vmatmul.bf16.gmra.mxu0 %v710
      %v1164 = vpop.f32.mrf.mxu0
      %v1165 = vadd.f32 %v1141, %v1164
      %v1166 = vpop.f32.mrf.mxu0
      %v1167 = vadd.f32 %v1141, %v1166
      %1168 = vmatmul.bf16.gmra.mxu0 %v713
      %v1169 = vpop.f32.mrf.mxu0
      %v1170 = vadd.f32 %v1141, %v1169
      %v1171 = vpop.f32.mrf.mxu0
      %v1172 = vadd.f32 %v1141, %v1171
      %1173 = vmatmul.bf16.gmra.mxu0 %v716
      %v1174 = vpop.f32.mrf.mxu0
      %v1175 = vadd.f32 %v1141, %v1174
      %v1176 = vpop.f32.mrf.mxu0
      %v1177 = vadd.f32 %v1141, %v1176
      %1178 = vmatmul.bf16.gmra.mxu0 %v719
      %v1179 = vpop.f32.mrf.mxu0
      %v1180 = vadd.f32 %v1141, %v1179
      %v1181 = vpop.f32.mrf.mxu0
      %v1182 = vadd.f32 %v1141, %v1181
      %1183 = vdwg.mxu0
      %s1184 = scalar_lea.vmem %s3, 80
      %v1185 = vld [vmem:[%s1184] sm:$0xf]
      %v1186 = vld [vmem:[%s1184 + $0x4] sm:$0xf]
      %v1187 = vld [vmem:[%s1184 + $0x8] sm:$0xf]
      %v1188 = vld [vmem:[%s1184 + $0xc] sm:$0xf]
      %s1189 = scalar_lea.vmem %s4, 5
      %v1190 = vld [vmem:[%s1189] sm:$0x1]
      %v1192 = vperm.slane %v1190, 0
      %v1198 = vunpack.c.l.b16 %v1185
      %v1199 = vunpack.c.l.b16 %v1186
      %v1200 = vunpack.c.l.b16 %v1187
      %v1201 = vunpack.c.l.b16 %v1188
      %v1202 = vpack.c.b16 %v1199, %v1198
      %v1203 = vpack.c.b16 %v1201, %v1200
      %1206 = vmatpush.bf16.msra.mxu0 0
      %1207 = vmatpush.bf16.msra.mxu0 0
      %1208 = vmatpush.bf16.msra.mxu0 0
      %1209 = vmatpush.bf16.msra.mxu0 0
      %1210 = vmatpush.bf16.msra.mxu0 0
      %1211 = vmatpush.bf16.msra.mxu0 0
      %1212 = vmatpush.bf16.msra.mxu0 %v1203
      %1213 = vmatpush.bf16.msra.mxu0 %v1202
      %1214 = vmatmul.bf16.gmra.mxu0 %v710
      %v1215 = vpop.f32.mrf.mxu0
      %v1216 = vadd.f32 %v1192, %v1215
      %v1217 = vpop.f32.mrf.mxu0
      %v1218 = vadd.f32 %v1192, %v1217
      %1219 = vmatmul.bf16.gmra.mxu0 %v713
      %v1220 = vpop.f32.mrf.mxu0
      %v1221 = vadd.f32 %v1192, %v1220
      %v1222 = vpop.f32.mrf.mxu0
      %v1223 = vadd.f32 %v1192, %v1222
      %1224 = vmatmul.bf16.gmra.mxu0 %v716
      %v1225 = vpop.f32.mrf.mxu0
      %v1226 = vadd.f32 %v1192, %v1225
      %v1227 = vpop.f32.mrf.mxu0
      %v1228 = vadd.f32 %v1192, %v1227
      %1229 = vmatmul.bf16.gmra.mxu0 %v719
      %v1230 = vpop.f32.mrf.mxu0
      %v1231 = vadd.f32 %v1192, %v1230
      %v1232 = vpop.f32.mrf.mxu0
      %v1233 = vadd.f32 %v1192, %v1232
      %1234 = vdwg.mxu0
      %v1235 = vpack.c.bf16 %v1116, %v1114
      %v1236 = vpack.c.bf16 %v1121, %v1119
      %v1237 = vpack.c.bf16 %v1126, %v1124
      %v1238 = vpack.c.bf16 %v1131, %v1129
      %v1239 = vpack.c.bf16 %v1167, %v1165
      %v1240 = vpack.c.bf16 %v1172, %v1170
      %v1241 = vpack.c.bf16 %v1177, %v1175
      %v1242 = vpack.c.bf16 %v1182, %v1180
      %v1244 = vsel %vm860, %v1235, 0
      %v1247 = vsel %vm860, %v1236, 0
      %v1250 = vsel %vm860, %v1237, 0
      %v1253 = vsel %vm860, %v1238, 0
      %v1256 = vsel %vm860, %v1239, 0
      %v1259 = vsel %vm860, %v1240, 0
      %v1262 = vsel %vm860, %v1241, 0
      %v1265 = vsel %vm860, %v1242, 0
      %1267 = vmatpush.bf16.xpose.msra.mxu0 0
      %1268 = vmatpush.bf16.xpose.msra.mxu0 0
      %1269 = vmatpush.bf16.xpose.msra.mxu0 0
      %1270 = vmatpush.bf16.xpose.msra.mxu0 0
      %1271 = vmatpush.bf16.xpose.msra.mxu0 %v1265
      %1272 = vmatpush.bf16.xpose.msra.mxu0 %v1262
      %1273 = vmatpush.bf16.xpose.msra.mxu0 %v1259
      %1274 = vmatpush.bf16.xpose.msra.mxu0 %v1256
      %1275 = vmatmul.bf16.gmra.mxu0 %v1244
      %v1276 = vpop.f32.mrf.mxu0
      %v1277 = vadd.f32 0.0, %v1276
      %v1278 = vpop.f32.mrf.mxu0
      %v1279 = vadd.f32 0.0, %v1278
      %1280 = vmatmul.bf16.gmra.mxu0 %v1247
      %v1281 = vpop.f32.mrf.mxu0
      %v1282 = vadd.f32 0.0, %v1281
      %v1283 = vpop.f32.mrf.mxu0
      %v1284 = vadd.f32 0.0, %v1283
      %1285 = vmatmul.bf16.gmra.mxu0 %v1250
      %v1286 = vpop.f32.mrf.mxu0
      %v1287 = vadd.f32 0.0, %v1286
      %v1288 = vpop.f32.mrf.mxu0
      %v1289 = vadd.f32 0.0, %v1288
      %1290 = vmatmul.bf16.gmra.mxu0 %v1253
      %v1291 = vpop.f32.mrf.mxu0
      %v1292 = vadd.f32 0.0, %v1291
      %v1293 = vpop.f32.mrf.mxu0
      %v1294 = vadd.f32 0.0, %v1293
      %1295 = vdwg.mxu0
      %v1296 = vmul.f32 %v1277, 0.25
      %v1297 = vmul.f32 %v1279, 0.25
      %v1298 = vmul.f32 %v1282, 0.25
      %v1299 = vmul.f32 %v1284, 0.25
      %v1300 = vmul.f32 %v1287, 0.25
      %v1301 = vmul.f32 %v1289, 0.25
      %v1302 = vmul.f32 %v1292, 0.25
      %v1303 = vmul.f32 %v1294, 0.25
      %v1304 = vadd.f32 %v1296, %v922
      %v1305 = vadd.f32 %v1297, %v923
      %v1306 = vadd.f32 %v1298, %v924
      %v1307 = vadd.f32 %v1299, %v925
      %v1308 = vadd.f32 %v1300, %v926
      %v1309 = vadd.f32 %v1301, %v927
      %v1310 = vadd.f32 %v1302, %v928
      %v1311 = vadd.f32 %v1303, %v929
      %v1312 = vsel %vm938, %v1304, -inf
      %1313 = vmax.xlane.f32.xlu0 %v1312
      %v1314 = vpop.xlane.xlu0 %1313
      %v1315 = vsel %vm938, %v1305, -inf
      %1316 = vmax.xlane.f32.xlu0 %v1315
      %v1317 = vpop.xlane.xlu0 %1316
      %v1318 = vsel %vm938, %v1306, -inf
      %1319 = vmax.xlane.f32.xlu0 %v1318
      %v1320 = vpop.xlane.xlu0 %1319
      %v1321 = vsel %vm938, %v1307, -inf
      %1322 = vmax.xlane.f32.xlu0 %v1321
      %v1323 = vpop.xlane.xlu0 %1322
      %v1324 = vsel %vm938, %v1308, -inf
      %1325 = vmax.xlane.f32.xlu0 %v1324
      %v1326 = vpop.xlane.xlu0 %1325
      %v1327 = vsel %vm938, %v1309, -inf
      %1328 = vmax.xlane.f32.xlu0 %v1327
      %v1329 = vpop.xlane.xlu0 %1328
      %v1330 = vsel %vm938, %v1310, -inf
      %1331 = vmax.xlane.f32.xlu0 %v1330
      %v1332 = vpop.xlane.xlu0 %1331
      %v1333 = vsel %vm938, %v1311, -inf
      %1334 = vmax.xlane.f32.xlu0 %v1333
      %v1335 = vpop.xlane.xlu0 %1334
      %v1336 = vsub.f32 %v1304, %v1314
      %v1337 = vsub.f32 %v1305, %v1317
      %v1338 = vsub.f32 %v1306, %v1320
      %v1339 = vsub.f32 %v1307, %v1323
      %v1340 = vsub.f32 %v1308, %v1326
      %v1341 = vsub.f32 %v1309, %v1329
      %v1342 = vsub.f32 %v1310, %v1332
      %v1343 = vsub.f32 %v1311, %v1335
      %v1344 = vmul.f32 %v1336, 1.442695
      %v1345 = vpow.pop %v1344
      %v1346 = vmul.f32 %v1337, 1.442695
      %v1347 = vpow.pop %v1346
      %v1348 = vmul.f32 %v1338, 1.442695
      %v1349 = vpow.pop %v1348
      %v1350 = vmul.f32 %v1339, 1.442695
      %v1351 = vpow.pop %v1350
      %v1352 = vmul.f32 %v1340, 1.442695
      %v1353 = vpow.pop %v1352
      %v1354 = vmul.f32 %v1341, 1.442695
      %v1355 = vpow.pop %v1354
      %v1356 = vmul.f32 %v1342, 1.442695
      %v1357 = vpow.pop %v1356
      %v1358 = vmul.f32 %v1343, 1.442695
      %v1359 = vpow.pop %v1358
      %v1360 = vsel %vm938, %v1345, 0.0
      %1361 = vadd.xlane.f32.xlu0 %v1360
      %v1362 = vpop.xlane.xlu0 %1361
      %v1363 = vsel %vm938, %v1347, 0.0
      %1364 = vadd.xlane.f32.xlu0 %v1363
      %v1365 = vpop.xlane.xlu0 %1364
      %v1366 = vsel %vm938, %v1349, 0.0
      %1367 = vadd.xlane.f32.xlu0 %v1366
      %v1368 = vpop.xlane.xlu0 %1367
      %v1369 = vsel %vm938, %v1351, 0.0
      %1370 = vadd.xlane.f32.xlu0 %v1369
      %v1371 = vpop.xlane.xlu0 %1370
      %v1372 = vsel %vm938, %v1353, 0.0
      %1373 = vadd.xlane.f32.xlu0 %v1372
      %v1374 = vpop.xlane.xlu0 %1373
      %v1375 = vsel %vm938, %v1355, 0.0
      %1376 = vadd.xlane.f32.xlu0 %v1375
      %v1377 = vpop.xlane.xlu0 %1376
      %v1378 = vsel %vm938, %v1357, 0.0
      %1379 = vadd.xlane.f32.xlu0 %v1378
      %v1380 = vpop.xlane.xlu0 %1379
      %v1381 = vsel %vm938, %v1359, 0.0
      %1382 = vadd.xlane.f32.xlu0 %v1381
      %v1383 = vpop.xlane.xlu0 %1382
      %v1384 = vrcp.pop %v1362
      %v1385 = vrcp.pop %v1365
      %v1386 = vrcp.pop %v1368
      %v1387 = vrcp.pop %v1371
      %v1388 = vrcp.pop %v1374
      %v1389 = vrcp.pop %v1377
      %v1390 = vrcp.pop %v1380
      %v1391 = vrcp.pop %v1383
      %v1392 = vmul.f32 %v1345, %v1384
      %v1393 = vmul.f32 %v1347, %v1385
      %v1394 = vmul.f32 %v1349, %v1386
      %v1395 = vmul.f32 %v1351, %v1387
      %v1396 = vmul.f32 %v1353, %v1388
      %v1397 = vmul.f32 %v1355, %v1389
      %v1398 = vmul.f32 %v1357, %v1390
      %v1399 = vmul.f32 %v1359, %v1391
      %v1400 = vpack.c.bf16 %v1393, %v1392
      %v1401 = vpack.c.bf16 %v1395, %v1394
      %v1402 = vpack.c.bf16 %v1397, %v1396
      %v1403 = vpack.c.bf16 %v1399, %v1398
      %v1404 = vpack.c.bf16 %v1218, %v1216
      %v1405 = vpack.c.bf16 %v1223, %v1221
      %v1406 = vpack.c.bf16 %v1228, %v1226
      %v1407 = vpack.c.bf16 %v1233, %v1231
      %v1409 = vsel %vm938, %v1400, 0
      %v1412 = vsel %vm938, %v1401, 0
      %v1415 = vsel %vm938, %v1402, 0
      %v1418 = vsel %vm938, %v1403, 0
      %1420 = vmatpush.bf16.msra.mxu0 0
      %1421 = vmatpush.bf16.msra.mxu0 0
      %1422 = vmatpush.bf16.msra.mxu0 0
      %1423 = vmatpush.bf16.msra.mxu0 0
      %1424 = vmatpush.bf16.msra.mxu0 %v1407
      %1425 = vmatpush.bf16.msra.mxu0 %v1406
      %1426 = vmatpush.bf16.msra.mxu0 %v1405
      %1427 = vmatpush.bf16.msra.mxu0 %v1404
      %1428 = vmatmul.bf16.gmra.mxu0 %v1409
      %v1429 = vpop.f32.mrf.mxu0
      %v1430 = vadd.f32 0.0, %v1429
      %v1431 = vpop.f32.mrf.mxu0
      %v1432 = vadd.f32 0.0, %v1431
      %1433 = vmatmul.bf16.gmra.mxu0 %v1412
      %v1434 = vpop.f32.mrf.mxu0
      %v1435 = vadd.f32 0.0, %v1434
      %v1436 = vpop.f32.mrf.mxu0
      %v1437 = vadd.f32 0.0, %v1436
      %1438 = vmatmul.bf16.gmra.mxu0 %v1415
      %v1439 = vpop.f32.mrf.mxu0
      %v1440 = vadd.f32 0.0, %v1439
      %v1441 = vpop.f32.mrf.mxu0
      %v1442 = vadd.f32 0.0, %v1441
      %1443 = vmatmul.bf16.gmra.mxu0 %v1418
      %v1444 = vpop.f32.mrf.mxu0
      %v1445 = vadd.f32 0.0, %v1444
      %v1446 = vpop.f32.mrf.mxu0
      %v1447 = vadd.f32 0.0, %v1446
      %1448 = vdwg.mxu0
      %v1449 = vpack.c.bf16 %v1432, %v1430
      %v1450 = vpack.c.bf16 %v1437, %v1435
      %v1451 = vpack.c.bf16 %v1442, %v1440
      %v1452 = vpack.c.bf16 %v1447, %v1445
      %s1453 = scalar_lea.vmem %s5, 8
      %v1454 = vld [vmem:[%s1453] sm:$0xf]
      %v1455 = vld [vmem:[%s1453 + $0x4] sm:$0xf]
      %v1458 = vunpack.c.l.b16 %v1454
      %v1459 = vunpack.c.l.b16 %v1455
      %v1460 = vpack.c.b16 %v1459, %v1458
      %v1463 = vsel %vm860, %v1449, 0
      %v1466 = vsel %vm860, %v1450, 0
      %v1469 = vsel %vm860, %v1451, 0
      %v1472 = vsel %vm860, %v1452, 0
      %1474 = vmatpush.bf16.msra.mxu0 0
      %1475 = vmatpush.bf16.msra.mxu0 0
      %1476 = vmatpush.bf16.msra.mxu0 0
      %1477 = vmatpush.bf16.msra.mxu0 0
      %1478 = vmatpush.bf16.msra.mxu0 0
      %1479 = vmatpush.bf16.msra.mxu0 0
      %1480 = vmatpush.bf16.msra.mxu0 0
      %1481 = vmatpush.bf16.msra.mxu0 %v1460
      %1482 = vmatmul.bf16.gmra.mxu0 %v1463
      %v1483 = vpop.f32.mrf.mxu0
      %v1484 = vadd.f32 0.0, %v1483
      %v1485 = vpop.f32.mrf.mxu0
      %v1486 = vadd.f32 0.0, %v1485
      %1487 = vmatmul.bf16.gmra.mxu0 %v1466
      %v1488 = vpop.f32.mrf.mxu0
      %v1489 = vadd.f32 0.0, %v1488
      %v1490 = vpop.f32.mrf.mxu0
      %v1491 = vadd.f32 0.0, %v1490
      %1492 = vmatmul.bf16.gmra.mxu0 %v1469
      %v1493 = vpop.f32.mrf.mxu0
      %v1494 = vadd.f32 0.0, %v1493
      %v1495 = vpop.f32.mrf.mxu0
      %v1496 = vadd.f32 0.0, %v1495
      %1497 = vmatmul.bf16.gmra.mxu0 %v1472
      %v1498 = vpop.f32.mrf.mxu0
      %v1499 = vadd.f32 0.0, %v1498
      %v1500 = vpop.f32.mrf.mxu0
      %v1501 = vadd.f32 0.0, %v1500
      %1502 = vdwg.mxu0
      %v1505 = vunpack.c.l.b16 %v1080
      %v1506 = vunpack.c.l.b16 %v1081
      %v1507 = vpack.c.b16 %v1506, %v1505
      %v1510 = vsel %vm860, %v1076, 0
      %v1513 = vsel %vm860, %v1077, 0
      %v1516 = vsel %vm860, %v1078, 0
      %v1519 = vsel %vm860, %v1079, 0
      %1521 = vmatpush.bf16.msra.mxu0 0
      %1522 = vmatpush.bf16.msra.mxu0 0
      %1523 = vmatpush.bf16.msra.mxu0 0
      %1524 = vmatpush.bf16.msra.mxu0 0
      %1525 = vmatpush.bf16.msra.mxu0 0
      %1526 = vmatpush.bf16.msra.mxu0 0
      %1527 = vmatpush.bf16.msra.mxu0 0
      %1528 = vmatpush.bf16.msra.mxu0 %v1507
      %1529 = vmatmul.bf16.gmra.mxu0 %v1510
      %v1530 = vpop.f32.mrf.mxu0
      %v1531 = vadd.f32 %v1484, %v1530
      %v1532 = vpop.f32.mrf.mxu0
      %v1533 = vadd.f32 %v1486, %v1532
      %1534 = vmatmul.bf16.gmra.mxu0 %v1513
      %v1535 = vpop.f32.mrf.mxu0
      %v1536 = vadd.f32 %v1489, %v1535
      %v1537 = vpop.f32.mrf.mxu0
      %v1538 = vadd.f32 %v1491, %v1537
      %1539 = vmatmul.bf16.gmra.mxu0 %v1516
      %v1540 = vpop.f32.mrf.mxu0
      %v1541 = vadd.f32 %v1494, %v1540
      %v1542 = vpop.f32.mrf.mxu0
      %v1543 = vadd.f32 %v1496, %v1542
      %1544 = vmatmul.bf16.gmra.mxu0 %v1519
      %v1545 = vpop.f32.mrf.mxu0
      %v1546 = vadd.f32 %v1499, %v1545
      %v1547 = vpop.f32.mrf.mxu0
      %v1548 = vadd.f32 %v1501, %v1547
      %1549 = vdwg.mxu0
      %v1550 = vadd.f32 %v469, %v1531
      %v1551 = vadd.f32 %v470, %v1533
      %v1552 = vadd.f32 %v471, %v1536
      %v1553 = vadd.f32 %v472, %v1538
      %v1554 = vadd.f32 %v473, %v1541
      %v1555 = vadd.f32 %v474, %v1543
      %v1556 = vadd.f32 %v475, %v1546
      %v1557 = vadd.f32 %v476, %v1548
      %v1558 = vld [vmem:[%s6] sm:$0x1]
      %v1560 = vperm.slane %v1558, 0
      %v1562 = vadd.f32 %v1550, %v1560
      %v1563 = vadd.f32 %v1551, %v1560
      %v1564 = vadd.f32 %v1552, %v1560
      %v1565 = vadd.f32 %v1553, %v1560
      %v1566 = vadd.f32 %v1554, %v1560
      %v1567 = vadd.f32 %v1555, %v1560
      %v1568 = vadd.f32 %v1556, %v1560
      %v1569 = vadd.f32 %v1557, %v1560
      %v1570 = vld [vmem:[%s7] sm:$0x1]
      %v1571 = vld [vmem:[%s8] sm:$0x1]
      %v1572 = vsel %vm479, %v1562, 0.0
      %1573 = vadd.xlane.f32.xlu0 %v1572
      %v1574 = vpop.xlane.xlu0 %1573
      %v1575 = vsel %vm479, %v1563, 0.0
      %1576 = vadd.xlane.f32.xlu0 %v1575
      %v1577 = vpop.xlane.xlu0 %1576
      %v1578 = vsel %vm479, %v1564, 0.0
      %1579 = vadd.xlane.f32.xlu0 %v1578
      %v1580 = vpop.xlane.xlu0 %1579
      %v1581 = vsel %vm479, %v1565, 0.0
      %1582 = vadd.xlane.f32.xlu0 %v1581
      %v1583 = vpop.xlane.xlu0 %1582
      %v1584 = vsel %vm479, %v1566, 0.0
      %1585 = vadd.xlane.f32.xlu0 %v1584
      %v1586 = vpop.xlane.xlu0 %1585
      %v1587 = vsel %vm479, %v1567, 0.0
      %1588 = vadd.xlane.f32.xlu0 %v1587
      %v1589 = vpop.xlane.xlu0 %1588
      %v1590 = vsel %vm479, %v1568, 0.0
      %1591 = vadd.xlane.f32.xlu0 %v1590
      %v1592 = vpop.xlane.xlu0 %1591
      %v1593 = vsel %vm479, %v1569, 0.0
      %1594 = vadd.xlane.f32.xlu0 %v1593
      %v1595 = vpop.xlane.xlu0 %1594
      %v1596 = vmul.f32 %v1574, %v510
      %v1597 = vmul.f32 %v1577, %v510
      %v1598 = vmul.f32 %v1580, %v510
      %v1599 = vmul.f32 %v1583, %v510
      %v1600 = vmul.f32 %v1586, %v510
      %v1601 = vmul.f32 %v1589, %v510
      %v1602 = vmul.f32 %v1592, %v510
      %v1603 = vmul.f32 %v1595, %v510
      %v1604 = vsub.f32 %v1562, %v1596
      %v1605 = vsub.f32 %v1563, %v1597
      %v1606 = vsub.f32 %v1564, %v1598
      %v1607 = vsub.f32 %v1565, %v1599
      %v1608 = vsub.f32 %v1566, %v1600
      %v1609 = vsub.f32 %v1567, %v1601
      %v1610 = vsub.f32 %v1568, %v1602
      %v1611 = vsub.f32 %v1569, %v1603
      %v1612 = vmul.f32 %v1604, %v1604
      %v1613 = vmul.f32 %v1605, %v1605
      %v1614 = vmul.f32 %v1606, %v1606
      %v1615 = vmul.f32 %v1607, %v1607
      %v1616 = vmul.f32 %v1608, %v1608
      %v1617 = vmul.f32 %v1609, %v1609
      %v1618 = vmul.f32 %v1610, %v1610
      %v1619 = vmul.f32 %v1611, %v1611
      %v1620 = vsel %vm479, %v1612, 0.0
      %1621 = vadd.xlane.f32.xlu0 %v1620
      %v1622 = vpop.xlane.xlu0 %1621
      %v1623 = vsel %vm479, %v1613, 0.0
      %1624 = vadd.xlane.f32.xlu0 %v1623
      %v1625 = vpop.xlane.xlu0 %1624
      %v1626 = vsel %vm479, %v1614, 0.0
      %1627 = vadd.xlane.f32.xlu0 %v1626
      %v1628 = vpop.xlane.xlu0 %1627
      %v1629 = vsel %vm479, %v1615, 0.0
      %1630 = vadd.xlane.f32.xlu0 %v1629
      %v1631 = vpop.xlane.xlu0 %1630
      %v1632 = vsel %vm479, %v1616, 0.0
      %1633 = vadd.xlane.f32.xlu0 %v1632
      %v1634 = vpop.xlane.xlu0 %1633
      %v1635 = vsel %vm479, %v1617, 0.0
      %1636 = vadd.xlane.f32.xlu0 %v1635
      %v1637 = vpop.xlane.xlu0 %1636
      %v1638 = vsel %vm479, %v1618, 0.0
      %1639 = vadd.xlane.f32.xlu0 %v1638
      %v1640 = vpop.xlane.xlu0 %1639
      %v1641 = vsel %vm479, %v1619, 0.0
      %1642 = vadd.xlane.f32.xlu0 %v1641
      %v1643 = vpop.xlane.xlu0 %1642
      %v1644 = vmul.f32 %v1622, %v510
      %v1645 = vmul.f32 %v1625, %v510
      %v1646 = vmul.f32 %v1628, %v510
      %v1647 = vmul.f32 %v1631, %v510
      %v1648 = vmul.f32 %v1634, %v510
      %v1649 = vmul.f32 %v1637, %v510
      %v1650 = vmul.f32 %v1640, %v510
      %v1651 = vmul.f32 %v1643, %v510
      %v1652 = vadd.f32 %v1644, 1e-05
      %v1653 = vadd.f32 %v1645, 1e-05
      %v1654 = vadd.f32 %v1646, 1e-05
      %v1655 = vadd.f32 %v1647, 1e-05
      %v1656 = vadd.f32 %v1648, 1e-05
      %v1657 = vadd.f32 %v1649, 1e-05
      %v1658 = vadd.f32 %v1650, 1e-05
      %v1659 = vadd.f32 %v1651, 1e-05
      %v1660 = vrsqrt.pop %v1652
      %v1661 = vmul.f32 %v1660, %v1652
      %v1662 = vmul.f32 %v1661, %v1660
      %v1663 = vmul.f32 0.5, %v1662
      %v1664 = vsub.f32 1.5, %v1663
      %v1665 = vmul.f32 %v1660, %v1664
      %vm1666 = vweird.f32 %v1652
      %vm1667 = vweird.f32 %v1660
      %vm1668 = vmor %vm1666, %vm1667
      %v1669 = vsel %vm1668, %v1660, %v1665
      %v1670 = vrsqrt.pop %v1653
      %v1671 = vmul.f32 %v1670, %v1653
      %v1672 = vmul.f32 %v1671, %v1670
      %v1673 = vmul.f32 0.5, %v1672
      %v1674 = vsub.f32 1.5, %v1673
      %v1675 = vmul.f32 %v1670, %v1674
      %vm1676 = vweird.f32 %v1653
      %vm1677 = vweird.f32 %v1670
      %vm1678 = vmor %vm1676, %vm1677
      %v1679 = vsel %vm1678, %v1670, %v1675
      %v1680 = vrsqrt.pop %v1654
      %v1681 = vmul.f32 %v1680, %v1654
      %v1682 = vmul.f32 %v1681, %v1680
      %v1683 = vmul.f32 0.5, %v1682
      %v1684 = vsub.f32 1.5, %v1683
      %v1685 = vmul.f32 %v1680, %v1684
      %vm1686 = vweird.f32 %v1654
      %vm1687 = vweird.f32 %v1680
      %vm1688 = vmor %vm1686, %vm1687
      %v1689 = vsel %vm1688, %v1680, %v1685
      %v1690 = vrsqrt.pop %v1655
      %v1691 = vmul.f32 %v1690, %v1655
      %v1692 = vmul.f32 %v1691, %v1690
      %v1693 = vmul.f32 0.5, %v1692
      %v1694 = vsub.f32 1.5, %v1693
      %v1695 = vmul.f32 %v1690, %v1694
      %vm1696 = vweird.f32 %v1655
      %vm1697 = vweird.f32 %v1690
      %vm1698 = vmor %vm1696, %vm1697
      %v1699 = vsel %vm1698, %v1690, %v1695
      %v1700 = vrsqrt.pop %v1656
      %v1701 = vmul.f32 %v1700, %v1656
      %v1702 = vmul.f32 %v1701, %v1700
      %v1703 = vmul.f32 0.5, %v1702
      %v1704 = vsub.f32 1.5, %v1703
      %v1705 = vmul.f32 %v1700, %v1704
      %vm1706 = vweird.f32 %v1656
      %vm1707 = vweird.f32 %v1700
      %vm1708 = vmor %vm1706, %vm1707
      %v1709 = vsel %vm1708, %v1700, %v1705
      %v1710 = vrsqrt.pop %v1657
      %v1711 = vmul.f32 %v1710, %v1657
      %v1712 = vmul.f32 %v1711, %v1710
      %v1713 = vmul.f32 0.5, %v1712
      %v1714 = vsub.f32 1.5, %v1713
      %v1715 = vmul.f32 %v1710, %v1714
      %vm1716 = vweird.f32 %v1657
      %vm1717 = vweird.f32 %v1710
      %vm1718 = vmor %vm1716, %vm1717
      %v1719 = vsel %vm1718, %v1710, %v1715
      %v1720 = vrsqrt.pop %v1658
      %v1721 = vmul.f32 %v1720, %v1658
      %v1722 = vmul.f32 %v1721, %v1720
      %v1723 = vmul.f32 0.5, %v1722
      %v1724 = vsub.f32 1.5, %v1723
      %v1725 = vmul.f32 %v1720, %v1724
      %vm1726 = vweird.f32 %v1658
      %vm1727 = vweird.f32 %v1720
      %vm1728 = vmor %vm1726, %vm1727
      %v1729 = vsel %vm1728, %v1720, %v1725
      %v1730 = vrsqrt.pop %v1659
      %v1731 = vmul.f32 %v1730, %v1659
      %v1732 = vmul.f32 %v1731, %v1730
      %v1733 = vmul.f32 0.5, %v1732
      %v1734 = vsub.f32 1.5, %v1733
      %v1735 = vmul.f32 %v1730, %v1734
      %vm1736 = vweird.f32 %v1659
      %vm1737 = vweird.f32 %v1730
      %vm1738 = vmor %vm1736, %vm1737
      %v1739 = vsel %vm1738, %v1730, %v1735
      %v1740 = vmul.f32 %v1604, %v1669
      %v1741 = vmul.f32 %v1605, %v1679
      %v1742 = vmul.f32 %v1606, %v1689
      %v1743 = vmul.f32 %v1607, %v1699
      %v1744 = vmul.f32 %v1608, %v1709
      %v1745 = vmul.f32 %v1609, %v1719
      %v1746 = vmul.f32 %v1610, %v1729
      %v1747 = vmul.f32 %v1611, %v1739
      %v1749 = vperm.slane %v1570, 0
      %v1751 = vmul.f32 %v1740, %v1749
      %v1752 = vmul.f32 %v1741, %v1749
      %v1753 = vmul.f32 %v1742, %v1749
      %v1754 = vmul.f32 %v1743, %v1749
      %v1755 = vmul.f32 %v1744, %v1749
      %v1756 = vmul.f32 %v1745, %v1749
      %v1757 = vmul.f32 %v1746, %v1749
      %v1758 = vmul.f32 %v1747, %v1749
      %v1760 = vperm.slane %v1571, 0
      %v1762 = vadd.f32 %v1751, %v1760
      %v1763 = vadd.f32 %v1752, %v1760
      %v1764 = vadd.f32 %v1753, %v1760
      %v1765 = vadd.f32 %v1754, %v1760
      %v1766 = vadd.f32 %v1755, %v1760
      %v1767 = vadd.f32 %v1756, %v1760
      %v1768 = vadd.f32 %v1757, %v1760
      %v1769 = vadd.f32 %v1758, %v1760
      %v1770 = vpack.c.bf16 %v1763, %v1762
      %v1771 = vpack.c.bf16 %v1765, %v1764
      %v1772 = vpack.c.bf16 %v1767, %v1766
      %v1773 = vpack.c.bf16 %v1769, %v1768
      %v1774 = vld [vmem:[%s9] sm:$0xf]
      %v1775 = vld [vmem:[%s9 + $0x4] sm:$0xf]
      %v1776 = vld [vmem:[%s9 + $0x8] sm:$0xf]
      %v1777 = vld [vmem:[%s9 + $0xc] sm:$0xf]
      %v1778 = vld [vmem:[%s10] sm:$0x1]
      %v1780 = vperm.slane %v1778, 0
      %v1786 = vunpack.c.l.b16 %v1774
      %v1787 = vunpack.c.l.b16 %v1775
      %v1788 = vunpack.c.l.b16 %v1776
      %v1789 = vunpack.c.l.b16 %v1777
      %v1790 = vpack.c.b16 %v1787, %v1786
      %v1791 = vpack.c.b16 %v1789, %v1788
      %v1795 = vsel %vm479, %v1770, 0
      %v1798 = vsel %vm479, %v1771, 0
      %v1801 = vsel %vm479, %v1772, 0
      %v1804 = vsel %vm479, %v1773, 0
      %1806 = vmatpush.bf16.msra.mxu0 0
      %1807 = vmatpush.bf16.msra.mxu0 0
      %1808 = vmatpush.bf16.msra.mxu0 0
      %1809 = vmatpush.bf16.msra.mxu0 0
      %1810 = vmatpush.bf16.msra.mxu0 0
      %1811 = vmatpush.bf16.msra.mxu0 0
      %1812 = vmatpush.bf16.msra.mxu0 %v1791
      %1813 = vmatpush.bf16.msra.mxu0 %v1790
      %1814 = vmatmul.bf16.gmra.mxu0 %v1795
      %v1815 = vpop.f32.mrf.mxu0
      %v1816 = vadd.f32 %v1780, %v1815
      %v1817 = vpop.f32.mrf.mxu0
      %v1818 = vadd.f32 %v1780, %v1817
      %1819 = vmatmul.bf16.gmra.mxu0 %v1798
      %v1820 = vpop.f32.mrf.mxu0
      %v1821 = vadd.f32 %v1780, %v1820
      %v1822 = vpop.f32.mrf.mxu0
      %v1823 = vadd.f32 %v1780, %v1822
      %1824 = vmatmul.bf16.gmra.mxu0 %v1801
      %v1825 = vpop.f32.mrf.mxu0
      %v1826 = vadd.f32 %v1780, %v1825
      %v1827 = vpop.f32.mrf.mxu0
      %v1828 = vadd.f32 %v1780, %v1827
      %1829 = vmatmul.bf16.gmra.mxu0 %v1804
      %v1830 = vpop.f32.mrf.mxu0
      %v1831 = vadd.f32 %v1780, %v1830
      %v1832 = vpop.f32.mrf.mxu0
      %v1833 = vadd.f32 %v1780, %v1832
      %1834 = vdwg.mxu0
      %v1835 = vmul.f32 %v1816, 0.5
      %v1836 = vmul.f32 %v1818, 0.5
      %v1837 = vmul.f32 %v1821, 0.5
      %v1838 = vmul.f32 %v1823, 0.5
      %v1839 = vmul.f32 %v1826, 0.5
      %v1840 = vmul.f32 %v1828, 0.5
      %v1841 = vmul.f32 %v1831, 0.5
      %v1842 = vmul.f32 %v1833, 0.5
      %v1843 = vmul.f32 %v1816, 0.044715
      %v1844 = vmul.f32 %v1818, 0.044715
      %v1845 = vmul.f32 %v1821, 0.044715
      %v1846 = vmul.f32 %v1823, 0.044715
      %v1847 = vmul.f32 %v1826, 0.044715
      %v1848 = vmul.f32 %v1828, 0.044715
      %v1849 = vmul.f32 %v1831, 0.044715
      %v1850 = vmul.f32 %v1833, 0.044715
      %v1851 = vmul.f32 %v1843, %v1816
      %v1852 = vmul.f32 %v1844, %v1818
      %v1853 = vmul.f32 %v1845, %v1821
      %v1854 = vmul.f32 %v1846, %v1823
      %v1855 = vmul.f32 %v1847, %v1826
      %v1856 = vmul.f32 %v1848, %v1828
      %v1857 = vmul.f32 %v1849, %v1831
      %v1858 = vmul.f32 %v1850, %v1833
      %v1859 = vmul.f32 %v1851, %v1816
      %v1860 = vmul.f32 %v1852, %v1818
      %v1861 = vmul.f32 %v1853, %v1821
      %v1862 = vmul.f32 %v1854, %v1823
      %v1863 = vmul.f32 %v1855, %v1826
      %v1864 = vmul.f32 %v1856, %v1828
      %v1865 = vmul.f32 %v1857, %v1831
      %v1866 = vmul.f32 %v1858, %v1833
      %v1867 = vadd.f32 %v1816, %v1859
      %v1868 = vadd.f32 %v1818, %v1860
      %v1869 = vadd.f32 %v1821, %v1861
      %v1870 = vadd.f32 %v1823, %v1862
      %v1871 = vadd.f32 %v1826, %v1863
      %v1872 = vadd.f32 %v1828, %v1864
      %v1873 = vadd.f32 %v1831, %v1865
      %v1874 = vadd.f32 %v1833, %v1866
      %v1875 = vmul.f32 %v1867, 0.7978846
      %v1876 = vmul.f32 %v1868, 0.7978846
      %v1877 = vmul.f32 %v1869, 0.7978846
      %v1878 = vmul.f32 %v1870, 0.7978846
      %v1879 = vmul.f32 %v1871, 0.7978846
      %v1880 = vmul.f32 %v1872, 0.7978846
      %v1881 = vmul.f32 %v1873, 0.7978846
      %v1882 = vmul.f32 %v1874, 0.7978846
      %v1883 = vtanh.pop %v1875
      %v1884 = vtanh.pop %v1876
      %v1885 = vtanh.pop %v1877
      %v1886 = vtanh.pop %v1878
      %v1887 = vtanh.pop %v1879
      %v1888 = vtanh.pop %v1880
      %v1889 = vtanh.pop %v1881
      %v1890 = vtanh.pop %v1882
      %v1891 = vadd.f32 %v1883, 1.0
      %v1892 = vadd.f32 %v1884, 1.0
      %v1893 = vadd.f32 %v1885, 1.0
      %v1894 = vadd.f32 %v1886, 1.0
      %v1895 = vadd.f32 %v1887, 1.0
      %v1896 = vadd.f32 %v1888, 1.0
      %v1897 = vadd.f32 %v1889, 1.0
      %v1898 = vadd.f32 %v1890, 1.0
      %v1899 = vmul.f32 %v1835, %v1891
      %v1900 = vmul.f32 %v1836, %v1892
      %v1901 = vmul.f32 %v1837, %v1893
      %v1902 = vmul.f32 %v1838, %v1894
      %v1903 = vmul.f32 %v1839, %v1895
      %v1904 = vmul.f32 %v1840, %v1896
      %v1905 = vmul.f32 %v1841, %v1897
      %v1906 = vmul.f32 %v1842, %v1898
      %v1907 = vpack.c.bf16 %v1900, %v1899
      %v1908 = vpack.c.bf16 %v1902, %v1901
      %v1909 = vpack.c.bf16 %v1904, %v1903
      %v1910 = vpack.c.bf16 %v1906, %v1905
      %v1911 = vld [vmem:[%s11] sm:$0xf]
      %v1912 = vld [vmem:[%s11 + $0x4] sm:$0xf]
      %v1913 = vld [vmem:[%s11 + $0x8] sm:$0xf]
      %v1914 = vld [vmem:[%s11 + $0xc] sm:$0xf]
      %v1915 = vld [vmem:[%s11 + $0x10] sm:$0xf]
      %v1916 = vld [vmem:[%s11 + $0x14] sm:$0xf]
      %v1917 = vld [vmem:[%s11 + $0x18] sm:$0xf]
      %v1918 = vld [vmem:[%s11 + $0x1c] sm:$0xf]
      %v1919 = vld [vmem:[%s11 + $0x20] sm:$0xf]
      %v1920 = vld [vmem:[%s11 + $0x24] sm:$0xf]
      %v1921 = vld [vmem:[%s11 + $0x28] sm:$0xf]
      %v1922 = vld [vmem:[%s11 + $0x2c] sm:$0xf]
      %v1923 = vld [vmem:[%s11 + $0x30] sm:$0xf]
      %v1924 = vld [vmem:[%s11 + $0x34] sm:$0xf]
      %v1925 = vld [vmem:[%s11 + $0x38] sm:$0xf]
      %v1926 = vld [vmem:[%s11 + $0x3c] sm:$0xf]
      %v1927 = vld [vmem:[%s12] sm:$0x1]
      %v1929 = vperm.slane %v1927, 0
      %v1947 = vunpack.c.l.b16 %v1911
      %v1948 = vunpack.c.l.b16 %v1912
      %v1949 = vunpack.c.l.b16 %v1913
      %v1950 = vunpack.c.l.b16 %v1914
      %v1951 = vunpack.c.l.b16 %v1915
      %v1952 = vunpack.c.l.b16 %v1916
      %v1953 = vunpack.c.l.b16 %v1917
      %v1954 = vunpack.c.l.b16 %v1918
      %v1955 = vunpack.c.l.b16 %v1919
      %v1956 = vunpack.c.l.b16 %v1920
      %v1957 = vunpack.c.l.b16 %v1921
      %v1958 = vunpack.c.l.b16 %v1922
      %v1959 = vunpack.c.l.b16 %v1923
      %v1960 = vunpack.c.l.b16 %v1924
      %v1961 = vunpack.c.l.b16 %v1925
      %v1962 = vunpack.c.l.b16 %v1926
      %v1963 = vpack.c.b16 %v1948, %v1947
      %v1964 = vpack.c.b16 %v1950, %v1949
      %v1965 = vpack.c.b16 %v1952, %v1951
      %v1966 = vpack.c.b16 %v1954, %v1953
      %v1967 = vpack.c.b16 %v1956, %v1955
      %v1968 = vpack.c.b16 %v1958, %v1957
      %v1969 = vpack.c.b16 %v1960, %v1959
      %v1970 = vpack.c.b16 %v1962, %v1961
      %1979 = vmatpush.bf16.msra.mxu0 %v1970
      %1980 = vmatpush.bf16.msra.mxu0 %v1969
      %1981 = vmatpush.bf16.msra.mxu0 %v1968
      %1982 = vmatpush.bf16.msra.mxu0 %v1967
      %1983 = vmatpush.bf16.msra.mxu0 %v1966
      %1984 = vmatpush.bf16.msra.mxu0 %v1965
      %1985 = vmatpush.bf16.msra.mxu0 %v1964
      %1986 = vmatpush.bf16.msra.mxu0 %v1963
      %1987 = vmatmul.bf16.gmra.mxu0 %v1907
      %v1988 = vpop.f32.mrf.mxu0
      %v1989 = vadd.f32 %v1929, %v1988
      %v1990 = vpop.f32.mrf.mxu0
      %v1991 = vadd.f32 %v1929, %v1990
      %1992 = vmatmul.bf16.gmra.mxu0 %v1908
      %v1993 = vpop.f32.mrf.mxu0
      %v1994 = vadd.f32 %v1929, %v1993
      %v1995 = vpop.f32.mrf.mxu0
      %v1996 = vadd.f32 %v1929, %v1995
      %1997 = vmatmul.bf16.gmra.mxu0 %v1909
      %v1998 = vpop.f32.mrf.mxu0
      %v1999 = vadd.f32 %v1929, %v1998
      %v2000 = vpop.f32.mrf.mxu0
      %v2001 = vadd.f32 %v1929, %v2000
      %2002 = vmatmul.bf16.gmra.mxu0 %v1910
      %v2003 = vpop.f32.mrf.mxu0
      %v2004 = vadd.f32 %v1929, %v2003
      %v2005 = vpop.f32.mrf.mxu0
      %v2006 = vadd.f32 %v1929, %v2005
      %2007 = vdwg.mxu0
      %v2008 = vadd.f32 %v1562, %v1989
      %v2009 = vadd.f32 %v1563, %v1991
      %v2010 = vadd.f32 %v1564, %v1994
      %v2011 = vadd.f32 %v1565, %v1996
      %v2012 = vadd.f32 %v1566, %v1999
      %v2013 = vadd.f32 %v1567, %v2001
      %v2014 = vadd.f32 %v1568, %v2004
      %v2015 = vadd.f32 %v1569, %v2006
      %2016 = vst.msk [vmem:[%s467] sm:$0xff] %vm479, %v2008
      %2017 = vst.msk [vmem:[%s467 + $0x8] sm:$0xff] %vm479, %v2009
      %2018 = vst.msk [vmem:[%s467 + $0x10] sm:$0xff] %vm479, %v2010
      %2019 = vst.msk [vmem:[%s467 + $0x18] sm:$0xff] %vm479, %v2011
      %2020 = vst.msk [vmem:[%s467 + $0x20] sm:$0xff] %vm479, %v2012
      %2021 = vst.msk [vmem:[%s467 + $0x28] sm:$0xff] %vm479, %v2013
      %2022 = vst.msk [vmem:[%s467 + $0x30] sm:$0xff] %vm479, %v2014
      %2023 = vst.msk [vmem:[%s467 + $0x38] sm:$0xff] %vm479, %v2015
      %p2024 = scmp.lt.s32.totalorder %s25, 1
      %s2025 = scalar_select %p2024, %s25, 1
      %s2026 = smul.addr %s2025, 8
      %s2027 = smul.addr %s2026, 8
      %s2028 = scalar_lea.vmem %s14, %s2027
      // Predicated region
      $region77: #{hvit_discriminator.4} parent=75 // pred_check
        %p2029 = pneg %p342
      $region78: #{hvit_discriminator.4} parent=75 // pred_check_branch
        %2031 = sbr.rel (%p2029) target = $region80
      $region79: #{hvit_discriminator.4} parent=75 // pred_region
        _
      $region80: #{hvit_discriminator.4} parent=75 // pred_fallthru
        _
    $region76: #{hvit_discriminator.4} parent=5 // pred_fallthru
      _
    %p2032 = scmp.le.s32.totalorder 2, %s20
    // Predicated region
    $region81: #{hvit_discriminator.4} parent=5 // pred_check
      %p2033 = pneg %p2032
    $region82: #{hvit_discriminator.4} parent=5 // pred_check_branch
      %2035 = sbr.rel (%p2033) target = $region84
    $region83: #{hvit_discriminator.4} parent=5 // pred_region
      %s2036 = ssub.s32 %s20, 2
      // Predicated region
      $region85: #{hvit_discriminator.4} parent=83 // pred_check
        %p2037 = pneg %p348
      $region86: #{hvit_discriminator.4} parent=83 // pred_check_branch
        %2039 = sbr.rel (%p2037) target = $region88
      $region87: #{hvit_discriminator.4} parent=83 // pred_region
        %p2040 = scmp.lt.s32.totalorder %s26, 1
        %s2041 = scalar_select %p2040, %s26, 1
        %s2042 = smul.addr %s2041, 8
        %s2043 = smul.addr %s2042, 8
        %s2044 = scalar_lea.vmem %s14, %s2043
      $region88: #{hvit_discriminator.4} parent=83 // pred_fallthru
        _
    $region84: #{hvit_discriminator.4} parent=5 // pred_fallthru
      _
  $region6: #{hvit_discriminator.4} parent=0 // loop_footer
    %s24 = sadd.s32 1, %s20
  $region7: #{hvit_discriminator.4} parent=0 // loop_footer_branch
    %19 = sbr.rel target = $region3
  $region8: #{hvit_discriminator.4} parent=0 // loop_exit
    _

// kernel: hvit_discriminator.5
$region0: #{hvit_discriminator.5}
  #allocation0 [shape = 'u32[]', space=smem, size = 0x4, offset = 0x4, fixed_abs, tag = 'smem constant byte address 0x4 - core index']
  #allocation1 [shape = 'u32[72,128]{1,0:T(1,128)}', space=vmem, size = 0x9000, scoped, tag = 'internal scratch']
  #allocation2 [shape = 'f32[1,1]{1,0:T(1,128)S(1)}', space=vmem, size = 0x200, scoped, tag = 'scoped memory for hvit_discriminator.5']
  %s0 = inlined_call_operand.vmem [shape: f32[2,16,128], index: 0, kind: input, shape index: {}]
  %s1 = inlined_call_operand.vmem [shape: bf16[128,64], index: 1, kind: input, shape index: {}]
  %s2 = inlined_call_operand.vmem [shape: f32[1,64], index: 2, kind: input, shape index: {}]
  %s3 = inlined_call_operand.vmem [shape: f32[1,64], index: 3, kind: input, shape index: {}]
  %s4 = inlined_call_operand.vmem [shape: f32[1,64], index: 4, kind: input, shape index: {}]
  %s5 = inlined_call_operand.vmem [shape: bf16[12,64,16], index: 5, kind: input, shape index: {}]
  %s6 = inlined_call_operand.vmem [shape: f32[12,1,16], index: 6, kind: input, shape index: {}]
  %s7 = inlined_call_operand.vmem [shape: bf16[4,16,64], index: 7, kind: input, shape index: {}]
  %s8 = inlined_call_operand.vmem [shape: f32[1,64], index: 8, kind: input, shape index: {}]
  %s9 = inlined_call_operand.vmem [shape: f32[1,64], index: 9, kind: input, shape index: {}]
  %s10 = inlined_call_operand.vmem [shape: f32[1,64], index: 10, kind: input, shape index: {}]
  %s11 = inlined_call_operand.vmem [shape: bf16[64,256], index: 11, kind: input, shape index: {}]
  %s12 = inlined_call_operand.vmem [shape: f32[1,256], index: 12, kind: input, shape index: {}]
  %s13 = inlined_call_operand.vmem [shape: bf16[256,64], index: 13, kind: input, shape index: {}]
  %s14 = inlined_call_operand.vmem [shape: f32[1,64], index: 14, kind: input, shape index: {}]
  %s15 = inlined_call_operand.vmem [shape: bf16[64,1], index: 15, kind: input, shape index: {}]
  %s16 = inlined_call_operand.<no memory space> [shape: f32[1,1], index: 16, kind: input, shape index: {}]
  %s17 = inlined_call_operand.vmem [shape: f32[2,16,1], index: 17, kind: output, shape index: {}]
  %s18 = sld [smem:[#allocation0]]
  $region101: #{hvit_discriminator.5} parent=0
    _
  %s20 = ssub.s32 1, %s18
  %s21 = scalar_select 0, %s20, %s18
  %v22 = vstv %s16
  %23 = vst [vmem:[#allocation2] sm:$0x1] %v22
  loop: start=0, step=1, limit=4
  $region2: #{hvit_discriminator.5} parent=0 // loop_pre_header
    _
  $region3: #{hvit_discriminator.5} parent=0 // loop_header
    %s25 = sphi 0, %s29
    %p26 = scmp.ge.s32.totalorder %s25, 4
    %s35 = sphi 0, %s37
    %s38 = sphi 0, %s35
    %s39 = sphi 0, %s38
    %s55 = sphi 0, %s39
    %s59 = sphi 0, %s59
    %s61 = sphi 0, %s59
    %s62 = sphi 0, %s61
    %s76 = sphi 0, %s62
    %s80 = sphi 0, %s80
    %s82 = sphi 0, %s80
    %s83 = sphi 0, %s82
    %s97 = sphi 0, %s83
    %s101 = sphi 0, %s101
    %s103 = sphi 0, %s101
    %s104 = sphi 0, %s103
    %s118 = sphi 0, %s104
    %s122 = sphi 0, %s122
    %s124 = sphi 0, %s122
    %s125 = sphi 0, %s124
    %s139 = sphi 0, %s125
    %s143 = sphi 0, %s143
    %s145 = sphi 0, %s143
    %s146 = sphi 0, %s145
    %s160 = sphi 0, %s146
    %s164 = sphi 0, %s164
    %s166 = sphi 0, %s164
    %s167 = sphi 0, %s166
    %s181 = sphi 0, %s167
    %s185 = sphi 0, %s185
    %s187 = sphi 0, %s185
    %s188 = sphi 0, %s187
    %s202 = sphi 0, %s188
    %s206 = sphi 0, %s206
    %s208 = sphi 0, %s206
    %s209 = sphi 0, %s208
    %s223 = sphi 0, %s209
    %s227 = sphi 0, %s227
    %s229 = sphi 0, %s227
    %s230 = sphi 0, %s229
    %s244 = sphi 0, %s230
    %s248 = sphi 0, %s248
    %s250 = sphi 0, %s248
    %s251 = sphi 0, %s250
    %s265 = sphi 0, %s251
    %s269 = sphi 0, %s269
    %s271 = sphi 0, %s269
    %s272 = sphi 0, %s271
    %s286 = sphi 0, %s272
    %s290 = sphi 0, %s290
    %s292 = sphi 0, %s290
    %s293 = sphi 0, %s292
    %s307 = sphi 0, %s293
    %s311 = sphi 0, %s311
    %s313 = sphi 0, %s311
    %s314 = sphi 0, %s313
    %s328 = sphi 0, %s314
    %s332 = sphi 0, %s332
    %s334 = sphi 0, %s332
    %s335 = sphi 0, %s334
    %s349 = sphi 0, %s335
    %s353 = sphi 0, %s353
    %s355 = sphi 0, %s353
    %s356 = sphi 0, %s355
    %s370 = sphi 0, %s356
    %s374 = sphi 0, %s374
    %s376 = sphi 0, %s374
    %s377 = sphi 0, %s376
    %s391 = sphi 0, %s377
    %s397 = sphi 0, %s399
    %s400 = sphi 0, %s397
    %s401 = sphi 0, %s400
    %s417 = sphi 0, %s401
  $region4: #{hvit_discriminator.5} parent=0 // loop_header_branch
    %28 = sbr.rel (%p26) target = $region8
  $region5: #{hvit_discriminator.5} parent=0 // loop_body
    %s30 = ssub.s32 %s25, 1
    %s31 = ssub.s32 %s25, 2
    %s32 = sadd.s32 %s25, 1
    %s33 = ssub.s32 %s25, %s32
    %p34 = scmp.eq.s32.totalorder %s33, 0
    %s36 = sadd.s32 %s35, 1
    %s37 = scalar_select %p34, %s35, %s36
    %p40 = pneg %p34
    %p41 = scmp.eq.s32.totalorder %s25, 1
    %p42 = por %p40, %p41
    %p43 = scmp.ne.s32.totalorder %s35, %s38
    %p44 = scmp.eq.s32.totalorder %s25, 0
    %p45 = por %p43, %p44
    %p46 = scmp.ne.s32.totalorder %s35, %s38
    %p47 = scmp.eq.s32.totalorder %s30, 1
    %p48 = por %p46, %p47
    %p49 = scmp.ne.s32.totalorder %s38, %s39
    %p50 = scmp.eq.s32.totalorder %s30, 0
    %p51 = por %p49, %p50
    %p52 = scmp.ne.s32.totalorder %s38, %s39
    %p53 = scmp.eq.s32.totalorder %s31, 1
    %p54 = por %p52, %p53
    %p56 = scmp.ne.s32.totalorder %s39, %s55
    %p57 = scmp.eq.s32.totalorder %s31, 0
    %p58 = por %p56, %p57
    %s60 = sadd.s32 %s59, 1
    %p63 = scmp.eq.s32.totalorder %s25, 1
    %p64 = scmp.ne.s32.totalorder %s59, %s61
    %p65 = scmp.eq.s32.totalorder %s25, 0
    %p66 = por %p64, %p65
    %p67 = scmp.ne.s32.totalorder %s59, %s61
    %p68 = scmp.eq.s32.totalorder %s30, 1
    %p69 = por %p67, %p68
    %p70 = scmp.ne.s32.totalorder %s61, %s62
    %p71 = scmp.eq.s32.totalorder %s30, 0
    %p72 = por %p70, %p71
    %p73 = scmp.ne.s32.totalorder %s61, %s62
    %p74 = scmp.eq.s32.totalorder %s31, 1
    %p75 = por %p73, %p74
    %p77 = scmp.ne.s32.totalorder %s62, %s76
    %p78 = scmp.eq.s32.totalorder %s31, 0
    %p79 = por %p77, %p78
    %s81 = sadd.s32 %s80, 1
    %p84 = scmp.eq.s32.totalorder %s25, 1
    %p85 = scmp.ne.s32.totalorder %s80, %s82
    %p86 = scmp.eq.s32.totalorder %s25, 0
    %p87 = por %p85, %p86
    %p88 = scmp.ne.s32.totalorder %s80, %s82
    %p89 = scmp.eq.s32.totalorder %s30, 1
    %p90 = por %p88, %p89
    %p91 = scmp.ne.s32.totalorder %s82, %s83
    %p92 = scmp.eq.s32.totalorder %s30, 0
    %p93 = por %p91, %p92
    %p94 = scmp.ne.s32.totalorder %s82, %s83
    %p95 = scmp.eq.s32.totalorder %s31, 1
    %p96 = por %p94, %p95
    %p98 = scmp.ne.s32.totalorder %s83, %s97
    %p99 = scmp.eq.s32.totalorder %s31, 0
    %p100 = por %p98, %p99
    %s102 = sadd.s32 %s101, 1
    %p105 = scmp.eq.s32.totalorder %s25, 1
    %p106 = scmp.ne.s32.totalorder %s101, %s103
    %p107 = scmp.eq.s32.totalorder %s25, 0
    %p108 = por %p106, %p107
    %p109 = scmp.ne.s32.totalorder %s101, %s103
    %p110 = scmp.eq.s32.totalorder %s30, 1
    %p111 = por %p109, %p110
    %p112 = scmp.ne.s32.totalorder %s103, %s104
    %p113 = scmp.eq.s32.totalorder %s30, 0
    %p114 = por %p112, %p113
    %p115 = scmp.ne.s32.totalorder %s103, %s104
    %p116 = scmp.eq.s32.totalorder %s31, 1
    %p117 = por %p115, %p116
    %p119 = scmp.ne.s32.totalorder %s104, %s118
    %p120 = scmp.eq.s32.totalorder %s31, 0
    %p121 = por %p119, %p120
    %s123 = sadd.s32 %s122, 1
    %p126 = scmp.eq.s32.totalorder %s25, 1
    %p127 = scmp.ne.s32.totalorder %s122, %s124
    %p128 = scmp.eq.s32.totalorder %s25, 0
    %p129 = por %p127, %p128
    %p130 = scmp.ne.s32.totalorder %s122, %s124
    %p131 = scmp.eq.s32.totalorder %s30, 1
    %p132 = por %p130, %p131
    %p133 = scmp.ne.s32.totalorder %s124, %s125
    %p134 = scmp.eq.s32.totalorder %s30, 0
    %p135 = por %p133, %p134
    %p136 = scmp.ne.s32.totalorder %s124, %s125
    %p137 = scmp.eq.s32.totalorder %s31, 1
    %p138 = por %p136, %p137
    %p140 = scmp.ne.s32.totalorder %s125, %s139
    %p141 = scmp.eq.s32.totalorder %s31, 0
    %p142 = por %p140, %p141
    %s144 = sadd.s32 %s143, 1
    %p147 = scmp.eq.s32.totalorder %s25, 1
    %p148 = scmp.ne.s32.totalorder %s143, %s145
    %p149 = scmp.eq.s32.totalorder %s25, 0
    %p150 = por %p148, %p149
    %p151 = scmp.ne.s32.totalorder %s143, %s145
    %p152 = scmp.eq.s32.totalorder %s30, 1
    %p153 = por %p151, %p152
    %p154 = scmp.ne.s32.totalorder %s145, %s146
    %p155 = scmp.eq.s32.totalorder %s30, 0
    %p156 = por %p154, %p155
    %p157 = scmp.ne.s32.totalorder %s145, %s146
    %p158 = scmp.eq.s32.totalorder %s31, 1
    %p159 = por %p157, %p158
    %p161 = scmp.ne.s32.totalorder %s146, %s160
    %p162 = scmp.eq.s32.totalorder %s31, 0
    %p163 = por %p161, %p162
    %s165 = sadd.s32 %s164, 1
    %p168 = scmp.eq.s32.totalorder %s25, 1
    %p169 = scmp.ne.s32.totalorder %s164, %s166
    %p170 = scmp.eq.s32.totalorder %s25, 0
    %p171 = por %p169, %p170
    %p172 = scmp.ne.s32.totalorder %s164, %s166
    %p173 = scmp.eq.s32.totalorder %s30, 1
    %p174 = por %p172, %p173
    %p175 = scmp.ne.s32.totalorder %s166, %s167
    %p176 = scmp.eq.s32.totalorder %s30, 0
    %p177 = por %p175, %p176
    %p178 = scmp.ne.s32.totalorder %s166, %s167
    %p179 = scmp.eq.s32.totalorder %s31, 1
    %p180 = por %p178, %p179
    %p182 = scmp.ne.s32.totalorder %s167, %s181
    %p183 = scmp.eq.s32.totalorder %s31, 0
    %p184 = por %p182, %p183
    %s186 = sadd.s32 %s185, 1
    %p189 = scmp.eq.s32.totalorder %s25, 1
    %p190 = scmp.ne.s32.totalorder %s185, %s187
    %p191 = scmp.eq.s32.totalorder %s25, 0
    %p192 = por %p190, %p191
    %p193 = scmp.ne.s32.totalorder %s185, %s187
    %p194 = scmp.eq.s32.totalorder %s30, 1
    %p195 = por %p193, %p194
    %p196 = scmp.ne.s32.totalorder %s187, %s188
    %p197 = scmp.eq.s32.totalorder %s30, 0
    %p198 = por %p196, %p197
    %p199 = scmp.ne.s32.totalorder %s187, %s188
    %p200 = scmp.eq.s32.totalorder %s31, 1
    %p201 = por %p199, %p200
    %p203 = scmp.ne.s32.totalorder %s188, %s202
    %p204 = scmp.eq.s32.totalorder %s31, 0
    %p205 = por %p203, %p204
    %s207 = sadd.s32 %s206, 1
    %p210 = scmp.eq.s32.totalorder %s25, 1
    %p211 = scmp.ne.s32.totalorder %s206, %s208
    %p212 = scmp.eq.s32.totalorder %s25, 0
    %p213 = por %p211, %p212
    %p214 = scmp.ne.s32.totalorder %s206, %s208
    %p215 = scmp.eq.s32.totalorder %s30, 1
    %p216 = por %p214, %p215
    %p217 = scmp.ne.s32.totalorder %s208, %s209
    %p218 = scmp.eq.s32.totalorder %s30, 0
    %p219 = por %p217, %p218
    %p220 = scmp.ne.s32.totalorder %s208, %s209
    %p221 = scmp.eq.s32.totalorder %s31, 1
    %p222 = por %p220, %p221
    %p224 = scmp.ne.s32.totalorder %s209, %s223
    %p225 = scmp.eq.s32.totalorder %s31, 0
    %p226 = por %p224, %p225
    %s228 = sadd.s32 %s227, 1
    %p231 = scmp.eq.s32.totalorder %s25, 1
    %p232 = scmp.ne.s32.totalorder %s227, %s229
    %p233 = scmp.eq.s32.totalorder %s25, 0
    %p234 = por %p232, %p233
    %p235 = scmp.ne.s32.totalorder %s227, %s229
    %p236 = scmp.eq.s32.totalorder %s30, 1
    %p237 = por %p235, %p236
    %p238 = scmp.ne.s32.totalorder %s229, %s230
    %p239 = scmp.eq.s32.totalorder %s30, 0
    %p240 = por %p238, %p239
    %p241 = scmp.ne.s32.totalorder %s229, %s230
    %p242 = scmp.eq.s32.totalorder %s31, 1
    %p243 = por %p241, %p242
    %p245 = scmp.ne.s32.totalorder %s230, %s244
    %p246 = scmp.eq.s32.totalorder %s31, 0
    %p247 = por %p245, %p246
    %s249 = sadd.s32 %s248, 1
    %p252 = scmp.eq.s32.totalorder %s25, 1
    %p253 = scmp.ne.s32.totalorder %s248, %s250
    %p254 = scmp.eq.s32.totalorder %s25, 0
    %p255 = por %p253, %p254
    %p256 = scmp.ne.s32.totalorder %s248, %s250
    %p257 = scmp.eq.s32.totalorder %s30, 1
    %p258 = por %p256, %p257
    %p259 = scmp.ne.s32.totalorder %s250, %s251
    %p260 = scmp.eq.s32.totalorder %s30, 0
    %p261 = por %p259, %p260
    %p262 = scmp.ne.s32.totalorder %s250, %s251
    %p263 = scmp.eq.s32.totalorder %s31, 1
    %p264 = por %p262, %p263
    %p266 = scmp.ne.s32.totalorder %s251, %s265
    %p267 = scmp.eq.s32.totalorder %s31, 0
    %p268 = por %p266, %p267
    %s270 = sadd.s32 %s269, 1
    %p273 = scmp.eq.s32.totalorder %s25, 1
    %p274 = scmp.ne.s32.totalorder %s269, %s271
    %p275 = scmp.eq.s32.totalorder %s25, 0
    %p276 = por %p274, %p275
    %p277 = scmp.ne.s32.totalorder %s269, %s271
    %p278 = scmp.eq.s32.totalorder %s30, 1
    %p279 = por %p277, %p278
    %p280 = scmp.ne.s32.totalorder %s271, %s272
    %p281 = scmp.eq.s32.totalorder %s30, 0
    %p282 = por %p280, %p281
    %p283 = scmp.ne.s32.totalorder %s271, %s272
    %p284 = scmp.eq.s32.totalorder %s31, 1
    %p285 = por %p283, %p284
    %p287 = scmp.ne.s32.totalorder %s272, %s286
    %p288 = scmp.eq.s32.totalorder %s31, 0
    %p289 = por %p287, %p288
    %s291 = sadd.s32 %s290, 1
    %p294 = scmp.eq.s32.totalorder %s25, 1
    %p295 = scmp.ne.s32.totalorder %s290, %s292
    %p296 = scmp.eq.s32.totalorder %s25, 0
    %p297 = por %p295, %p296
    %p298 = scmp.ne.s32.totalorder %s290, %s292
    %p299 = scmp.eq.s32.totalorder %s30, 1
    %p300 = por %p298, %p299
    %p301 = scmp.ne.s32.totalorder %s292, %s293
    %p302 = scmp.eq.s32.totalorder %s30, 0
    %p303 = por %p301, %p302
    %p304 = scmp.ne.s32.totalorder %s292, %s293
    %p305 = scmp.eq.s32.totalorder %s31, 1
    %p306 = por %p304, %p305
    %p308 = scmp.ne.s32.totalorder %s293, %s307
    %p309 = scmp.eq.s32.totalorder %s31, 0
    %p310 = por %p308, %p309
    %s312 = sadd.s32 %s311, 1
    %p315 = scmp.eq.s32.totalorder %s25, 1
    %p316 = scmp.ne.s32.totalorder %s311, %s313
    %p317 = scmp.eq.s32.totalorder %s25, 0
    %p318 = por %p316, %p317
    %p319 = scmp.ne.s32.totalorder %s311, %s313
    %p320 = scmp.eq.s32.totalorder %s30, 1
    %p321 = por %p319, %p320
    %p322 = scmp.ne.s32.totalorder %s313, %s314
    %p323 = scmp.eq.s32.totalorder %s30, 0
    %p324 = por %p322, %p323
    %p325 = scmp.ne.s32.totalorder %s313, %s314
    %p326 = scmp.eq.s32.totalorder %s31, 1
    %p327 = por %p325, %p326
    %p329 = scmp.ne.s32.totalorder %s314, %s328
    %p330 = scmp.eq.s32.totalorder %s31, 0
    %p331 = por %p329, %p330
    %s333 = sadd.s32 %s332, 1
    %p336 = scmp.eq.s32.totalorder %s25, 1
    %p337 = scmp.ne.s32.totalorder %s332, %s334
    %p338 = scmp.eq.s32.totalorder %s25, 0
    %p339 = por %p337, %p338
    %p340 = scmp.ne.s32.totalorder %s332, %s334
    %p341 = scmp.eq.s32.totalorder %s30, 1
    %p342 = por %p340, %p341
    %p343 = scmp.ne.s32.totalorder %s334, %s335
    %p344 = scmp.eq.s32.totalorder %s30, 0
    %p345 = por %p343, %p344
    %p346 = scmp.ne.s32.totalorder %s334, %s335
    %p347 = scmp.eq.s32.totalorder %s31, 1
    %p348 = por %p346, %p347
    %p350 = scmp.ne.s32.totalorder %s335, %s349
    %p351 = scmp.eq.s32.totalorder %s31, 0
    %p352 = por %p350, %p351
    %s354 = sadd.s32 %s353, 1
    %p357 = scmp.eq.s32.totalorder %s25, 1
    %p358 = scmp.ne.s32.totalorder %s353, %s355
    %p359 = scmp.eq.s32.totalorder %s25, 0
    %p360 = por %p358, %p359
    %p361 = scmp.ne.s32.totalorder %s353, %s355
    %p362 = scmp.eq.s32.totalorder %s30, 1
    %p363 = por %p361, %p362
    %p364 = scmp.ne.s32.totalorder %s355, %s356
    %p365 = scmp.eq.s32.totalorder %s30, 0
    %p366 = por %p364, %p365
    %p367 = scmp.ne.s32.totalorder %s355, %s356
    %p368 = scmp.eq.s32.totalorder %s31, 1
    %p369 = por %p367, %p368
    %p371 = scmp.ne.s32.totalorder %s356, %s370
    %p372 = scmp.eq.s32.totalorder %s31, 0
    %p373 = por %p371, %p372
    %s375 = sadd.s32 %s374, 1
    %p378 = scmp.eq.s32.totalorder %s25, 1
    %p379 = scmp.ne.s32.totalorder %s374, %s376
    %p380 = scmp.eq.s32.totalorder %s25, 0
    %p381 = por %p379, %p380
    %p382 = scmp.ne.s32.totalorder %s374, %s376
    %p383 = scmp.eq.s32.totalorder %s30, 1
    %p384 = por %p382, %p383
    %p385 = scmp.ne.s32.totalorder %s376, %s377
    %p386 = scmp.eq.s32.totalorder %s30, 0
    %p387 = por %p385, %p386
    %p388 = scmp.ne.s32.totalorder %s376, %s377
    %p389 = scmp.eq.s32.totalorder %s31, 1
    %p390 = por %p388, %p389
    %p392 = scmp.ne.s32.totalorder %s377, %s391
    %p393 = scmp.eq.s32.totalorder %s31, 0
    %p394 = por %p392, %p393
    %s395 = ssub.s32 %s25, %s32
    %p396 = scmp.eq.s32.totalorder %s395, 0
    %s398 = sadd.s32 %s397, 1
    %s399 = scalar_select %p396, %s397, %s398
    %p402 = pneg %p396
    %p403 = scmp.eq.s32.totalorder %s25, 1
    %p404 = por %p402, %p403
    %p405 = scmp.ne.s32.totalorder %s397, %s400
    %p406 = scmp.eq.s32.totalorder %s25, 0
    %p407 = por %p405, %p406
    %p408 = scmp.ne.s32.totalorder %s397, %s400
    %p409 = scmp.eq.s32.totalorder %s30, 1
    %p410 = por %p408, %p409
    %p411 = scmp.ne.s32.totalorder %s400, %s401
    %p412 = scmp.eq.s32.totalorder %s30, 0
    %p413 = por %p411, %p412
    %p414 = scmp.ne.s32.totalorder %s400, %s401
    %p415 = scmp.eq.s32.totalorder %s31, 1
    %p416 = por %p414, %p415
    %p418 = scmp.ne.s32.totalorder %s401, %s417
    %p419 = scmp.eq.s32.totalorder %s31, 0
    %p420 = por %p418, %p419
    %p421 = scmp.le.s32.totalorder 1, %s25
    %p422 = scmp.lt.s32.totalorder %s25, 3
    %p423 = pnand %p421, %p422
    %p424 = pneg %p423
    // Predicated region
    $region9: #{hvit_discriminator.5} parent=5 // pred_check
      _
    $region10: #{hvit_discriminator.5} parent=5 // pred_check_branch
      %426 = sbr.rel (%p423) target = $region12
    $region11: #{hvit_discriminator.5} parent=5 // pred_region
      %s427 = ssub.s32 %s25, 1
      // Predicated region
      $region13: #{hvit_discriminator.5} parent=11 // pred_check
        %p428 = pneg %p72
      $region14: #{hvit_discriminator.5} parent=11 // pred_check_branch
        %430 = sbr.rel (%p428) target = $region16
      $region15: #{hvit_discriminator.5} parent=11 // pred_region
        _
      $region16: #{hvit_discriminator.5} parent=11 // pred_fallthru
        _
      // Predicated region
      $region17: #{hvit_discriminator.5} parent=11 // pred_check
        %p431 = pneg %p93
      $region18: #{hvit_discriminator.5} parent=11 // pred_check_branch
        %433 = sbr.rel (%p431) target = $region20
      $region19: #{hvit_discriminator.5} parent=11 // pred_region
        _
      $region20: #{hvit_discriminator.5} parent=11 // pred_fallthru
        _
      // Predicated region
      $region21: #{hvit_discriminator.5} parent=11 // pred_check
        %p434 = pneg %p114
      $region22: #{hvit_discriminator.5} parent=11 // pred_check_branch
        %436 = sbr.rel (%p434) target = $region24
      $region23: #{hvit_discriminator.5} parent=11 // pred_region
        _
      $region24: #{hvit_discriminator.5} parent=11 // pred_fallthru
        _
      // Predicated region
      $region25: #{hvit_discriminator.5} parent=11 // pred_check
        %p437 = pneg %p135
      $region26: #{hvit_discriminator.5} parent=11 // pred_check_branch
        %439 = sbr.rel (%p437) target = $region28
      $region27: #{hvit_discriminator.5} parent=11 // pred_region
        _
      $region28: #{hvit_discriminator.5} parent=11 // pred_fallthru
        _
      // Predicated region
      $region29: #{hvit_discriminator.5} parent=11 // pred_check
        %p440 = pneg %p156
      $region30: #{hvit_discriminator.5} parent=11 // pred_check_branch
        %442 = sbr.rel (%p440) target = $region32
      $region31: #{hvit_discriminator.5} parent=11 // pred_region
        _
      $region32: #{hvit_discriminator.5} parent=11 // pred_fallthru
        _
      // Predicated region
      $region33: #{hvit_discriminator.5} parent=11 // pred_check
        %p443 = pneg %p177
      $region34: #{hvit_discriminator.5} parent=11 // pred_check_branch
        %445 = sbr.rel (%p443) target = $region36
      $region35: #{hvit_discriminator.5} parent=11 // pred_region
        _
      $region36: #{hvit_discriminator.5} parent=11 // pred_fallthru
        _
      // Predicated region
      $region37: #{hvit_discriminator.5} parent=11 // pred_check
        %p446 = pneg %p198
      $region38: #{hvit_discriminator.5} parent=11 // pred_check_branch
        %448 = sbr.rel (%p446) target = $region40
      $region39: #{hvit_discriminator.5} parent=11 // pred_region
        _
      $region40: #{hvit_discriminator.5} parent=11 // pred_fallthru
        _
      // Predicated region
      $region41: #{hvit_discriminator.5} parent=11 // pred_check
        %p449 = pneg %p219
      $region42: #{hvit_discriminator.5} parent=11 // pred_check_branch
        %451 = sbr.rel (%p449) target = $region44
      $region43: #{hvit_discriminator.5} parent=11 // pred_region
        _
      $region44: #{hvit_discriminator.5} parent=11 // pred_fallthru
        _
      // Predicated region
      $region45: #{hvit_discriminator.5} parent=11 // pred_check
        %p452 = pneg %p240
      $region46: #{hvit_discriminator.5} parent=11 // pred_check_branch
        %454 = sbr.rel (%p452) target = $region48
      $region47: #{hvit_discriminator.5} parent=11 // pred_region
        _
      $region48: #{hvit_discriminator.5} parent=11 // pred_fallthru
        _
      // Predicated region
      $region49: #{hvit_discriminator.5} parent=11 // pred_check
        %p455 = pneg %p261
      $region50: #{hvit_discriminator.5} parent=11 // pred_check_branch
        %457 = sbr.rel (%p455) target = $region52
      $region51: #{hvit_discriminator.5} parent=11 // pred_region
        _
      $region52: #{hvit_discriminator.5} parent=11 // pred_fallthru
        _
      // Predicated region
      $region53: #{hvit_discriminator.5} parent=11 // pred_check
        %p458 = pneg %p282
      $region54: #{hvit_discriminator.5} parent=11 // pred_check_branch
        %460 = sbr.rel (%p458) target = $region56
      $region55: #{hvit_discriminator.5} parent=11 // pred_region
        _
      $region56: #{hvit_discriminator.5} parent=11 // pred_fallthru
        _
      // Predicated region
      $region57: #{hvit_discriminator.5} parent=11 // pred_check
        %p461 = pneg %p303
      $region58: #{hvit_discriminator.5} parent=11 // pred_check_branch
        %463 = sbr.rel (%p461) target = $region60
      $region59: #{hvit_discriminator.5} parent=11 // pred_region
        _
      $region60: #{hvit_discriminator.5} parent=11 // pred_fallthru
        _
      // Predicated region
      $region61: #{hvit_discriminator.5} parent=11 // pred_check
        %p464 = pneg %p324
      $region62: #{hvit_discriminator.5} parent=11 // pred_check_branch
        %466 = sbr.rel (%p464) target = $region64
      $region63: #{hvit_discriminator.5} parent=11 // pred_region
        _
      $region64: #{hvit_discriminator.5} parent=11 // pred_fallthru
        _
      // Predicated region
      $region65: #{hvit_discriminator.5} parent=11 // pred_check
        %p467 = pneg %p345
      $region66: #{hvit_discriminator.5} parent=11 // pred_check_branch
        %469 = sbr.rel (%p467) target = $region68
      $region67: #{hvit_discriminator.5} parent=11 // pred_region
        _
      $region68: #{hvit_discriminator.5} parent=11 // pred_fallthru
        _
      // Predicated region
      $region69: #{hvit_discriminator.5} parent=11 // pred_check
        %p470 = pneg %p366
      $region70: #{hvit_discriminator.5} parent=11 // pred_check_branch
        %472 = sbr.rel (%p470) target = $region72
      $region71: #{hvit_discriminator.5} parent=11 // pred_region
        _
      $region72: #{hvit_discriminator.5} parent=11 // pred_fallthru
        _
      // Predicated region
      $region73: #{hvit_discriminator.5} parent=11 // pred_check
        %p473 = pneg %p387
      $region74: #{hvit_discriminator.5} parent=11 // pred_check_branch
        %475 = sbr.rel (%p473) target = $region76
      $region75: #{hvit_discriminator.5} parent=11 // pred_region
        _
      $region76: #{hvit_discriminator.5} parent=11 // pred_fallthru
        _
    $region12: #{hvit_discriminator.5} parent=5 // pred_fallthru
      _
    %p476 = scmp.lt.s32.totalorder %s25, 2
    // Predicated region
    $region77: #{hvit_discriminator.5} parent=5 // pred_check
      %p477 = pneg %p476
    $region78: #{hvit_discriminator.5} parent=5 // pred_check_branch
      %479 = sbr.rel (%p477) target = $region80
    $region79: #{hvit_discriminator.5} parent=5 // pred_region
      // Predicated region
      $region81: #{hvit_discriminator.5} parent=79 // pred_check
        %p480 = pneg %p45
      $region82: #{hvit_discriminator.5} parent=79 // pred_check_branch
        %482 = sbr.rel (%p480) target = $region84
      $region83: #{hvit_discriminator.5} parent=79 // pred_region
        %p483 = scmp.lt.s32.totalorder %s25, 1
        %s484 = scalar_select %p483, %s25, 1
        %s485 = smul.addr %s484, 2
        %s486 = smul.addr %s485, 8
        %s487 = scalar_lea.vmem %s0, %s486
      $region84: #{hvit_discriminator.5} parent=79 // pred_fallthru
        _
    $region80: #{hvit_discriminator.5} parent=5 // pred_fallthru
      _
    %p488 = scmp.le.s32.totalorder 1, %s25
    %p489 = scmp.lt.s32.totalorder %s25, 3
    %p490 = pnand %p488, %p489
    %p491 = pneg %p490
    // Predicated region
    $region85: #{hvit_discriminator.5} parent=5 // pred_check
      _
    $region86: #{hvit_discriminator.5} parent=5 // pred_check_branch
      %493 = sbr.rel (%p490) target = $region88
    $region87: #{hvit_discriminator.5} parent=5 // pred_region
      %s494 = ssub.s32 %s25, 1
      %p495 = scmp.lt.s32.totalorder %s30, 1
      %s496 = scalar_select %p495, %s30, 1
      %s497 = smul.addr %s496, 2
      %s498 = smul.addr %s497, 8
      %s499 = scalar_lea.vmem %s0, %s498
      %p500 = pneg %p51
      %p501 = pneg %p48
      %p502 = pneg %p72
      %p503 = pneg %p69
      %p504 = pneg %p93
      %p505 = pneg %p90
      %p506 = pneg %p114
      %p507 = pneg %p111
      %p508 = pneg %p135
      %p509 = pneg %p132
      %p510 = pneg %p156
      %p511 = pneg %p153
      %p512 = pneg %p177
      %p513 = pneg %p174
      %p514 = pneg %p198
      %p515 = pneg %p195
      %p516 = pneg %p219
      %p517 = pneg %p216
      %p518 = pneg %p240
      %p519 = pneg %p237
      %p520 = pneg %p261
      %p521 = pneg %p258
      %p522 = pneg %p282
      %p523 = pneg %p279
      %p524 = pneg %p303
      %p525 = pneg %p300
      %p526 = pneg %p324
      %p527 = pneg %p321
      %p528 = pneg %p345
      %p529 = pneg %p342
      %p530 = pneg %p366
      %p531 = pneg %p363
      %p532 = pneg %p387
      %p533 = pneg %p384
      %p534 = pneg %p413
      %p535 = pneg %p410
      %p536 = scmp.lt.s32.totalorder %s30, 1
      %s537 = scalar_select %p536, %s30, 1
      %s538 = smul.addr %s537, 2
      %s539 = smul.addr %s538, 8
      %s540 = scalar_lea.vmem %s17, %s539
      %p541 = scmp.lt.s32.totalorder %s30, 1
      %s542 = scalar_select %p541, %s30, 1
      %s543 = smul.addr %s542, 2
      %s544 = smul.addr %s543, 8
      %s545 = scalar_lea.vmem %s0, %s544
      %p546 = scmp.lt.s32.totalorder %s30, 1
      %s547 = scalar_select %p546, %s30, 1
      %s548 = smul.addr %s547, 2
      %s549 = smul.addr %s548, 8
      %s550 = scalar_lea.vmem %s17, %s549
      %v552 = vld [vmem:[%s545] sm:$0xff]
      %v553 = vld [vmem:[%s545 + $0x8] sm:$0xff]
      %v554 = vpack.c.bf16 %v553, %v552
      %v555 = vld [vmem:[%s1] sm:$0xf]
      %v556 = vld [vmem:[%s1 + $0x4] sm:$0xf]
      %v557 = vld [vmem:[%s1 + $0x8] sm:$0xf]
      %v558 = vld [vmem:[%s1 + $0xc] sm:$0xf]
      %v559 = vld [vmem:[%s1 + $0x10] sm:$0xf]
      %v560 = vld [vmem:[%s1 + $0x14] sm:$0xf]
      %v561 = vld [vmem:[%s1 + $0x18] sm:$0xf]
      %v562 = vld [vmem:[%s1 + $0x1c] sm:$0xf]
      %v563 = vld [vmem:[%s1 + $0x20] sm:$0xf]
      %v564 = vld [vmem:[%s1 + $0x24] sm:$0xf]
      %v565 = vld [vmem:[%s1 + $0x28] sm:$0xf]
      %v566 = vld [vmem:[%s1 + $0x2c] sm:$0xf]
      %v567 = vld [vmem:[%s1 + $0x30] sm:$0xf]
      %v568 = vld [vmem:[%s1 + $0x34] sm:$0xf]
      %v569 = vld [vmem:[%s1 + $0x38] sm:$0xf]
      %v570 = vld [vmem:[%s1 + $0x3c] sm:$0xf]
      %v571 = vld [vmem:[%s2] sm:$0x1]
      %v573 = vperm.slane %v571, 0
      %v591 = vunpack.c.l.b16 %v555
      %v592 = vunpack.c.l.b16 %v556
      %v593 = vunpack.c.l.b16 %v557
      %v594 = vunpack.c.l.b16 %v558
      %v595 = vunpack.c.l.b16 %v559
      %v596 = vunpack.c.l.b16 %v560
      %v597 = vunpack.c.l.b16 %v561
      %v598 = vunpack.c.l.b16 %v562
      %v599 = vunpack.c.l.b16 %v563
      %v600 = vunpack.c.l.b16 %v564
      %v601 = vunpack.c.l.b16 %v565
      %v602 = vunpack.c.l.b16 %v566
      %v603 = vunpack.c.l.b16 %v567
      %v604 = vunpack.c.l.b16 %v568
      %v605 = vunpack.c.l.b16 %v569
      %v606 = vunpack.c.l.b16 %v570
      %v607 = vpack.c.b16 %v592, %v591
      %v608 = vpack.c.b16 %v594, %v593
      %v609 = vpack.c.b16 %v596, %v595
      %v610 = vpack.c.b16 %v598, %v597
      %v611 = vpack.c.b16 %v600, %v599
      %v612 = vpack.c.b16 %v602, %v601
      %v613 = vpack.c.b16 %v604, %v603
      %v614 = vpack.c.b16 %v606, %v605
      %623 = vmatpush.bf16.msra.mxu0 %v614
      %624 = vmatpush.bf16.msra.mxu0 %v613
      %625 = vmatpush.bf16.msra.mxu0 %v612
      %626 = vmatpush.bf16.msra.mxu0 %v611
      %627 = vmatpush.bf16.msra.mxu0 %v610
      %628 = vmatpush.bf16.msra.mxu0 %v609
      %629 = vmatpush.bf16.msra.mxu0 %v608
      %630 = vmatpush.bf16.msra.mxu0 %v607
      %631 = vmatmul.bf16.gmra.mxu0 %v554
      %v632 = vpop.f32.mrf.mxu0
      %v633 = vadd.f32 %v573, %v632
      %v634 = vpop.f32.mrf.mxu0
      %v635 = vadd.f32 %v573, %v634
      %636 = vdwg.mxu0
      %v637 = vld [vmem:[%s3] sm:$0x1]
      %v638 = vld [vmem:[%s4] sm:$0x1]
      %vm639 = vcmask 523264
      %v640 = vsel %vm639, %v633, 0.0
      %641 = vadd.xlane.f32.xlu0 %v640
      %v642 = vpop.xlane.xlu0 %641
      %v643 = vsel %vm639, %v635, 0.0
      %644 = vadd.xlane.f32.xlu0 %v643
      %v645 = vpop.xlane.xlu0 %644
      %v646 = vrcp.pop 64.0
      %v647 = vmul.f32 64.0, %v646
      %v648 = vsub.f32 1.0, %v647
      %v649 = vmul.f32 %v646, %v648
      %v650 = vadd.f32 %v646, %v649
      %vm651 = vweird.f32 %v646
      %v652 = vsel %vm651, %v646, %v650
      %v653 = vmul.f32 %v642, %v652
      %v654 = vmul.f32 %v645, %v652
      %v655 = vsub.f32 %v633, %v653
      %v656 = vsub.f32 %v635, %v654
      %v657 = vmul.f32 %v655, %v655
      %v658 = vmul.f32 %v656, %v656
      %v659 = vsel %vm639, %v657, 0.0
      %660 = vadd.xlane.f32.xlu0 %v659
      %v661 = vpop.xlane.xlu0 %660
      %v662 = vsel %vm639, %v658, 0.0
      %663 = vadd.xlane.f32.xlu0 %v662
      %v664 = vpop.xlane.xlu0 %663
      %v665 = vmul.f32 %v661, %v652
      %v666 = vmul.f32 %v664, %v652
      %v667 = vadd.f32 %v665, 1e-05
      %v668 = vadd.f32 %v666, 1e-05
      %v669 = vrsqrt.pop %v667
      %v670 = vmul.f32 %v669, %v667
      %v671 = vmul.f32 %v670, %v669
      %v672 = vmul.f32 0.5, %v671
      %v673 = vsub.f32 1.5, %v672
      %v674 = vmul.f32 %v669, %v673
      %vm675 = vweird.f32 %v667
      %vm676 = vweird.f32 %v669
      %vm677 = vmor %vm675, %vm676
      %v678 = vsel %vm677, %v669, %v674
      %v679 = vrsqrt.pop %v668
      %v680 = vmul.f32 %v679, %v668
      %v681 = vmul.f32 %v680, %v679
      %v682 = vmul.f32 0.5, %v681
      %v683 = vsub.f32 1.5, %v682
      %v684 = vmul.f32 %v679, %v683
      %vm685 = vweird.f32 %v668
      %vm686 = vweird.f32 %v679
      %vm687 = vmor %vm685, %vm686
      %v688 = vsel %vm687, %v679, %v684
      %v689 = vmul.f32 %v655, %v678
      %v690 = vmul.f32 %v656, %v688
      %v692 = vperm.slane %v637, 0
      %v694 = vmul.f32 %v689, %v692
      %v695 = vmul.f32 %v690, %v692
      %v697 = vperm.slane %v638, 0
      %v699 = vadd.f32 %v694, %v697
      %v700 = vadd.f32 %v695, %v697
      %v701 = vpack.c.bf16 %v700, %v699
      %v702 = vld [vmem:[%s5] sm:$0xf]
      %v703 = vld [vmem:[%s5 + $0x4] sm:$0xf]
      %v704 = vld [vmem:[%s5 + $0x8] sm:$0xf]
      %v705 = vld [vmem:[%s5 + $0xc] sm:$0xf]
      %v706 = vld [vmem:[%s5 + $0x10] sm:$0xf]
      %v707 = vld [vmem:[%s5 + $0x14] sm:$0xf]
      %v708 = vld [vmem:[%s5 + $0x18] sm:$0xf]
      %v709 = vld [vmem:[%s5 + $0x1c] sm:$0xf]
      %v710 = vld [vmem:[%s6] sm:$0x1]
      %v712 = vperm.slane %v710, 0
      %v722 = vunpack.c.l.b16 %v702
      %v723 = vunpack.c.l.b16 %v703
      %v724 = vunpack.c.l.b16 %v704
      %v725 = vunpack.c.l.b16 %v705
      %v726 = vunpack.c.l.b16 %v706
      %v727 = vunpack.c.l.b16 %v707
      %v728 = vunpack.c.l.b16 %v708
      %v729 = vunpack.c.l.b16 %v709
      %v730 = vpack.c.b16 %v723, %v722
      %v731 = vpack.c.b16 %v725, %v724
      %v732 = vpack.c.b16 %v727, %v726
      %v733 = vpack.c.b16 %v729, %v728
      %v739 = vsel %vm639, %v701, 0
      %741 = vmatpush.bf16.msra.mxu0 0
      %742 = vmatpush.bf16.msra.mxu0 0
      %743 = vmatpush.bf16.msra.mxu0 0
      %744 = vmatpush.bf16.msra.mxu0 0
      %745 = vmatpush.bf16.msra.mxu0 %v733
      %746 = vmatpush.bf16.msra.mxu0 %v732
      %747 = vmatpush.bf16.msra.mxu0 %v731
      %748 = vmatpush.bf16.msra.mxu0 %v730
      %749 = vmatmul.bf16.gmra.mxu0 %v739
      %v750 = vpop.f32.mrf.mxu0
      %v751 = vadd.f32 %v712, %v750
      %v752 = vpop.f32.mrf.mxu0
      %v753 = vadd.f32 %v712, %v752
      %754 = vdwg.mxu0
      %s755 = scalar_lea.vmem %s5, 128
      %v756 = vld [vmem:[%s755] sm:$0xf]
      %v757 = vld [vmem:[%s755 + $0x4] sm:$0xf]
      %v758 = vld [vmem:[%s755 + $0x8] sm:$0xf]
      %v759 = vld [vmem:[%s755 + $0xc] sm:$0xf]
      %v760 = vld [vmem:[%s755 + $0x10] sm:$0xf]
      %v761 = vld [vmem:[%s755 + $0x14] sm:$0xf]
      %v762 = vld [vmem:[%s755 + $0x18] sm:$0xf]
      %v763 = vld [vmem:[%s755 + $0x1c] sm:$0xf]
      %s764 = scalar_lea.vmem %s6, 4
      %v765 = vld [vmem:[%s764] sm:$0x1]
      %v767 = vperm.slane %v765, 0
      %v777 = vunpack.c.l.b16 %v756
      %v778 = vunpack.c.l.b16 %v757
      %v779 = vunpack.c.l.b16 %v758
      %v780 = vunpack.c.l.b16 %v759
      %v781 = vunpack.c.l.b16 %v760
      %v782 = vunpack.c.l.b16 %v761
      %v783 = vunpack.c.l.b16 %v762
      %v784 = vunpack.c.l.b16 %v763
      %v785 = vpack.c.b16 %v778, %v777
      %v786 = vpack.c.b16 %v780, %v779
      %v787 = vpack.c.b16 %v782, %v781
      %v788 = vpack.c.b16 %v784, %v783
      %793 = vmatpush.bf16.msra.mxu0 0
      %794 = vmatpush.bf16.msra.mxu0 0
      %795 = vmatpush.bf16.msra.mxu0 0
      %796 = vmatpush.bf16.msra.mxu0 0
      %797 = vmatpush.bf16.msra.mxu0 %v788
      %798 = vmatpush.bf16.msra.mxu0 %v787
      %799 = vmatpush.bf16.msra.mxu0 %v786
      %800 = vmatpush.bf16.msra.mxu0 %v785
      %801 = vmatmul.bf16.gmra.mxu0 %v739
      %v802 = vpop.f32.mrf.mxu0
      %v803 = vadd.f32 %v767, %v802
      %v804 = vpop.f32.mrf.mxu0
      %v805 = vadd.f32 %v767, %v804
      %806 = vdwg.mxu0
      %s807 = scalar_lea.vmem %s5, 256
      %v808 = vld [vmem:[%s807] sm:$0xf]
      %v809 = vld [vmem:[%s807 + $0x4] sm:$0xf]
      %v810 = vld [vmem:[%s807 + $0x8] sm:$0xf]
      %v811 = vld [vmem:[%s807 + $0xc] sm:$0xf]
      %v812 = vld [vmem:[%s807 + $0x10] sm:$0xf]
      %v813 = vld [vmem:[%s807 + $0x14] sm:$0xf]
      %v814 = vld [vmem:[%s807 + $0x18] sm:$0xf]
      %v815 = vld [vmem:[%s807 + $0x1c] sm:$0xf]
      %s816 = scalar_lea.vmem %s6, 8
      %v817 = vld [vmem:[%s816] sm:$0x1]
      %v819 = vperm.slane %v817, 0
      %v829 = vunpack.c.l.b16 %v808
      %v830 = vunpack.c.l.b16 %v809
      %v831 = vunpack.c.l.b16 %v810
      %v832 = vunpack.c.l.b16 %v811
      %v833 = vunpack.c.l.b16 %v812
      %v834 = vunpack.c.l.b16 %v813
      %v835 = vunpack.c.l.b16 %v814
      %v836 = vunpack.c.l.b16 %v815
      %v837 = vpack.c.b16 %v830, %v829
      %v838 = vpack.c.b16 %v832, %v831
      %v839 = vpack.c.b16 %v834, %v833
      %v840 = vpack.c.b16 %v836, %v835
      %845 = vmatpush.bf16.msra.mxu0 0
      %846 = vmatpush.bf16.msra.mxu0 0
      %847 = vmatpush.bf16.msra.mxu0 0
      %848 = vmatpush.bf16.msra.mxu0 0
      %849 = vmatpush.bf16.msra.mxu0 %v840
      %850 = vmatpush.bf16.msra.mxu0 %v839
      %851 = vmatpush.bf16.msra.mxu0 %v838
      %852 = vmatpush.bf16.msra.mxu0 %v837
      %853 = vmatmul.bf16.gmra.mxu0 %v739
      %v854 = vpop.f32.mrf.mxu0
      %v855 = vadd.f32 %v819, %v854
      %v856 = vpop.f32.mrf.mxu0
      %v857 = vadd.f32 %v819, %v856
      %858 = vdwg.mxu0
      %v859 = vpack.c.bf16 %v753, %v751
      %v860 = vpack.c.bf16 %v805, %v803
      %vm861 = vcmask 130048
      %v863 = vsel %vm861, %v859, 0
      %v866 = vsel %vm861, %v860, 0
      %868 = vmatpush.bf16.xpose.msra.mxu0 0
      %869 = vmatpush.bf16.xpose.msra.mxu0 0
      %870 = vmatpush.bf16.xpose.msra.mxu0 0
      %871 = vmatpush.bf16.xpose.msra.mxu0 0
      %872 = vmatpush.bf16.xpose.msra.mxu0 0
      %873 = vmatpush.bf16.xpose.msra.mxu0 0
      %874 = vmatpush.bf16.xpose.msra.mxu0 0
      %875 = vmatpush.bf16.xpose.msra.mxu0 %v866
      %876 = vmatmul.bf16.gmra.mxu0 %v863
      %v877 = vpop.f32.mrf.mxu0
      %v878 = vadd.f32 0.0, %v877
      %v879 = vpop.f32.mrf.mxu0
      %v880 = vadd.f32 0.0, %v879
      %881 = vdwg.mxu0
      %v882 = vmul.f32 %v878, 0.25
      %v883 = vmul.f32 %v880, 0.25
      %v884 = vsel %vm861, %v882, -inf
      %885 = vmax.xlane.f32.xlu0 %v884
      %v886 = vpop.xlane.xlu0 %885
      %v887 = vsel %vm861, %v883, -inf
      %888 = vmax.xlane.f32.xlu0 %v887
      %v889 = vpop.xlane.xlu0 %888
      %v890 = vsub.f32 %v882, %v886
      %v891 = vsub.f32 %v883, %v889
      %v892 = vmul.f32 %v890, 1.442695
      %v893 = vpow.pop %v892
      %v894 = vmul.f32 %v891, 1.442695
      %v895 = vpow.pop %v894
      %v896 = vsel %vm861, %v893, 0.0
      %897 = vadd.xlane.f32.xlu0 %v896
      %v898 = vpop.xlane.xlu0 %897
      %v899 = vsel %vm861, %v895, 0.0
      %900 = vadd.xlane.f32.xlu0 %v899
      %v901 = vpop.xlane.xlu0 %900
      %v902 = vrcp.pop %v898
      %v903 = vrcp.pop %v901
      %v904 = vmul.f32 %v893, %v902
      %v905 = vmul.f32 %v895, %v903
      %v906 = vpack.c.bf16 %v905, %v904
      %v907 = vpack.c.bf16 %v857, %v855
      %v909 = vsel %vm861, %v906, 0
      %911 = vmatpush.bf16.msra.mxu0 0
      %912 = vmatpush.bf16.msra.mxu0 0
      %913 = vmatpush.bf16.msra.mxu0 0
      %914 = vmatpush.bf16.msra.mxu0 0
      %915 = vmatpush.bf16.msra.mxu0 0
      %916 = vmatpush.bf16.msra.mxu0 0
      %917 = vmatpush.bf16.msra.mxu0 0
      %918 = vmatpush.bf16.msra.mxu0 %v907
      %919 = vmatmul.bf16.gmra.mxu0 %v909
      %v920 = vpop.f32.mrf.mxu0
      %v921 = vadd.f32 0.0, %v920
      %v922 = vpop.f32.mrf.mxu0
      %v923 = vadd.f32 0.0, %v922
      %924 = vdwg.mxu0
      %v925 = vpack.c.bf16 %v923, %v921
      %v926 = vld [vmem:[%s7] sm:$0xf]
      %v927 = vld [vmem:[%s7 + $0x4] sm:$0xf]
      %s928 = scalar_lea.vmem %s5, 32
      %v929 = vld [vmem:[%s928] sm:$0xf]
      %v930 = vld [vmem:[%s928 + $0x4] sm:$0xf]
      %v931 = vld [vmem:[%s928 + $0x8] sm:$0xf]
      %v932 = vld [vmem:[%s928 + $0xc] sm:$0xf]
      %v933 = vld [vmem:[%s928 + $0x10] sm:$0xf]
      %v934 = vld [vmem:[%s928 + $0x14] sm:$0xf]
      %v935 = vld [vmem:[%s928 + $0x18] sm:$0xf]
      %v936 = vld [vmem:[%s928 + $0x1c] sm:$0xf]
      %s937 = scalar_lea.vmem %s6, 1
      %v938 = vld [vmem:[%s937] sm:$0x1]
      %v940 = vperm.slane %v938, 0
      %v950 = vunpack.c.l.b16 %v929
      %v951 = vunpack.c.l.b16 %v930
      %v952 = vunpack.c.l.b16 %v931
      %v953 = vunpack.c.l.b16 %v932
      %v954 = vunpack.c.l.b16 %v933
      %v955 = vunpack.c.l.b16 %v934
      %v956 = vunpack.c.l.b16 %v935
      %v957 = vunpack.c.l.b16 %v936
      %v958 = vpack.c.b16 %v951, %v950
      %v959 = vpack.c.b16 %v953, %v952
      %v960 = vpack.c.b16 %v955, %v954
      %v961 = vpack.c.b16 %v957, %v956
      %966 = vmatpush.bf16.msra.mxu0 0
      %967 = vmatpush.bf16.msra.mxu0 0
      %968 = vmatpush.bf16.msra.mxu0 0
      %969 = vmatpush.bf16.msra.mxu0 0
      %970 = vmatpush.bf16.msra.mxu0 %v961
      %971 = vmatpush.bf16.msra.mxu0 %v960
      %972 = vmatpush.bf16.msra.mxu0 %v959
      %973 = vmatpush.bf16.msra.mxu0 %v958
      %974 = vmatmul.bf16.gmra.mxu0 %v739
      %v975 = vpop.f32.mrf.mxu0
      %v976 = vadd.f32 %v940, %v975
      %v977 = vpop.f32.mrf.mxu0
      %v978 = vadd.f32 %v940, %v977
      %979 = vdwg.mxu0
      %s980 = scalar_lea.vmem %s5, 160
      %v981 = vld [vmem:[%s980] sm:$0xf]
      %v982 = vld [vmem:[%s980 + $0x4] sm:$0xf]
      %v983 = vld [vmem:[%s980 + $0x8] sm:$0xf]
      %v984 = vld [vmem:[%s980 + $0xc] sm:$0xf]
      %v985 = vld [vmem:[%s980 + $0x10] sm:$0xf]
      %v986 = vld [vmem:[%s980 + $0x14] sm:$0xf]
      %v987 = vld [vmem:[%s980 + $0x18] sm:$0xf]
      %v988 = vld [vmem:[%s980 + $0x1c] sm:$0xf]
      %s989 = scalar_lea.vmem %s6, 5
      %v990 = vld [vmem:[%s989] sm:$0x1]
      %v992 = vperm.slane %v990, 0
      %v1002 = vunpack.c.l.b16 %v981
      %v1003 = vunpack.c.l.b16 %v982
      %v1004 = vunpack.c.l.b16 %v983
      %v1005 = vunpack.c.l.b16 %v984
      %v1006 = vunpack.c.l.b16 %v985
      %v1007 = vunpack.c.l.b16 %v986
      %v1008 = vunpack.c.l.b16 %v987
      %v1009 = vunpack.c.l.b16 %v988
      %v1010 = vpack.c.b16 %v1003, %v1002
      %v1011 = vpack.c.b16 %v1005, %v1004
      %v1012 = vpack.c.b16 %v1007, %v1006
      %v1013 = vpack.c.b16 %v1009, %v1008
      %1018 = vmatpush.bf16.msra.mxu0 0
      %1019 = vmatpush.bf16.msra.mxu0 0
      %1020 = vmatpush.bf16.msra.mxu0 0
      %1021 = vmatpush.bf16.msra.mxu0 0
      %1022 = vmatpush.bf16.msra.mxu0 %v1013
      %1023 = vmatpush.bf16.msra.mxu0 %v1012
      %1024 = vmatpush.bf16.msra.mxu0 %v1011
      %1025 = vmatpush.bf16.msra.mxu0 %v1010
      %1026 = vmatmul.bf16.gmra.mxu0 %v739
      %v1027 = vpop.f32.mrf.mxu0
      %v1028 = vadd.f32 %v992, %v1027
      %v1029 = vpop.f32.mrf.mxu0
      %v1030 = vadd.f32 %v992, %v1029
      %1031 = vdwg.mxu0
      %s1032 = scalar_lea.vmem %s5, 288
      %v1033 = vld [vmem:[%s1032] sm:$0xf]
      %v1034 = vld [vmem:[%s1032 + $0x4] sm:$0xf]
      %v1035 = vld [vmem:[%s1032 + $0x8] sm:$0xf]
      %v1036 = vld [vmem:[%s1032 + $0xc] sm:$0xf]
      %v1037 = vld [vmem:[%s1032 + $0x10] sm:$0xf]
      %v1038 = vld [vmem:[%s1032 + $0x14] sm:$0xf]
      %v1039 = vld [vmem:[%s1032 + $0x18] sm:$0xf]
      %v1040 = vld [vmem:[%s1032 + $0x1c] sm:$0xf]
      %s1041 = scalar_lea.vmem %s6, 9
      %v1042 = vld [vmem:[%s1041] sm:$0x1]
      %v1044 = vperm.slane %v1042, 0
      %v1054 = vunpack.c.l.b16 %v1033
      %v1055 = vunpack.c.l.b16 %v1034
      %v1056 = vunpack.c.l.b16 %v1035
      %v1057 = vunpack.c.l.b16 %v1036
      %v1058 = vunpack.c.l.b16 %v1037
      %v1059 = vunpack.c.l.b16 %v1038
      %v1060 = vunpack.c.l.b16 %v1039
      %v1061 = vunpack.c.l.b16 %v1040
      %v1062 = vpack.c.b16 %v1055, %v1054
      %v1063 = vpack.c.b16 %v1057, %v1056
      %v1064 = vpack.c.b16 %v1059, %v1058
      %v1065 = vpack.c.b16 %v1061, %v1060
      %1070 = vmatpush.bf16.msra.mxu0 0
      %1071 = vmatpush.bf16.msra.mxu0 0
      %1072 = vmatpush.bf16.msra.mxu0 0
      %1073 = vmatpush.bf16.msra.mxu0 0
      %1074 = vmatpush.bf16.msra.mxu0 %v1065
      %1075 = vmatpush.bf16.msra.mxu0 %v1064
      %1076 = vmatpush.bf16.msra.mxu0 %v1063
      %1077 = vmatpush.bf16.msra.mxu0 %v1062
      %1078 = vmatmul.bf16.gmra.mxu0 %v739
      %v1079 = vpop.f32.mrf.mxu0
      %v1080 = vadd.f32 %v1044, %v1079
      %v1081 = vpop.f32.mrf.mxu0
      %v1082 = vadd.f32 %v1044, %v1081
      %1083 = vdwg.mxu0
      %v1084 = vpack.c.bf16 %v978, %v976
      %v1085 = vpack.c.bf16 %v1030, %v1028
      %v1087 = vsel %vm861, %v1084, 0
      %v1090 = vsel %vm861, %v1085, 0
      %1092 = vmatpush.bf16.xpose.msra.mxu0 0
      %1093 = vmatpush.bf16.xpose.msra.mxu0 0
      %1094 = vmatpush.bf16.xpose.msra.mxu0 0
      %1095 = vmatpush.bf16.xpose.msra.mxu0 0
      %1096 = vmatpush.bf16.xpose.msra.mxu0 0
      %1097 = vmatpush.bf16.xpose.msra.mxu0 0
      %1098 = vmatpush.bf16.xpose.msra.mxu0 0
      %1099 = vmatpush.bf16.xpose.msra.mxu0 %v1090
      %1100 = vmatmul.bf16.gmra.mxu0 %v1087
      %v1101 = vpop.f32.mrf.mxu0
      %v1102 = vadd.f32 0.0, %v1101
      %v1103 = vpop.f32.mrf.mxu0
      %v1104 = vadd.f32 0.0, %v1103
      %1105 = vdwg.mxu0
      %v1106 = vmul.f32 %v1102, 0.25
      %v1107 = vmul.f32 %v1104, 0.25
      %v1108 = vsel %vm861, %v1106, -inf
      %1109 = vmax.xlane.f32.xlu0 %v1108
      %v1110 = vpop.xlane.xlu0 %1109
      %v1111 = vsel %vm861, %v1107, -inf
      %1112 = vmax.xlane.f32.xlu0 %v1111
      %v1113 = vpop.xlane.xlu0 %1112
      %v1114 = vsub.f32 %v1106, %v1110
      %v1115 = vsub.f32 %v1107, %v1113
      %v1116 = vmul.f32 %v1114, 1.442695
      %v1117 = vpow.pop %v1116
      %v1118 = vmul.f32 %v1115, 1.442695
      %v1119 = vpow.pop %v1118
      %v1120 = vsel %vm861, %v1117, 0.0
      %1121 = vadd.xlane.f32.xlu0 %v1120
      %v1122 = vpop.xlane.xlu0 %1121
      %v1123 = vsel %vm861, %v1119, 0.0
      %1124 = vadd.xlane.f32.xlu0 %v1123
      %v1125 = vpop.xlane.xlu0 %1124
      %v1126 = vrcp.pop %v1122
      %v1127 = vrcp.pop %v1125
      %v1128 = vmul.f32 %v1117, %v1126
      %v1129 = vmul.f32 %v1119, %v1127
      %v1130 = vpack.c.bf16 %v1129, %v1128
      %v1131 = vpack.c.bf16 %v1082, %v1080
      %v1133 = vsel %vm861, %v1130, 0
      %1135 = vmatpush.bf16.msra.mxu0 0
      %1136 = vmatpush.bf16.msra.mxu0 0
      %1137 = vmatpush.bf16.msra.mxu0 0
      %1138 = vmatpush.bf16.msra.mxu0 0
      %1139 = vmatpush.bf16.msra.mxu0 0
      %1140 = vmatpush.bf16.msra.mxu0 0
      %1141 = vmatpush.bf16.msra.mxu0 0
      %1142 = vmatpush.bf16.msra.mxu0 %v1131
      %1143 = vmatmul.bf16.gmra.mxu0 %v1133
      %v1144 = vpop.f32.mrf.mxu0
      %v1145 = vadd.f32 0.0, %v1144
      %v1146 = vpop.f32.mrf.mxu0
      %v1147 = vadd.f32 0.0, %v1146
      %1148 = vdwg.mxu0
      %v1149 = vpack.c.bf16 %v1147, %v1145
      %s1150 = scalar_lea.vmem %s7, 8
      %v1151 = vld [vmem:[%s1150] sm:$0xf]
      %v1152 = vld [vmem:[%s1150 + $0x4] sm:$0xf]
      %v1155 = vunpack.c.l.b16 %v1151
      %v1156 = vunpack.c.l.b16 %v1152
      %v1157 = vpack.c.b16 %v1156, %v1155
      %v1160 = vsel %vm861, %v1149, 0
      %1162 = vmatpush.bf16.msra.mxu0 0
      %1163 = vmatpush.bf16.msra.mxu0 0
      %1164 = vmatpush.bf16.msra.mxu0 0
      %1165 = vmatpush.bf16.msra.mxu0 0
      %1166 = vmatpush.bf16.msra.mxu0 0
      %1167 = vmatpush.bf16.msra.mxu0 0
      %1168 = vmatpush.bf16.msra.mxu0 0
      %1169 = vmatpush.bf16.msra.mxu0 %v1157
      %1170 = vmatmul.bf16.gmra.mxu0 %v1160
      %v1171 = vpop.f32.mrf.mxu0
      %v1172 = vadd.f32 0.0, %v1171
      %v1173 = vpop.f32.mrf.mxu0
      %v1174 = vadd.f32 0.0, %v1173
      %1175 = vdwg.mxu0
      %v1178 = vunpack.c.l.b16 %v926
      %v1179 = vunpack.c.l.b16 %v927
      %v1180 = vpack.c.b16 %v1179, %v1178
      %v1183 = vsel %vm861, %v925, 0
      %1185 = vmatpush.bf16.msra.mxu0 0
      %1186 = vmatpush.bf16.msra.mxu0 0
      %1187 = vmatpush.bf16.msra.mxu0 0
      %1188 = vmatpush.bf16.msra.mxu0 0
      %1189 = vmatpush.bf16.msra.mxu0 0
      %1190 = vmatpush.bf16.msra.mxu0 0
      %1191 = vmatpush.bf16.msra.mxu0 0
      %1192 = vmatpush.bf16.msra.mxu0 %v1180
      %1193 = vmatmul.bf16.gmra.mxu0 %v1183
      %v1194 = vpop.f32.mrf.mxu0
      %v1195 = vadd.f32 %v1172, %v1194
      %v1196 = vpop.f32.mrf.mxu0
      %v1197 = vadd.f32 %v1174, %v1196
      %1198 = vdwg.mxu0
      %s1199 = scalar_lea.vmem %s5, 64
      %v1200 = vld [vmem:[%s1199] sm:$0xf]
      %v1201 = vld [vmem:[%s1199 + $0x4] sm:$0xf]
      %v1202 = vld [vmem:[%s1199 + $0x8] sm:$0xf]
      %v1203 = vld [vmem:[%s1199 + $0xc] sm:$0xf]
      %v1204 = vld [vmem:[%s1199 + $0x10] sm:$0xf]
      %v1205 = vld [vmem:[%s1199 + $0x14] sm:$0xf]
      %v1206 = vld [vmem:[%s1199 + $0x18] sm:$0xf]
      %v1207 = vld [vmem:[%s1199 + $0x1c] sm:$0xf]
      %s1208 = scalar_lea.vmem %s6, 2
      %v1209 = vld [vmem:[%s1208] sm:$0x1]
      %v1211 = vperm.slane %v1209, 0
      %v1221 = vunpack.c.l.b16 %v1200
      %v1222 = vunpack.c.l.b16 %v1201
      %v1223 = vunpack.c.l.b16 %v1202
      %v1224 = vunpack.c.l.b16 %v1203
      %v1225 = vunpack.c.l.b16 %v1204
      %v1226 = vunpack.c.l.b16 %v1205
      %v1227 = vunpack.c.l.b16 %v1206
      %v1228 = vunpack.c.l.b16 %v1207
      %v1229 = vpack.c.b16 %v1222, %v1221
      %v1230 = vpack.c.b16 %v1224, %v1223
      %v1231 = vpack.c.b16 %v1226, %v1225
      %v1232 = vpack.c.b16 %v1228, %v1227
      %1237 = vmatpush.bf16.msra.mxu0 0
      %1238 = vmatpush.bf16.msra.mxu0 0
      %1239 = vmatpush.bf16.msra.mxu0 0
      %1240 = vmatpush.bf16.msra.mxu0 0
      %1241 = vmatpush.bf16.msra.mxu0 %v1232
      %1242 = vmatpush.bf16.msra.mxu0 %v1231
      %1243 = vmatpush.bf16.msra.mxu0 %v1230
      %1244 = vmatpush.bf16.msra.mxu0 %v1229
      %1245 = vmatmul.bf16.gmra.mxu0 %v739
      %v1246 = vpop.f32.mrf.mxu0
      %v1247 = vadd.f32 %v1211, %v1246
      %v1248 = vpop.f32.mrf.mxu0
      %v1249 = vadd.f32 %v1211, %v1248
      %1250 = vdwg.mxu0
      %s1251 = scalar_lea.vmem %s5, 192
      %v1252 = vld [vmem:[%s1251] sm:$0xf]
      %v1253 = vld [vmem:[%s1251 + $0x4] sm:$0xf]
      %v1254 = vld [vmem:[%s1251 + $0x8] sm:$0xf]
      %v1255 = vld [vmem:[%s1251 + $0xc] sm:$0xf]
      %v1256 = vld [vmem:[%s1251 + $0x10] sm:$0xf]
      %v1257 = vld [vmem:[%s1251 + $0x14] sm:$0xf]
      %v1258 = vld [vmem:[%s1251 + $0x18] sm:$0xf]
      %v1259 = vld [vmem:[%s1251 + $0x1c] sm:$0xf]
      %s1260 = scalar_lea.vmem %s6, 6
      %v1261 = vld [vmem:[%s1260] sm:$0x1]
      %v1263 = vperm.slane %v1261, 0
      %v1273 = vunpack.c.l.b16 %v1252
      %v1274 = vunpack.c.l.b16 %v1253
      %v1275 = vunpack.c.l.b16 %v1254
      %v1276 = vunpack.c.l.b16 %v1255
      %v1277 = vunpack.c.l.b16 %v1256
      %v1278 = vunpack.c.l.b16 %v1257
      %v1279 = vunpack.c.l.b16 %v1258
      %v1280 = vunpack.c.l.b16 %v1259
      %v1281 = vpack.c.b16 %v1274, %v1273
      %v1282 = vpack.c.b16 %v1276, %v1275
      %v1283 = vpack.c.b16 %v1278, %v1277
      %v1284 = vpack.c.b16 %v1280, %v1279
      %1289 = vmatpush.bf16.msra.mxu0 0
      %1290 = vmatpush.bf16.msra.mxu0 0
      %1291 = vmatpush.bf16.msra.mxu0 0
      %1292 = vmatpush.bf16.msra.mxu0 0
      %1293 = vmatpush.bf16.msra.mxu0 %v1284
      %1294 = vmatpush.bf16.msra.mxu0 %v1283
      %1295 = vmatpush.bf16.msra.mxu0 %v1282
      %1296 = vmatpush.bf16.msra.mxu0 %v1281
      %1297 = vmatmul.bf16.gmra.mxu0 %v739
      %v1298 = vpop.f32.mrf.mxu0
      %v1299 = vadd.f32 %v1263, %v1298
      %v1300 = vpop.f32.mrf.mxu0
      %v1301 = vadd.f32 %v1263, %v1300
      %1302 = vdwg.mxu0
      %s1303 = scalar_lea.vmem %s5, 320
      %v1304 = vld [vmem:[%s1303] sm:$0xf]
      %v1305 = vld [vmem:[%s1303 + $0x4] sm:$0xf]
      %v1306 = vld [vmem:[%s1303 + $0x8] sm:$0xf]
      %v1307 = vld [vmem:[%s1303 + $0xc] sm:$0xf]
      %v1308 = vld [vmem:[%s1303 + $0x10] sm:$0xf]
      %v1309 = vld [vmem:[%s1303 + $0x14] sm:$0xf]
      %v1310 = vld [vmem:[%s1303 + $0x18] sm:$0xf]
      %v1311 = vld [vmem:[%s1303 + $0x1c] sm:$0xf]
      %s1312 = scalar_lea.vmem %s6, 10
      %v1313 = vld [vmem:[%s1312] sm:$0x1]
      %v1315 = vperm.slane %v1313, 0
      %v1325 = vunpack.c.l.b16 %v1304
      %v1326 = vunpack.c.l.b16 %v1305
      %v1327 = vunpack.c.l.b16 %v1306
      %v1328 = vunpack.c.l.b16 %v1307
      %v1329 = vunpack.c.l.b16 %v1308
      %v1330 = vunpack.c.l.b16 %v1309
      %v1331 = vunpack.c.l.b16 %v1310
      %v1332 = vunpack.c.l.b16 %v1311
      %v1333 = vpack.c.b16 %v1326, %v1325
      %v1334 = vpack.c.b16 %v1328, %v1327
      %v1335 = vpack.c.b16 %v1330, %v1329
      %v1336 = vpack.c.b16 %v1332, %v1331
      %1341 = vmatpush.bf16.msra.mxu0 0
      %1342 = vmatpush.bf16.msra.mxu0 0
      %1343 = vmatpush.bf16.msra.mxu0 0
      %1344 = vmatpush.bf16.msra.mxu0 0
      %1345 = vmatpush.bf16.msra.mxu0 %v1336
      %1346 = vmatpush.bf16.msra.mxu0 %v1335
      %1347 = vmatpush.bf16.msra.mxu0 %v1334
      %1348 = vmatpush.bf16.msra.mxu0 %v1333
      %1349 = vmatmul.bf16.gmra.mxu0 %v739
      %v1350 = vpop.f32.mrf.mxu0
      %v1351 = vadd.f32 %v1315, %v1350
      %v1352 = vpop.f32.mrf.mxu0
      %v1353 = vadd.f32 %v1315, %v1352
      %1354 = vdwg.mxu0
      %v1355 = vpack.c.bf16 %v1249, %v1247
      %v1356 = vpack.c.bf16 %v1301, %v1299
      %v1358 = vsel %vm861, %v1355, 0
      %v1361 = vsel %vm861, %v1356, 0
      %1363 = vmatpush.bf16.xpose.msra.mxu0 0
      %1364 = vmatpush.bf16.xpose.msra.mxu0 0
      %1365 = vmatpush.bf16.xpose.msra.mxu0 0
      %1366 = vmatpush.bf16.xpose.msra.mxu0 0
      %1367 = vmatpush.bf16.xpose.msra.mxu0 0
      %1368 = vmatpush.bf16.xpose.msra.mxu0 0
      %1369 = vmatpush.bf16.xpose.msra.mxu0 0
      %1370 = vmatpush.bf16.xpose.msra.mxu0 %v1361
      %1371 = vmatmul.bf16.gmra.mxu0 %v1358
      %v1372 = vpop.f32.mrf.mxu0
      %v1373 = vadd.f32 0.0, %v1372
      %v1374 = vpop.f32.mrf.mxu0
      %v1375 = vadd.f32 0.0, %v1374
      %1376 = vdwg.mxu0
      %v1377 = vmul.f32 %v1373, 0.25
      %v1378 = vmul.f32 %v1375, 0.25
      %v1379 = vsel %vm861, %v1377, -inf
      %1380 = vmax.xlane.f32.xlu0 %v1379
      %v1381 = vpop.xlane.xlu0 %1380
      %v1382 = vsel %vm861, %v1378, -inf
      %1383 = vmax.xlane.f32.xlu0 %v1382
      %v1384 = vpop.xlane.xlu0 %1383
      %v1385 = vsub.f32 %v1377, %v1381
      %v1386 = vsub.f32 %v1378, %v1384
      %v1387 = vmul.f32 %v1385, 1.442695
      %v1388 = vpow.pop %v1387
      %v1389 = vmul.f32 %v1386, 1.442695
      %v1390 = vpow.pop %v1389
      %v1391 = vsel %vm861, %v1388, 0.0
      %1392 = vadd.xlane.f32.xlu0 %v1391
      %v1393 = vpop.xlane.xlu0 %1392
      %v1394 = vsel %vm861, %v1390, 0.0
      %1395 = vadd.xlane.f32.xlu0 %v1394
      %v1396 = vpop.xlane.xlu0 %1395
      %v1397 = vrcp.pop %v1393
      %v1398 = vrcp.pop %v1396
      %v1399 = vmul.f32 %v1388, %v1397
      %v1400 = vmul.f32 %v1390, %v1398
      %v1401 = vpack.c.bf16 %v1400, %v1399
      %v1402 = vpack.c.bf16 %v1353, %v1351
      %v1404 = vsel %vm861, %v1401, 0
      %1406 = vmatpush.bf16.msra.mxu0 0
      %1407 = vmatpush.bf16.msra.mxu0 0
      %1408 = vmatpush.bf16.msra.mxu0 0
      %1409 = vmatpush.bf16.msra.mxu0 0
      %1410 = vmatpush.bf16.msra.mxu0 0
      %1411 = vmatpush.bf16.msra.mxu0 0
      %1412 = vmatpush.bf16.msra.mxu0 0
      %1413 = vmatpush.bf16.msra.mxu0 %v1402
      %1414 = vmatmul.bf16.gmra.mxu0 %v1404
      %v1415 = vpop.f32.mrf.mxu0
      %v1416 = vadd.f32 0.0, %v1415
      %v1417 = vpop.f32.mrf.mxu0
      %v1418 = vadd.f32 0.0, %v1417
      %1419 = vdwg.mxu0
      %v1420 = vpack.c.bf16 %v1418, %v1416
      %s1421 = scalar_lea.vmem %s7, 16
      %v1422 = vld [vmem:[%s1421] sm:$0xf]
      %v1423 = vld [vmem:[%s1421 + $0x4] sm:$0xf]
      %v1426 = vunpack.c.l.b16 %v1422
      %v1427 = vunpack.c.l.b16 %v1423
      %v1428 = vpack.c.b16 %v1427, %v1426
      %v1431 = vsel %vm861, %v1420, 0
      %1433 = vmatpush.bf16.msra.mxu0 0
      %1434 = vmatpush.bf16.msra.mxu0 0
      %1435 = vmatpush.bf16.msra.mxu0 0
      %1436 = vmatpush.bf16.msra.mxu0 0
      %1437 = vmatpush.bf16.msra.mxu0 0
      %1438 = vmatpush.bf16.msra.mxu0 0
      %1439 = vmatpush.bf16.msra.mxu0 0
      %1440 = vmatpush.bf16.msra.mxu0 %v1428
      %1441 = vmatmul.bf16.gmra.mxu0 %v1431
      %v1442 = vpop.f32.mrf.mxu0
      %v1443 = vadd.f32 0.0, %v1442
      %v1444 = vpop.f32.mrf.mxu0
      %v1445 = vadd.f32 0.0, %v1444
      %1446 = vdwg.mxu0
      %v1447 = vadd.f32 %v1195, %v1443
      %v1448 = vadd.f32 %v1197, %v1445
      %s1449 = scalar_lea.vmem %s5, 96
      %v1450 = vld [vmem:[%s1449] sm:$0xf]
      %v1451 = vld [vmem:[%s1449 + $0x4] sm:$0xf]
      %v1452 = vld [vmem:[%s1449 + $0x8] sm:$0xf]
      %v1453 = vld [vmem:[%s1449 + $0xc] sm:$0xf]
      %v1454 = vld [vmem:[%s1449 + $0x10] sm:$0xf]
      %v1455 = vld [vmem:[%s1449 + $0x14] sm:$0xf]
      %v1456 = vld [vmem:[%s1449 + $0x18] sm:$0xf]
      %v1457 = vld [vmem:[%s1449 + $0x1c] sm:$0xf]
      %s1458 = scalar_lea.vmem %s6, 3
      %v1459 = vld [vmem:[%s1458] sm:$0x1]
      %v1461 = vperm.slane %v1459, 0
      %v1471 = vunpack.c.l.b16 %v1450
      %v1472 = vunpack.c.l.b16 %v1451
      %v1473 = vunpack.c.l.b16 %v1452
      %v1474 = vunpack.c.l.b16 %v1453
      %v1475 = vunpack.c.l.b16 %v1454
      %v1476 = vunpack.c.l.b16 %v1455
      %v1477 = vunpack.c.l.b16 %v1456
      %v1478 = vunpack.c.l.b16 %v1457
      %v1479 = vpack.c.b16 %v1472, %v1471
      %v1480 = vpack.c.b16 %v1474, %v1473
      %v1481 = vpack.c.b16 %v1476, %v1475
      %v1482 = vpack.c.b16 %v1478, %v1477
      %1487 = vmatpush.bf16.msra.mxu0 0
      %1488 = vmatpush.bf16.msra.mxu0 0
      %1489 = vmatpush.bf16.msra.mxu0 0
      %1490 = vmatpush.bf16.msra.mxu0 0
      %1491 = vmatpush.bf16.msra.mxu0 %v1482
      %1492 = vmatpush.bf16.msra.mxu0 %v1481
      %1493 = vmatpush.bf16.msra.mxu0 %v1480
      %1494 = vmatpush.bf16.msra.mxu0 %v1479
      %1495 = vmatmul.bf16.gmra.mxu0 %v739
      %v1496 = vpop.f32.mrf.mxu0
      %v1497 = vadd.f32 %v1461, %v1496
      %v1498 = vpop.f32.mrf.mxu0
      %v1499 = vadd.f32 %v1461, %v1498
      %1500 = vdwg.mxu0
      %s1501 = scalar_lea.vmem %s5, 224
      %v1502 = vld [vmem:[%s1501] sm:$0xf]
      %v1503 = vld [vmem:[%s1501 + $0x4] sm:$0xf]
      %v1504 = vld [vmem:[%s1501 + $0x8] sm:$0xf]
      %v1505 = vld [vmem:[%s1501 + $0xc] sm:$0xf]
      %v1506 = vld [vmem:[%s1501 + $0x10] sm:$0xf]
      %v1507 = vld [vmem:[%s1501 + $0x14] sm:$0xf]
      %v1508 = vld [vmem:[%s1501 + $0x18] sm:$0xf]
      %v1509 = vld [vmem:[%s1501 + $0x1c] sm:$0xf]
      %s1510 = scalar_lea.vmem %s6, 7
      %v1511 = vld [vmem:[%s1510] sm:$0x1]
      %v1513 = vperm.slane %v1511, 0
      %v1523 = vunpack.c.l.b16 %v1502
      %v1524 = vunpack.c.l.b16 %v1503
      %v1525 = vunpack.c.l.b16 %v1504
      %v1526 = vunpack.c.l.b16 %v1505
      %v1527 = vunpack.c.l.b16 %v1506
      %v1528 = vunpack.c.l.b16 %v1507
      %v1529 = vunpack.c.l.b16 %v1508
      %v1530 = vunpack.c.l.b16 %v1509
      %v1531 = vpack.c.b16 %v1524, %v1523
      %v1532 = vpack.c.b16 %v1526, %v1525
      %v1533 = vpack.c.b16 %v1528, %v1527
      %v1534 = vpack.c.b16 %v1530, %v1529
      %1539 = vmatpush.bf16.msra.mxu0 0
      %1540 = vmatpush.bf16.msra.mxu0 0
      %1541 = vmatpush.bf16.msra.mxu0 0
      %1542 = vmatpush.bf16.msra.mxu0 0
      %1543 = vmatpush.bf16.msra.mxu0 %v1534
      %1544 = vmatpush.bf16.msra.mxu0 %v1533
      %1545 = vmatpush.bf16.msra.mxu0 %v1532
      %1546 = vmatpush.bf16.msra.mxu0 %v1531
      %1547 = vmatmul.bf16.gmra.mxu0 %v739
      %v1548 = vpop.f32.mrf.mxu0
      %v1549 = vadd.f32 %v1513, %v1548
      %v1550 = vpop.f32.mrf.mxu0
      %v1551 = vadd.f32 %v1513, %v1550
      %1552 = vdwg.mxu0
      %s1553 = scalar_lea.vmem %s5, 352
      %v1554 = vld [vmem:[%s1553] sm:$0xf]
      %v1555 = vld [vmem:[%s1553 + $0x4] sm:$0xf]
      %v1556 = vld [vmem:[%s1553 + $0x8] sm:$0xf]
      %v1557 = vld [vmem:[%s1553 + $0xc] sm:$0xf]
      %v1558 = vld [vmem:[%s1553 + $0x10] sm:$0xf]
      %v1559 = vld [vmem:[%s1553 + $0x14] sm:$0xf]
      %v1560 = vld [vmem:[%s1553 + $0x18] sm:$0xf]
      %v1561 = vld [vmem:[%s1553 + $0x1c] sm:$0xf]
      %s1562 = scalar_lea.vmem %s6, 11
      %v1563 = vld [vmem:[%s1562] sm:$0x1]
      %v1565 = vperm.slane %v1563, 0
      %v1575 = vunpack.c.l.b16 %v1554
      %v1576 = vunpack.c.l.b16 %v1555
      %v1577 = vunpack.c.l.b16 %v1556
      %v1578 = vunpack.c.l.b16 %v1557
      %v1579 = vunpack.c.l.b16 %v1558
      %v1580 = vunpack.c.l.b16 %v1559
      %v1581 = vunpack.c.l.b16 %v1560
      %v1582 = vunpack.c.l.b16 %v1561
      %v1583 = vpack.c.b16 %v1576, %v1575
      %v1584 = vpack.c.b16 %v1578, %v1577
      %v1585 = vpack.c.b16 %v1580, %v1579
      %v1586 = vpack.c.b16 %v1582, %v1581
      %1591 = vmatpush.bf16.msra.mxu0 0
      %1592 = vmatpush.bf16.msra.mxu0 0
      %1593 = vmatpush.bf16.msra.mxu0 0
      %1594 = vmatpush.bf16.msra.mxu0 0
      %1595 = vmatpush.bf16.msra.mxu0 %v1586
      %1596 = vmatpush.bf16.msra.mxu0 %v1585
      %1597 = vmatpush.bf16.msra.mxu0 %v1584
      %1598 = vmatpush.bf16.msra.mxu0 %v1583
      %1599 = vmatmul.bf16.gmra.mxu0 %v739
      %v1600 = vpop.f32.mrf.mxu0
      %v1601 = vadd.f32 %v1565, %v1600
      %v1602 = vpop.f32.mrf.mxu0
      %v1603 = vadd.f32 %v1565, %v1602
      %1604 = vdwg.mxu0
      %v1605 = vpack.c.bf16 %v1499, %v1497
      %v1606 = vpack.c.bf16 %v1551, %v1549
      %v1608 = vsel %vm861, %v1605, 0
      %v1611 = vsel %vm861, %v1606, 0
      %1613 = vmatpush.bf16.xpose.msra.mxu0 0
      %1614 = vmatpush.bf16.xpose.msra.mxu0 0
      %1615 = vmatpush.bf16.xpose.msra.mxu0 0
      %1616 = vmatpush.bf16.xpose.msra.mxu0 0
      %1617 = vmatpush.bf16.xpose.msra.mxu0 0
      %1618 = vmatpush.bf16.xpose.msra.mxu0 0
      %1619 = vmatpush.bf16.xpose.msra.mxu0 0
      %1620 = vmatpush.bf16.xpose.msra.mxu0 %v1611
      %1621 = vmatmul.bf16.gmra.mxu0 %v1608
      %v1622 = vpop.f32.mrf.mxu0
      %v1623 = vadd.f32 0.0, %v1622
      %v1624 = vpop.f32.mrf.mxu0
      %v1625 = vadd.f32 0.0, %v1624
      %1626 = vdwg.mxu0
      %v1627 = vmul.f32 %v1623, 0.25
      %v1628 = vmul.f32 %v1625, 0.25
      %v1629 = vsel %vm861, %v1627, -inf
      %1630 = vmax.xlane.f32.xlu0 %v1629
      %v1631 = vpop.xlane.xlu0 %1630
      %v1632 = vsel %vm861, %v1628, -inf
      %1633 = vmax.xlane.f32.xlu0 %v1632
      %v1634 = vpop.xlane.xlu0 %1633
      %v1635 = vsub.f32 %v1627, %v1631
      %v1636 = vsub.f32 %v1628, %v1634
      %v1637 = vmul.f32 %v1635, 1.442695
      %v1638 = vpow.pop %v1637
      %v1639 = vmul.f32 %v1636, 1.442695
      %v1640 = vpow.pop %v1639
      %v1641 = vsel %vm861, %v1638, 0.0
      %1642 = vadd.xlane.f32.xlu0 %v1641
      %v1643 = vpop.xlane.xlu0 %1642
      %v1644 = vsel %vm861, %v1640, 0.0
      %1645 = vadd.xlane.f32.xlu0 %v1644
      %v1646 = vpop.xlane.xlu0 %1645
      %v1647 = vrcp.pop %v1643
      %v1648 = vrcp.pop %v1646
      %v1649 = vmul.f32 %v1638, %v1647
      %v1650 = vmul.f32 %v1640, %v1648
      %v1651 = vpack.c.bf16 %v1650, %v1649
      %v1652 = vpack.c.bf16 %v1603, %v1601
      %v1654 = vsel %vm861, %v1651, 0
      %1656 = vmatpush.bf16.msra.mxu0 0
      %1657 = vmatpush.bf16.msra.mxu0 0
      %1658 = vmatpush.bf16.msra.mxu0 0
      %1659 = vmatpush.bf16.msra.mxu0 0
      %1660 = vmatpush.bf16.msra.mxu0 0
      %1661 = vmatpush.bf16.msra.mxu0 0
      %1662 = vmatpush.bf16.msra.mxu0 0
      %1663 = vmatpush.bf16.msra.mxu0 %v1652
      %1664 = vmatmul.bf16.gmra.mxu0 %v1654
      %v1665 = vpop.f32.mrf.mxu0
      %v1666 = vadd.f32 0.0, %v1665
      %v1667 = vpop.f32.mrf.mxu0
      %v1668 = vadd.f32 0.0, %v1667
      %1669 = vdwg.mxu0
      %v1670 = vpack.c.bf16 %v1668, %v1666
      %s1671 = scalar_lea.vmem %s7, 24
      %v1672 = vld [vmem:[%s1671] sm:$0xf]
      %v1673 = vld [vmem:[%s1671 + $0x4] sm:$0xf]
      %v1676 = vunpack.c.l.b16 %v1672
      %v1677 = vunpack.c.l.b16 %v1673
      %v1678 = vpack.c.b16 %v1677, %v1676
      %v1681 = vsel %vm861, %v1670, 0
      %1683 = vmatpush.bf16.msra.mxu0 0
      %1684 = vmatpush.bf16.msra.mxu0 0
      %1685 = vmatpush.bf16.msra.mxu0 0
      %1686 = vmatpush.bf16.msra.mxu0 0
      %1687 = vmatpush.bf16.msra.mxu0 0
      %1688 = vmatpush.bf16.msra.mxu0 0
      %1689 = vmatpush.bf16.msra.mxu0 0
      %1690 = vmatpush.bf16.msra.mxu0 %v1678
      %1691 = vmatmul.bf16.gmra.mxu0 %v1681
      %v1692 = vpop.f32.mrf.mxu0
      %v1693 = vadd.f32 0.0, %v1692
      %v1694 = vpop.f32.mrf.mxu0
      %v1695 = vadd.f32 0.0, %v1694
      %1696 = vdwg.mxu0
      %v1697 = vadd.f32 %v1447, %v1693
      %v1698 = vadd.f32 %v1448, %v1695
      %v1699 = vadd.f32 %v633, %v1697
      %v1700 = vadd.f32 %v635, %v1698
      %v1701 = vld [vmem:[%s8] sm:$0x1]
      %v1703 = vperm.slane %v1701, 0
      %v1705 = vadd.f32 %v1699, %v1703
      %v1706 = vadd.f32 %v1700, %v1703
      %v1707 = vld [vmem:[%s9] sm:$0x1]
      %v1708 = vld [vmem:[%s10] sm:$0x1]
      %v1709 = vsel %vm639, %v1705, 0.0
      %1710 = vadd.xlane.f32.xlu0 %v1709
      %v1711 = vpop.xlane.xlu0 %1710
      %v1712 = vsel %vm639, %v1706, 0.0
      %1713 = vadd.xlane.f32.xlu0 %v1712
      %v1714 = vpop.xlane.xlu0 %1713
      %v1715 = vmul.f32 %v1711, %v652
      %v1716 = vmul.f32 %v1714, %v652
      %v1717 = vsub.f32 %v1705, %v1715
      %v1718 = vsub.f32 %v1706, %v1716
      %v1719 = vmul.f32 %v1717, %v1717
      %v1720 = vmul.f32 %v1718, %v1718
      %v1721 = vsel %vm639, %v1719, 0.0
      %1722 = vadd.xlane.f32.xlu0 %v1721
      %v1723 = vpop.xlane.xlu0 %1722
      %v1724 = vsel %vm639, %v1720, 0.0
      %1725 = vadd.xlane.f32.xlu0 %v1724
      %v1726 = vpop.xlane.xlu0 %1725
      %v1727 = vmul.f32 %v1723, %v652
      %v1728 = vmul.f32 %v1726, %v652
      %v1729 = vadd.f32 %v1727, 1e-05
      %v1730 = vadd.f32 %v1728, 1e-05
      %v1731 = vrsqrt.pop %v1729
      %v1732 = vmul.f32 %v1731, %v1729
      %v1733 = vmul.f32 %v1732, %v1731
      %v1734 = vmul.f32 0.5, %v1733
      %v1735 = vsub.f32 1.5, %v1734
      %v1736 = vmul.f32 %v1731, %v1735
      %vm1737 = vweird.f32 %v1729
      %vm1738 = vweird.f32 %v1731
      %vm1739 = vmor %vm1737, %vm1738
      %v1740 = vsel %vm1739, %v1731, %v1736
      %v1741 = vrsqrt.pop %v1730
      %v1742 = vmul.f32 %v1741, %v1730
      %v1743 = vmul.f32 %v1742, %v1741
      %v1744 = vmul.f32 0.5, %v1743
      %v1745 = vsub.f32 1.5, %v1744
      %v1746 = vmul.f32 %v1741, %v1745
      %vm1747 = vweird.f32 %v1730
      %vm1748 = vweird.f32 %v1741
      %vm1749 = vmor %vm1747, %vm1748
      %v1750 = vsel %vm1749, %v1741, %v1746
      %v1751 = vmul.f32 %v1717, %v1740
      %v1752 = vmul.f32 %v1718, %v1750
      %v1754 = vperm.slane %v1707, 0
      %v1756 = vmul.f32 %v1751, %v1754
      %v1757 = vmul.f32 %v1752, %v1754
      %v1759 = vperm.slane %v1708, 0
      %v1761 = vadd.f32 %v1756, %v1759
      %v1762 = vadd.f32 %v1757, %v1759
      %v1763 = vpack.c.bf16 %v1762, %v1761
      %v1764 = vld [vmem:[%s11] sm:$0xff]
      %v1765 = vld [vmem:[%s11 + $0x8] sm:$0xff]
      %v1766 = vld [vmem:[%s11 + $0x10] sm:$0xff]
      %v1767 = vld [vmem:[%s11 + $0x18] sm:$0xff]
      %v1768 = vld [vmem:[%s11 + $0x20] sm:$0xff]
      %v1769 = vld [vmem:[%s11 + $0x28] sm:$0xff]
      %v1770 = vld [vmem:[%s11 + $0x30] sm:$0xff]
      %v1771 = vld [vmem:[%s11 + $0x38] sm:$0xff]
      %v1772 = vld [vmem:[%s12] sm:$0x3]
      %v1774 = vperm.slane %v1772, 0
      %v1775 = vperm.slane %v1772, 1
      %v1786 = vunpack.c.l.b16 %v1764
      %v1787 = vunpack.c.h.b16 %v1764
      %v1788 = vunpack.c.l.b16 %v1765
      %v1789 = vunpack.c.h.b16 %v1765
      %v1790 = vunpack.c.l.b16 %v1766
      %v1791 = vunpack.c.h.b16 %v1766
      %v1792 = vunpack.c.l.b16 %v1767
      %v1793 = vunpack.c.h.b16 %v1767
      %v1794 = vunpack.c.l.b16 %v1768
      %v1795 = vunpack.c.h.b16 %v1768
      %v1796 = vunpack.c.l.b16 %v1769
      %v1797 = vunpack.c.h.b16 %v1769
      %v1798 = vunpack.c.l.b16 %v1770
      %v1799 = vunpack.c.h.b16 %v1770
      %v1800 = vunpack.c.l.b16 %v1771
      %v1801 = vunpack.c.h.b16 %v1771
      %v1802 = vpack.c.b16 %v1788, %v1786
      %v1803 = vpack.c.b16 %v1789, %v1787
      %v1804 = vpack.c.b16 %v1792, %v1790
      %v1805 = vpack.c.b16 %v1793, %v1791
      %v1806 = vpack.c.b16 %v1796, %v1794
      %v1807 = vpack.c.b16 %v1797, %v1795
      %v1808 = vpack.c.b16 %v1800, %v1798
      %v1809 = vpack.c.b16 %v1801, %v1799
      %v1819 = vsel %vm639, %v1763, 0
      %1821 = vmatpush.bf16.msra.mxu0 0
      %1822 = vmatpush.bf16.msra.mxu0 0
      %1823 = vmatpush.bf16.msra.mxu0 0
      %1824 = vmatpush.bf16.msra.mxu0 0
      %1825 = vmatpush.bf16.msra.mxu0 %v1808
      %1826 = vmatpush.bf16.msra.mxu0 %v1806
      %1827 = vmatpush.bf16.msra.mxu0 %v1804
      %1828 = vmatpush.bf16.msra.mxu0 %v1802
      %1829 = vmatmul.bf16.gmra.mxu0 %v1819
      %v1830 = vpop.f32.mrf.mxu0
      %v1831 = vadd.f32 %v1774, %v1830
      %v1832 = vpop.f32.mrf.mxu0
      %v1833 = vadd.f32 %v1774, %v1832
      %1834 = vdwg.mxu0
      %1835 = vmatpush.bf16.msra.mxu0 0
      %1836 = vmatpush.bf16.msra.mxu0 0
      %1837 = vmatpush.bf16.msra.mxu0 0
      %1838 = vmatpush.bf16.msra.mxu0 0
      %1839 = vmatpush.bf16.msra.mxu0 %v1809
      %1840 = vmatpush.bf16.msra.mxu0 %v1807
      %1841 = vmatpush.bf16.msra.mxu0 %v1805
      %1842 = vmatpush.bf16.msra.mxu0 %v1803
      %1843 = vmatmul.bf16.gmra.mxu0 %v1819
      %v1844 = vpop.f32.mrf.mxu0
      %v1845 = vadd.f32 %v1775, %v1844
      %v1846 = vpop.f32.mrf.mxu0
      %v1847 = vadd.f32 %v1775, %v1846
      %1848 = vdwg.mxu0
      %v1849 = vmul.f32 %v1831, 0.5
      %v1850 = vmul.f32 %v1845, 0.5
      %v1851 = vmul.f32 %v1833, 0.5
      %v1852 = vmul.f32 %v1847, 0.5
      %v1853 = vmul.f32 %v1831, 0.044715
      %v1854 = vmul.f32 %v1845, 0.044715
      %v1855 = vmul.f32 %v1833, 0.044715
      %v1856 = vmul.f32 %v1847, 0.044715
      %v1857 = vmul.f32 %v1853, %v1831
      %v1858 = vmul.f32 %v1854, %v1845
      %v1859 = vmul.f32 %v1855, %v1833
      %v1860 = vmul.f32 %v1856, %v1847
      %v1861 = vmul.f32 %v1857, %v1831
      %v1862 = vmul.f32 %v1858, %v1845
      %v1863 = vmul.f32 %v1859, %v1833
      %v1864 = vmul.f32 %v1860, %v1847
      %v1865 = vadd.f32 %v1831, %v1861
      %v1866 = vadd.f32 %v1845, %v1862
      %v1867 = vadd.f32 %v1833, %v1863
      %v1868 = vadd.f32 %v1847, %v1864
      %v1869 = vmul.f32 %v1865, 0.7978846
      %v1870 = vmul.f32 %v1866, 0.7978846
      %v1871 = vmul.f32 %v1867, 0.7978846
      %v1872 = vmul.f32 %v1868, 0.7978846
      %v1873 = vtanh.pop %v1869
      %v1874 = vtanh.pop %v1870
      %v1875 = vtanh.pop %v1871
      %v1876 = vtanh.pop %v1872
      %v1877 = vadd.f32 %v1873, 1.0
      %v1878 = vadd.f32 %v1874, 1.0
      %v1879 = vadd.f32 %v1875, 1.0
      %v1880 = vadd.f32 %v1876, 1.0
      %v1881 = vmul.f32 %v1849, %v1877
      %v1882 = vmul.f32 %v1850, %v1878
      %v1883 = vmul.f32 %v1851, %v1879
      %v1884 = vmul.f32 %v1852, %v1880
      %v1885 = vpack.c.bf16 %v1883, %v1881
      %v1886 = vpack.c.bf16 %v1884, %v1882
      %v1887 = vld [vmem:[%s13] sm:$0xf]
      %v1888 = vld [vmem:[%s13 + $0x4] sm:$0xf]
      %v1889 = vld [vmem:[%s13 + $0x8] sm:$0xf]
      %v1890 = vld [vmem:[%s13 + $0xc] sm:$0xf]
      %v1891 = vld [vmem:[%s13 + $0x10] sm:$0xf]
      %v1892 = vld [vmem:[%s13 + $0x14] sm:$0xf]
      %v1893 = vld [vmem:[%s13 + $0x18] sm:$0xf]
      %v1894 = vld [vmem:[%s13 + $0x1c] sm:$0xf]
      %v1895 = vld [vmem:[%s13 + $0x20] sm:$0xf]
      %v1896 = vld [vmem:[%s13 + $0x24] sm:$0xf]
      %v1897 = vld [vmem:[%s13 + $0x28] sm:$0xf]
      %v1898 = vld [vmem:[%s13 + $0x2c] sm:$0xf]
      %v1899 = vld [vmem:[%s13 + $0x30] sm:$0xf]
      %v1900 = vld [vmem:[%s13 + $0x34] sm:$0xf]
      %v1901 = vld [vmem:[%s13 + $0x38] sm:$0xf]
      %v1902 = vld [vmem:[%s13 + $0x3c] sm:$0xf]
      %v1903 = vld [vmem:[%s13 + $0x40] sm:$0xf]
      %v1904 = vld [vmem:[%s13 + $0x44] sm:$0xf]
      %v1905 = vld [vmem:[%s13 + $0x48] sm:$0xf]
      %v1906 = vld [vmem:[%s13 + $0x4c] sm:$0xf]
      %v1907 = vld [vmem:[%s13 + $0x50] sm:$0xf]
      %v1908 = vld [vmem:[%s13 + $0x54] sm:$0xf]
      %v1909 = vld [vmem:[%s13 + $0x58] sm:$0xf]
      %v1910 = vld [vmem:[%s13 + $0x5c] sm:$0xf]
      %v1911 = vld [vmem:[%s13 + $0x60] sm:$0xf]
      %v1912 = vld [vmem:[%s13 + $0x64] sm:$0xf]
      %v1913 = vld [vmem:[%s13 + $0x68] sm:$0xf]
      %v1914 = vld [vmem:[%s13 + $0x6c] sm:$0xf]
      %v1915 = vld [vmem:[%s13 + $0x70] sm:$0xf]
      %v1916 = vld [vmem:[%s13 + $0x74] sm:$0xf]
      %v1917 = vld [vmem:[%s13 + $0x78] sm:$0xf]
      %v1918 = vld [vmem:[%s13 + $0x7c] sm:$0xf]
      %v1919 = vld [vmem:[%s14] sm:$0x1]
      %v1921 = vperm.slane %v1919, 0
      %v1955 = vunpack.c.l.b16 %v1887
      %v1956 = vunpack.c.l.b16 %v1888
      %v1957 = vunpack.c.l.b16 %v1889
      %v1958 = vunpack.c.l.b16 %v1890
      %v1959 = vunpack.c.l.b16 %v1891
      %v1960 = vunpack.c.l.b16 %v1892
      %v1961 = vunpack.c.l.b16 %v1893
      %v1962 = vunpack.c.l.b16 %v1894
      %v1963 = vunpack.c.l.b16 %v1895
      %v1964 = vunpack.c.l.b16 %v1896
      %v1965 = vunpack.c.l.b16 %v1897
      %v1966 = vunpack.c.l.b16 %v1898
      %v1967 = vunpack.c.l.b16 %v1899
      %v1968 = vunpack.c.l.b16 %v1900
      %v1969 = vunpack.c.l.b16 %v1901
      %v1970 = vunpack.c.l.b16 %v1902
      %v1971 = vunpack.c.l.b16 %v1903
      %v1972 = vunpack.c.l.b16 %v1904
      %v1973 = vunpack.c.l.b16 %v1905
      %v1974 = vunpack.c.l.b16 %v1906
      %v1975 = vunpack.c.l.b16 %v1907
      %v1976 = vunpack.c.l.b16 %v1908
      %v1977 = vunpack.c.l.b16 %v1909
      %v1978 = vunpack.c.l.b16 %v1910
      %v1979 = vunpack.c.l.b16 %v1911
      %v1980 = vunpack.c.l.b16 %v1912
      %v1981 = vunpack.c.l.b16 %v1913
      %v1982 = vunpack.c.l.b16 %v1914
      %v1983 = vunpack.c.l.b16 %v1915
      %v1984 = vunpack.c.l.b16 %v1916
      %v1985 = vunpack.c.l.b16 %v1917
      %v1986 = vunpack.c.l.b16 %v1918
      %v1987 = vpack.c.b16 %v1956, %v1955
      %v1988 = vpack.c.b16 %v1958, %v1957
      %v1989 = vpack.c.b16 %v1960, %v1959
      %v1990 = vpack.c.b16 %v1962, %v1961
      %v1991 = vpack.c.b16 %v1964, %v1963
      %v1992 = vpack.c.b16 %v1966, %v1965
      %v1993 = vpack.c.b16 %v1968, %v1967
      %v1994 = vpack.c.b16 %v1970, %v1969
      %v1995 = vpack.c.b16 %v1972, %v1971
      %v1996 = vpack.c.b16 %v1974, %v1973
      %v1997 = vpack.c.b16 %v1976, %v1975
      %v1998 = vpack.c.b16 %v1978, %v1977
      %v1999 = vpack.c.b16 %v1980, %v1979
      %v2000 = vpack.c.b16 %v1982, %v1981
      %v2001 = vpack.c.b16 %v1984, %v1983
      %v2002 = vpack.c.b16 %v1986, %v1985
      %2019 = vmatpush.bf16.msra.mxu0 %v1994
      %2020 = vmatpush.bf16.msra.mxu0 %v1993
      %2021 = vmatpush.bf16.msra.mxu0 %v1992
      %2022 = vmatpush.bf16.msra.mxu0 %v1991
      %2023 = vmatpush.bf16.msra.mxu0 %v1990
      %2024 = vmatpush.bf16.msra.mxu0 %v1989
      %2025 = vmatpush.bf16.msra.mxu0 %v1988
      %2026 = vmatpush.bf16.msra.mxu0 %v1987
      %2027 = vmatmul.bf16.gmra.mxu0 %v1885
      %v2028 = vpop.f32.mrf.mxu0
      %v2029 = vadd.f32 %v1921, %v2028
      %v2030 = vpop.f32.mrf.mxu0
      %v2031 = vadd.f32 %v1921, %v2030
      %2032 = vdwg.mxu0
      %2033 = vmatpush.bf16.msra.mxu0 %v2002
      %2034 = vmatpush.bf16.msra.mxu0 %v2001
      %2035 = vmatpush.bf16.msra.mxu0 %v2000
      %2036 = vmatpush.bf16.msra.mxu0 %v1999
      %2037 = vmatpush.bf16.msra.mxu0 %v1998
      %2038 = vmatpush.bf16.msra.mxu0 %v1997
      %2039 = vmatpush.bf16.msra.mxu0 %v1996
      %2040 = vmatpush.bf16.msra.mxu0 %v1995
      %2041 = vmatmul.bf16.gmra.mxu0 %v1886
      %v2042 = vpop.f32.mrf.mxu0
      %v2043 = vadd.f32 %v2029, %v2042
      %v2044 = vpop.f32.mrf.mxu0
      %v2045 = vadd.f32 %v2031, %v2044
      %2046 = vdwg.mxu0
      %v2047 = vadd.f32 %v1705, %v2043
      %v2048 = vadd.f32 %v1706, %v2045
      %v2049 = vpack.c.bf16 %v2048, %v2047
      %v2050 = vld [vmem:[%s15] sm:$0xf]
      %v2051 = vld [vmem:[%s15 + $0x4] sm:$0xf]
      %v2052 = vld [vmem:[%s15 + $0x8] sm:$0xf]
      %v2053 = vld [vmem:[%s15 + $0xc] sm:$0xf]
      %v2054 = vld [vmem:[%s15 + $0x10] sm:$0xf]
      %v2055 = vld [vmem:[%s15 + $0x14] sm:$0xf]
      %v2056 = vld [vmem:[%s15 + $0x18] sm:$0xf]
      %v2057 = vld [vmem:[%s15 + $0x1c] sm:$0xf]
      %v2058 = vld [vmem:[#allocation2] sm:$0x1]
      %v2060 = vperm.slane %v2058, 0
      %v2070 = vunpack.c.l.b16 %v2050
      %v2071 = vunpack.c.l.b16 %v2051
      %v2072 = vunpack.c.l.b16 %v2052
      %v2073 = vunpack.c.l.b16 %v2053
      %v2074 = vunpack.c.l.b16 %v2054
      %v2075 = vunpack.c.l.b16 %v2055
      %v2076 = vunpack.c.l.b16 %v2056
      %v2077 = vunpack.c.l.b16 %v2057
      %v2078 = vpack.c.b16 %v2071, %v2070
      %v2079 = vpack.c.b16 %v2073, %v2072
      %v2080 = vpack.c.b16 %v2075, %v2074
      %v2081 = vpack.c.b16 %v2077, %v2076
      %v2087 = vsel %vm639, %v2049, 0
      %2089 = vmatpush.bf16.msra.mxu0 0
      %2090 = vmatpush.bf16.msra.mxu0 0
      %2091 = vmatpush.bf16.msra.mxu0 0
      %2092 = vmatpush.bf16.msra.mxu0 0
      %2093 = vmatpush.bf16.msra.mxu0 %v2081
      %2094 = vmatpush.bf16.msra.mxu0 %v2080
      %2095 = vmatpush.bf16.msra.mxu0 %v2079
      %2096 = vmatpush.bf16.msra.mxu0 %v2078
      %2097 = vmatmul.bf16.gmra.mxu0 %v2087
      %v2098 = vpop.f32.mrf.mxu0
      %v2099 = vadd.f32 %v2060, %v2098
      %v2100 = vpop.f32.mrf.mxu0
      %v2101 = vadd.f32 %v2060, %v2100
      %2102 = vdwg.mxu0
      %vm2103 = vcmask 7168
      %2104 = vst.msk [vmem:[%s550] sm:$0xff] %vm2103, %v2099
      %2105 = vst.msk [vmem:[%s550 + $0x8] sm:$0xff] %vm2103, %v2101
      %p2106 = scmp.lt.s32.totalorder %s30, 1
      %s2107 = scalar_select %p2106, %s30, 1
      %s2108 = smul.addr %s2107, 2
      %s2109 = smul.addr %s2108, 8
      %s2110 = scalar_lea.vmem %s17, %s2109
      // Predicated region
      $region89: #{hvit_discriminator.5} parent=87 // pred_check
        %p2111 = pneg %p410
      $region90: #{hvit_discriminator.5} parent=87 // pred_check_branch
        %2113 = sbr.rel (%p2111) target = $region92
      $region91: #{hvit_discriminator.5} parent=87 // pred_region
        _
      $region92: #{hvit_discriminator.5} parent=87 // pred_fallthru
        _
    $region88: #{hvit_discriminator.5} parent=5 // pred_fallthru
      _
    %p2114 = scmp.le.s32.totalorder 2, %s25
    // Predicated region
    $region93: #{hvit_discriminator.5} parent=5 // pred_check
      %p2115 = pneg %p2114
    $region94: #{hvit_discriminator.5} parent=5 // pred_check_branch
      %2117 = sbr.rel (%p2115) target = $region96
    $region95: #{hvit_discriminator.5} parent=5 // pred_region
      %s2118 = ssub.s32 %s25, 2
      // Predicated region
      $region97: #{hvit_discriminator.5} parent=95 // pred_check
        %p2119 = pneg %p416
      $region98: #{hvit_discriminator.5} parent=95 // pred_check_branch
        %2121 = sbr.rel (%p2119) target = $region100
      $region99: #{hvit_discriminator.5} parent=95 // pred_region
        %p2122 = scmp.lt.s32.totalorder %s31, 1
        %s2123 = scalar_select %p2122, %s31, 1
        %s2124 = smul.addr %s2123, 2
        %s2125 = smul.addr %s2124, 8
        %s2126 = scalar_lea.vmem %s17, %s2125
      $region100: #{hvit_discriminator.5} parent=95 // pred_fallthru
        _
    $region96: #{hvit_discriminator.5} parent=5 // pred_fallthru
      _
  $region6: #{hvit_discriminator.5} parent=0 // loop_footer
    %s29 = sadd.s32 1, %s25
  $region7: #{hvit_discriminator.5} parent=0 // loop_footer_branch
    %24 = sbr.rel target = $region3
  $region8: #{hvit_discriminator.5} parent=0 // loop_exit
    _

</llo_original>
